<compile_context>
chip_gen: v6e
topology: v6e:2x2x1
jax: 0.10.0
libtpu: 0.0.40
codegen_flags: <defaults>
</compile_context>

<pallas_src>
import functools
import math

import numpy as np

import jax
import jax.numpy as jnp
from jax.experimental import pallas as pl
from jax.experimental.pallas import tpu as pltpu

LANE = 128  # TPU lane width


def _round_up(n, m):
    return ((n + m - 1) // m) * m


def _vae_kernel(
    x_ref, eps_ref,
    w1_ref, b1_ref,
    w2_ref, b2_ref,
    wml_ref, bml_ref,        # fused, lane-padded [h2, 2*z_pad] / [1, 2*z_pad]
    wd1_ref, bd1_ref,        # wd1 row-padded to [z_pad, h2]
    wd2_ref, bd2_ref,
    wdo_ref, bdo_ref,
    out_ref, mulv_ref,
    *, z_pad,
):
    """Fused VAE forward for one batch tile: 6 MXU matmuls + VPU/EUP math."""
    f32 = jnp.float32
    cdt = w1_ref.dtype  # MXU input dtype (bf16); also works for f32 weights.

    def dense(a, w_ref, b_ref, relu=False):
        y = jnp.dot(a.astype(cdt), w_ref[...], preferred_element_type=f32)
        y = y + b_ref[...]                     # f32 bias, broadcast over rows
        return jnp.maximum(y, 0.0) if relu else y

    # ---- encoder ----
    h = dense(x_ref[...], w1_ref, b1_ref, relu=True)
    h = dense(h, w2_ref, b2_ref, relu=True)

    # Fused mu / log_var head, lane-padded: mu in lanes [0, z_pad),
    # log_var in [z_pad, 2*z_pad).  Slices land on 128-lane boundaries
    # (no lane shuffles) and the mulv store is fully lane-dense.
    mulv = dense(h, wml_ref, bml_ref)          # [TB, 2*z_pad] f32
    mu = mulv[:, :z_pad]
    log_var = mulv[:, z_pad:]

    # ---- reparameterization: z = eps * exp(0.5 * log_var) + mu ----
    # Padded lanes are exact zeros (zero-padded eps / weights / biases), so
    # they stay zero and the zero rows of wd1 contribute nothing below.
    z = eps_ref[...].astype(f32) * jnp.exp(0.5 * log_var) + mu   # [TB, z_pad]

    # ---- decoder ----
    hd = dense(z, wd1_ref, bd1_ref, relu=True)
    hd = dense(hd, wd2_ref, bd2_ref, relu=True)
    logits = dense(hd, wdo_ref, bdo_ref)

    out_ref[...] = jax.nn.sigmoid(logits).astype(out_ref.dtype)
    mulv_ref[...] = mulv.astype(mulv_ref.dtype)


def init_params(key, x_dim, h_dim1, h_dim2, z_dim):
    """nn.Linear-style f32 params.

    PyTorch Linear stores W as [out, in]; we store the transpose [in, out]
    so the kernel computes x @ W.  Uniform(-1/sqrt(fan_in), 1/sqrt(fan_in))
    like PyTorch's default init.
    """
    layer_dims = {
        "1": (x_dim, h_dim1),
        "2": (h_dim1, h_dim2),
        "mu": (h_dim2, z_dim),
        "sig": (h_dim2, z_dim),
        "d1": (z_dim, h_dim2),
        "d2": (h_dim2, h_dim1),
        "do": (h_dim1, x_dim),
    }
    params = {}
    for name, (fan_in, fan_out) in layer_dims.items():
        key, kw, kb = jax.random.split(key, 3)
        bound = 1.0 / math.sqrt(fan_in)
        params[f"w{name}"] = jax.random.uniform(
            kw, (fan_in, fan_out), jnp.float32, -bound, bound)
        params[f"b{name}"] = jax.random.uniform(
            kb, (1, fan_out), jnp.float32, -bound, bound)
    return params


def pack_params(params):
    """One-time packing of the f32 params into kernel operands.

    * weights cast to bf16 (native MXU input dtype, halves resident bytes),
      biases kept f32;
    * mu / log_var heads fused and zero-padded to a lane-dense [h2, 2*z_pad]
      slab (mu lanes [0, z_pad), log_var lanes [z_pad, 2*z_pad));
    * decoder first-layer weight row-padded to z_pad rows (extra rows zero).
    Call once outside the hot path.
    """
    bf16, f32 = jnp.bfloat16, jnp.float32
    wmu, wsig = params["wmu"], params["wsig"]
    h2, z_dim = wmu.shape
    z_pad = _round_up(max(z_dim, LANE), LANE)
    pc = z_pad - z_dim

    w = lambda p: p.astype(bf16)
    b = lambda p: p.astype(f32)

    zw = jnp.zeros((h2, pc), bf16)
    zb = jnp.zeros((1, pc), f32)
    wml = jnp.concatenate([w(wmu), zw, w(wsig), zw], axis=1)          # [h2, 2*z_pad]
    bml = jnp.concatenate([b(params["bmu"]), zb,
                           b(params["bsig"]), zb], axis=1)            # [1, 2*z_pad]
    wd1 = jnp.concatenate(
        [w(params["wd1"]),
         jnp.zeros((pc, params["wd1"].shape[1]), bf16)], axis=0)      # [z_pad, h2]

    return {
        "w1": w(params["w1"]), "b1": b(params["b1"]),
        "w2": w(params["w2"]), "b2": b(params["b2"]),
        "wml": wml, "bml": bml,
        "wd1": wd1, "bd1": b(params["bd1"]),
        "wd2": w(params["wd2"]), "bd2": b(params["bd2"]),
        "wdo": w(params["wdo"]), "bdo": b(params["bdo"]),
    }


@functools.partial(jax.jit, static_argnames=("batch_tile", "out_dtype"))
def vae_forward(x, eps, packed, *, batch_tile=None, out_dtype=jnp.float32):
    """x: [B, x_dim] (already flattened), eps ~ N(0,1): [B, z_dim].

    Returns (out [B, x_dim], mu [B, z_dim], log_var [B, z_dim]).
    """
    B, x_dim = x.shape
    z_dim = eps.shape[1]
    h1 = packed["w1"].shape[1]
    h2 = packed["w2"].shape[1]
    z_pad = packed["bml"].shape[1] // 2
    cdt = packed["w1"].dtype                      # bf16

    # Stream x / eps in bf16 (numerically free: the MXU input is bf16 anyway).
    # This is a no-op when the caller already supplies bf16 tensors.
    x_c = x if x.dtype == cdt else x.astype(cdt)
    eps_c = eps if eps.dtype == cdt else eps.astype(cdt)
    if z_dim < z_pad:
        eps_c = jnp.pad(eps_c, ((0, 0), (0, z_pad - z_dim)))   # zero lanes

    # Batch tiling: no padded batch copy of x -- grid = cdiv(B, tb) and Pallas
    # masks the final partial block (the garbage OOB rows never reach HBM and
    # there is no cross-row reduction in the kernel).  Large tiles (<=512
    # rows) sit near the HBM roofline and amortize per-step overhead; on a
    # 2-TensorCore chip (v7x) pick the tile so there are >= 2 grid steps and
    # the "parallel" batch axis actually shards across both cores.
    if batch_tile is None:
        kind = ""
        try:
            kind = jax.devices()[0].device_kind.lower()
        except Exception:
            pass
        num_cores = 2 if ("v7" in kind or "7x" in kind) else 1
        tb = min(512, _round_up(pl.cdiv(B, num_cores), 16))
    else:
        tb = _round_up(int(batch_tile), 16)
    num_tiles = pl.cdiv(B, tb)

    operands = [
        x_c, eps_c,
        packed["w1"], packed["b1"],
        packed["w2"], packed["b2"],
        packed["wml"], packed["bml"],
        packed["wd1"], packed["bd1"],
        packed["wd2"], packed["bd2"],
        packed["wdo"], packed["bdo"],
    ]

    tile_map = lambda i: (i, 0)   # per-batch-tile operands / outputs
    resident = lambda i: (0, 0)   # weights/biases: same block every step ->
                                  # DMA'd once, resident in VMEM for the call.

    in_specs = (
        [pl.BlockSpec((tb, x_dim), tile_map),
         pl.BlockSpec((tb, z_pad), tile_map)]
        + [pl.BlockSpec(op.shape, resident) for op in operands[2:]]
    )
    out_specs = (
        pl.BlockSpec((tb, x_dim), tile_map),
        pl.BlockSpec((tb, 2 * z_pad), tile_map),
    )
    out_shape = (
        jax.ShapeDtypeStruct((B, x_dim), out_dtype),
        jax.ShapeDtypeStruct((B, 2 * z_pad), jnp.float32),
    )

    # Advisory cost estimate (helps XLA schedule around the custom call).
    rows = num_tiles * tb
    flops = 2 * rows * (x_dim * h1 + h1 * h2 + h2 * 2 * z_pad
                        + z_pad * h2 + h2 * h1 + h1 * x_dim)
    transcendentals = rows * (z_pad + x_dim)              # exp + sigmoid
    bytes_accessed = int(
        sum(op.size * op.dtype.itemsize for op in operands)
        + B * x_dim * np.dtype(out_dtype).itemsize
        + B * 2 * z_pad * 4
    )

    out, mulv = pl.pallas_call(
        functools.partial(_vae_kernel, z_pad=z_pad),
        grid=(num_tiles,),
        out_shape=out_shape,
        in_specs=in_specs,
        out_specs=out_specs,
        compiler_params=pltpu.CompilerParams(
            dimension_semantics=("parallel",),   # batch tiles are independent
            vmem_limit_bytes=32 << 20,           # safe on v7x (64 MiB VMEM)
        ),
        cost_estimate=pl.CostEstimate(
            flops=flops,
            transcendentals=transcendentals,
            bytes_accessed=bytes_accessed,
        ),
    )(*operands)

    mu = mulv[:, :z_dim]
    log_var = mulv[:, z_pad:z_pad + z_dim]
    return out, mu, log_var


def _reference_forward(x, eps, params):
    """Pure-JAX reference matching the PyTorch module semantics.

    Uses the same bf16-inputs / f32-accumulate recipe as the kernel so the
    comparison isolates kernel correctness rather than bf16 quantization.
    """
    f32, bf16 = jnp.float32, jnp.bfloat16

    def dense(a, w, b, relu=False):
        y = jnp.dot(a.astype(bf16), w.astype(bf16),
                    preferred_element_type=f32) + b.astype(f32)
        return jnp.maximum(y, 0.0) if relu else y

    h = dense(x, params["w1"], params["b1"], relu=True)
    h = dense(h, params["w2"], params["b2"], relu=True)
    mu = dense(h, params["wmu"], params["bmu"])
    log_var = dense(h, params["wsig"], params["bsig"])
    z = eps.astype(bf16).astype(f32) * jnp.exp(0.5 * log_var) + mu
    hd = dense(z, params["wd1"], params["bd1"], relu=True)
    hd = dense(hd, params["wd2"], params["bd2"], relu=True)
    out = jax.nn.sigmoid(dense(hd, params["wdo"], params["bdo"]))
    return out, mu, log_var


if __name__ == "__main__":
    # Shapes consistent with the module's forward (x.view(-1, 784)).
    X_DIM, H_DIM1, H_DIM2, Z_DIM = 784, 256, 128, 32
    BATCH = 100  # deliberately not a tile multiple: exercises the masked final block

    key = jax.random.PRNGKey(0)
    key, kx, keps, kparams = jax.random.split(key, 4)

    # Input as MNIST-like images; flattened to (-1, 784) like forward().
    x_img = jax.random.uniform(kx, (BATCH, 1, 28, 28), jnp.float32)
    x = x_img.reshape(-1, X_DIM)
    # TODO(synk): torch.randn_like(std) is drawn outside the kernel for
    # determinism; an in-kernel pltpu.prng_random_bits variant is possible.
    eps = jax.random.normal(keps, (BATCH, Z_DIM), jnp.float32)

    params = init_params(kparams, X_DIM, H_DIM1, H_DIM2, Z_DIM)
    packed = pack_params(params)   # one-time bf16 packing + lane padding

    # batch_tile=32 keeps the demo small while exercising a multi-step grid
    # (grid=(4,)) with resident weights and a partial final block; production
    # use can leave it None to auto-pick up to 512 rows per step (>=2 tiles on
    # a 2-TensorCore v7x chip).
    out, mu, log_var = vae_forward(x, eps, packed, batch_tile=32)
    jax.block_until_ready((out, mu, log_var))

    # Correctness check against a pure-JAX reference (same bf16 recipe).
    ref_out, ref_mu, ref_lv = _reference_forward(x, eps, params)
    assert out.shape == (BATCH, X_DIM)
    assert mu.shape == (BATCH, Z_DIM) and log_var.shape == (BATCH, Z_DIM)
    assert jnp.allclose(out, ref_out, atol=2e-3, rtol=2e-3)
    assert jnp.allclose(mu, ref_mu, atol=2e-3, rtol=2e-3)
    assert jnp.allclose(log_var, ref_lv, atol=2e-3, rtol=2e-3)

    print("KERNEL_OK")
</pallas_src>

<mosaic_0001>
module attributes {stable_mosaic.version = 11 : i64} {
  func.func @_vae_kernel(%arg0: i32, %arg1: memref<32x784xbf16, #tpu.memory_space<vmem>>, %arg2: memref<32x128xbf16, #tpu.memory_space<vmem>>, %arg3: memref<784x256xbf16, #tpu.memory_space<vmem>>, %arg4: memref<1x256xf32, #tpu.memory_space<vmem>>, %arg5: memref<256x128xbf16, #tpu.memory_space<vmem>>, %arg6: memref<1x128xf32, #tpu.memory_space<vmem>>, %arg7: memref<128x256xbf16, #tpu.memory_space<vmem>>, %arg8: memref<1x256xf32, #tpu.memory_space<vmem>>, %arg9: memref<128x128xbf16, #tpu.memory_space<vmem>>, %arg10: memref<1x128xf32, #tpu.memory_space<vmem>>, %arg11: memref<128x256xbf16, #tpu.memory_space<vmem>>, %arg12: memref<1x256xf32, #tpu.memory_space<vmem>>, %arg13: memref<256x784xbf16, #tpu.memory_space<vmem>>, %arg14: memref<1x784xf32, #tpu.memory_space<vmem>>, %arg15: memref<32x784xf32, #tpu.memory_space<vmem>>, %arg16: memref<32x256xf32, #tpu.memory_space<vmem>>) attributes {dimension_semantics = [#tpu.dimension_semantics<parallel>], iteration_bounds = array<i64: 4>, scalar_prefetch = 0 : i64, scratch_operands = 0 : i64, tpu.core_type = #tpu.core_type<tc>, window_params = [{transform_indices = @transform_0, window_bounds = array<i64: 32, 784>}, {transform_indices = @transform_1, window_bounds = array<i64: 32, 128>}, {pipeline_mode = #tpu.pipeline_mode<synchronous>, transform_indices = @transform_2, window_bounds = array<i64: 784, 256>}, {pipeline_mode = #tpu.pipeline_mode<synchronous>, transform_indices = @transform_3, window_bounds = array<i64: 1, 256>}, {pipeline_mode = #tpu.pipeline_mode<synchronous>, transform_indices = @transform_4, window_bounds = array<i64: 256, 128>}, {pipeline_mode = #tpu.pipeline_mode<synchronous>, transform_indices = @transform_5, window_bounds = array<i64: 1, 128>}, {pipeline_mode = #tpu.pipeline_mode<synchronous>, transform_indices = @transform_6, window_bounds = array<i64: 128, 256>}, {pipeline_mode = #tpu.pipeline_mode<synchronous>, transform_indices = @transform_7, window_bounds = array<i64: 1, 256>}, {pipeline_mode = #tpu.pipeline_mode<synchronous>, transform_indices = @transform_8, window_bounds = array<i64: 128, 128>}, {pipeline_mode = #tpu.pipeline_mode<synchronous>, transform_indices = @transform_9, window_bounds = array<i64: 1, 128>}, {pipeline_mode = #tpu.pipeline_mode<synchronous>, transform_indices = @transform_10, window_bounds = array<i64: 128, 256>}, {pipeline_mode = #tpu.pipeline_mode<synchronous>, transform_indices = @transform_11, window_bounds = array<i64: 1, 256>}, {pipeline_mode = #tpu.pipeline_mode<synchronous>, transform_indices = @transform_12, window_bounds = array<i64: 256, 784>}, {pipeline_mode = #tpu.pipeline_mode<synchronous>, transform_indices = @transform_13, window_bounds = array<i64: 1, 784>}, {transform_indices = @transform_14, window_bounds = array<i64: 32, 784>}, {transform_indices = @transform_15, window_bounds = array<i64: 32, 256>}]} {
    %c0 = arith.constant 0 : index
    %c0_0 = arith.constant 0 : index
    %0 = vector.load %arg1[%c0, %c0_0] : memref<32x784xbf16, #tpu.memory_space<vmem>>, vector<32x784xbf16>
    %c0_1 = arith.constant 0 : index
    %c0_2 = arith.constant 0 : index
    %1 = vector.load %arg3[%c0_1, %c0_2] : memref<784x256xbf16, #tpu.memory_space<vmem>>, vector<784x256xbf16>
    %cst = arith.constant dense<0.000000e+00> : vector<32x256xf32>
    %2 = tpu.matmul %0, %1, %cst {dimension_numbers = #tpu.dot_dimension_numbers<[1], [0], [0], [1], [0, 0, 1, 1], [], []>} : vector<32x784xbf16>, vector<784x256xbf16>, vector<32x256xf32> -> vector<32x256xf32>
    %c0_3 = arith.constant 0 : index
    %c0_4 = arith.constant 0 : index
    %3 = vector.load %arg4[%c0_3, %c0_4] : memref<1x256xf32, #tpu.memory_space<vmem>>, vector<1x256xf32>
    %4 = vector.broadcast %3 : vector<1x256xf32> to vector<32x256xf32>
    %5 = arith.addf %2, %4 : vector<32x256xf32>
    %cst_5 = arith.constant 0.000000e+00 : f32
    %6 = vector.broadcast %cst_5 : f32 to vector<32x256xf32>
    %7 = arith.maximumf %5, %6 : vector<32x256xf32>
    %8 = arith.truncf %7 : vector<32x256xf32> to vector<32x256xbf16>
    %c0_6 = arith.constant 0 : index
    %c0_7 = arith.constant 0 : index
    %9 = vector.load %arg5[%c0_6, %c0_7] : memref<256x128xbf16, #tpu.memory_space<vmem>>, vector<256x128xbf16>
    %cst_8 = arith.constant dense<0.000000e+00> : vector<32x128xf32>
    %10 = tpu.matmul %8, %9, %cst_8 {dimension_numbers = #tpu.dot_dimension_numbers<[1], [0], [0], [1], [0, 0, 1, 1], [], []>} : vector<32x256xbf16>, vector<256x128xbf16>, vector<32x128xf32> -> vector<32x128xf32>
    %c0_9 = arith.constant 0 : index
    %c0_10 = arith.constant 0 : index
    %11 = vector.load %arg6[%c0_9, %c0_10] : memref<1x128xf32, #tpu.memory_space<vmem>>, vector<1x128xf32>
    %12 = vector.broadcast %11 : vector<1x128xf32> to vector<32x128xf32>
    %13 = arith.addf %10, %12 : vector<32x128xf32>
    %cst_11 = arith.constant 0.000000e+00 : f32
    %14 = vector.broadcast %cst_11 : f32 to vector<32x128xf32>
    %15 = arith.maximumf %13, %14 : vector<32x128xf32>
    %16 = arith.truncf %15 : vector<32x128xf32> to vector<32x128xbf16>
    %c0_12 = arith.constant 0 : index
    %c0_13 = arith.constant 0 : index
    %17 = vector.load %arg7[%c0_12, %c0_13] : memref<128x256xbf16, #tpu.memory_space<vmem>>, vector<128x256xbf16>
    %cst_14 = arith.constant dense<0.000000e+00> : vector<32x256xf32>
    %18 = tpu.matmul %16, %17, %cst_14 {dimension_numbers = #tpu.dot_dimension_numbers<[1], [0], [0], [1], [0, 0, 1, 1], [], []>} : vector<32x128xbf16>, vector<128x256xbf16>, vector<32x256xf32> -> vector<32x256xf32>
    %c0_15 = arith.constant 0 : index
    %c0_16 = arith.constant 0 : index
    %19 = vector.load %arg8[%c0_15, %c0_16] : memref<1x256xf32, #tpu.memory_space<vmem>>, vector<1x256xf32>
    %20 = vector.broadcast %19 : vector<1x256xf32> to vector<32x256xf32>
    %21 = arith.addf %18, %20 : vector<32x256xf32>
    %22 = vector.extract_strided_slice %21 {offsets = [0, 0], sizes = [32, 128], strides = [1, 1]} : vector<32x256xf32> to vector<32x128xf32>
    %23 = vector.extract_strided_slice %21 {offsets = [0, 128], sizes = [32, 128], strides = [1, 1]} : vector<32x256xf32> to vector<32x128xf32>
    %c0_17 = arith.constant 0 : index
    %c0_18 = arith.constant 0 : index
    %24 = vector.load %arg2[%c0_17, %c0_18] : memref<32x128xbf16, #tpu.memory_space<vmem>>, vector<32x128xbf16>
    %25 = arith.extf %24 : vector<32x128xbf16> to vector<32x128xf32>
    %cst_19 = arith.constant 5.000000e-01 : f32
    %26 = vector.broadcast %cst_19 : f32 to vector<32x128xf32>
    %27 = arith.mulf %26, %23 : vector<32x128xf32>
    %28 = math.exp %27 : vector<32x128xf32>
    %29 = arith.mulf %25, %28 : vector<32x128xf32>
    %30 = arith.addf %29, %22 : vector<32x128xf32>
    %31 = arith.truncf %30 : vector<32x128xf32> to vector<32x128xbf16>
    %c0_20 = arith.constant 0 : index
    %c0_21 = arith.constant 0 : index
    %32 = vector.load %arg9[%c0_20, %c0_21] : memref<128x128xbf16, #tpu.memory_space<vmem>>, vector<128x128xbf16>
    %cst_22 = arith.constant dense<0.000000e+00> : vector<32x128xf32>
    %33 = tpu.matmul %31, %32, %cst_22 {dimension_numbers = #tpu.dot_dimension_numbers<[1], [0], [0], [1], [0, 0, 1, 1], [], []>} : vector<32x128xbf16>, vector<128x128xbf16>, vector<32x128xf32> -> vector<32x128xf32>
    %c0_23 = arith.constant 0 : index
    %c0_24 = arith.constant 0 : index
    %34 = vector.load %arg10[%c0_23, %c0_24] : memref<1x128xf32, #tpu.memory_space<vmem>>, vector<1x128xf32>
    %35 = vector.broadcast %34 : vector<1x128xf32> to vector<32x128xf32>
    %36 = arith.addf %33, %35 : vector<32x128xf32>
    %cst_25 = arith.constant 0.000000e+00 : f32
    %37 = vector.broadcast %cst_25 : f32 to vector<32x128xf32>
    %38 = arith.maximumf %36, %37 : vector<32x128xf32>
    %39 = arith.truncf %38 : vector<32x128xf32> to vector<32x128xbf16>
    %c0_26 = arith.constant 0 : index
    %c0_27 = arith.constant 0 : index
    %40 = vector.load %arg11[%c0_26, %c0_27] : memref<128x256xbf16, #tpu.memory_space<vmem>>, vector<128x256xbf16>
    %cst_28 = arith.constant dense<0.000000e+00> : vector<32x256xf32>
    %41 = tpu.matmul %39, %40, %cst_28 {dimension_numbers = #tpu.dot_dimension_numbers<[1], [0], [0], [1], [0, 0, 1, 1], [], []>} : vector<32x128xbf16>, vector<128x256xbf16>, vector<32x256xf32> -> vector<32x256xf32>
    %c0_29 = arith.constant 0 : index
    %c0_30 = arith.constant 0 : index
    %42 = vector.load %arg12[%c0_29, %c0_30] : memref<1x256xf32, #tpu.memory_space<vmem>>, vector<1x256xf32>
    %43 = vector.broadcast %42 : vector<1x256xf32> to vector<32x256xf32>
    %44 = arith.addf %41, %43 : vector<32x256xf32>
    %cst_31 = arith.constant 0.000000e+00 : f32
    %45 = vector.broadcast %cst_31 : f32 to vector<32x256xf32>
    %46 = arith.maximumf %44, %45 : vector<32x256xf32>
    %47 = arith.truncf %46 : vector<32x256xf32> to vector<32x256xbf16>
    %c0_32 = arith.constant 0 : index
    %c0_33 = arith.constant 0 : index
    %48 = vector.load %arg13[%c0_32, %c0_33] : memref<256x784xbf16, #tpu.memory_space<vmem>>, vector<256x784xbf16>
    %cst_34 = arith.constant dense<0.000000e+00> : vector<32x784xf32>
    %49 = tpu.matmul %47, %48, %cst_34 {dimension_numbers = #tpu.dot_dimension_numbers<[1], [0], [0], [1], [0, 0, 1, 1], [], []>} : vector<32x256xbf16>, vector<256x784xbf16>, vector<32x784xf32> -> vector<32x784xf32>
    %c0_35 = arith.constant 0 : index
    %c0_36 = arith.constant 0 : index
    %50 = vector.load %arg14[%c0_35, %c0_36] : memref<1x784xf32, #tpu.memory_space<vmem>>, vector<1x784xf32>
    %51 = vector.broadcast %50 : vector<1x784xf32> to vector<32x784xf32>
    %52 = arith.addf %49, %51 : vector<32x784xf32>
    %53 = arith.negf %52 : vector<32x784xf32>
    %54 = math.exp %53 : vector<32x784xf32>
    %cst_37 = arith.constant 1.000000e+00 : f32
    %55 = vector.broadcast %cst_37 : f32 to vector<32x784xf32>
    %56 = arith.addf %55, %54 : vector<32x784xf32>
    %57 = arith.divf %55, %56 : vector<32x784xf32>
    %c0_38 = arith.constant 0 : index
    %c0_39 = arith.constant 0 : index
    %58 = vector.load %arg15[%c0_38, %c0_39] : memref<32x784xf32, #tpu.memory_space<vmem>>, vector<32x784xf32>
    tpu.vector_store %arg15[%c0_38, %c0_39], %57 {strides = array<i32>} : memref<32x784xf32, #tpu.memory_space<vmem>>, vector<32x784xf32>,
    %c0_40 = arith.constant 0 : index
    %c0_41 = arith.constant 0 : index
    %59 = vector.load %arg16[%c0_40, %c0_41] : memref<32x256xf32, #tpu.memory_space<vmem>>, vector<32x256xf32>
    tpu.vector_store %arg16[%c0_40, %c0_41], %21 {strides = array<i32>} : memref<32x256xf32, #tpu.memory_space<vmem>>, vector<32x256xf32>,
    return
  }
  func.func @transform_0(%arg0: i32) -> (i32, i32) {
    %c0_i32 = arith.constant 0 : i32
    %c0_i32_0 = arith.constant 0 : i32
    return %arg0, %c0_i32 : i32, i32
  }
  func.func @transform_1(%arg0: i32) -> (i32, i32) {
    %c0_i32 = arith.constant 0 : i32
    %c0_i32_0 = arith.constant 0 : i32
    return %arg0, %c0_i32 : i32, i32
  }
  func.func @transform_2(%arg0: i32) -> (i32, i32) {
    %c0_i32 = arith.constant 0 : i32
    %c0_i32_0 = arith.constant 0 : i32
    %c0_i32_1 = arith.constant 0 : i32
    return %c0_i32, %c0_i32_0 : i32, i32
  }
  func.func @transform_3(%arg0: i32) -> (i32, i32) {
    %c0_i32 = arith.constant 0 : i32
    %c0_i32_0 = arith.constant 0 : i32
    %c0_i32_1 = arith.constant 0 : i32
    return %c0_i32, %c0_i32_0 : i32, i32
  }
  func.func @transform_4(%arg0: i32) -> (i32, i32) {
    %c0_i32 = arith.constant 0 : i32
    %c0_i32_0 = arith.constant 0 : i32
    %c0_i32_1 = arith.constant 0 : i32
    return %c0_i32, %c0_i32_0 : i32, i32
  }
  func.func @transform_5(%arg0: i32) -> (i32, i32) {
    %c0_i32 = arith.constant 0 : i32
    %c0_i32_0 = arith.constant 0 : i32
    %c0_i32_1 = arith.constant 0 : i32
    return %c0_i32, %c0_i32_0 : i32, i32
  }
  func.func @transform_6(%arg0: i32) -> (i32, i32) {
    %c0_i32 = arith.constant 0 : i32
    %c0_i32_0 = arith.constant 0 : i32
    %c0_i32_1 = arith.constant 0 : i32
    return %c0_i32, %c0_i32_0 : i32, i32
  }
  func.func @transform_7(%arg0: i32) -> (i32, i32) {
    %c0_i32 = arith.constant 0 : i32
    %c0_i32_0 = arith.constant 0 : i32
    %c0_i32_1 = arith.constant 0 : i32
    return %c0_i32, %c0_i32_0 : i32, i32
  }
  func.func @transform_8(%arg0: i32) -> (i32, i32) {
    %c0_i32 = arith.constant 0 : i32
    %c0_i32_0 = arith.constant 0 : i32
    %c0_i32_1 = arith.constant 0 : i32
    return %c0_i32, %c0_i32_0 : i32, i32
  }
  func.func @transform_9(%arg0: i32) -> (i32, i32) {
    %c0_i32 = arith.constant 0 : i32
    %c0_i32_0 = arith.constant 0 : i32
    %c0_i32_1 = arith.constant 0 : i32
    return %c0_i32, %c0_i32_0 : i32, i32
  }
  func.func @transform_10(%arg0: i32) -> (i32, i32) {
    %c0_i32 = arith.constant 0 : i32
    %c0_i32_0 = arith.constant 0 : i32
    %c0_i32_1 = arith.constant 0 : i32
    return %c0_i32, %c0_i32_0 : i32, i32
  }
  func.func @transform_11(%arg0: i32) -> (i32, i32) {
    %c0_i32 = arith.constant 0 : i32
    %c0_i32_0 = arith.constant 0 : i32
    %c0_i32_1 = arith.constant 0 : i32
    return %c0_i32, %c0_i32_0 : i32, i32
  }
  func.func @transform_12(%arg0: i32) -> (i32, i32) {
    %c0_i32 = arith.constant 0 : i32
    %c0_i32_0 = arith.constant 0 : i32
    %c0_i32_1 = arith.constant 0 : i32
    return %c0_i32, %c0_i32_0 : i32, i32
  }
  func.func @transform_13(%arg0: i32) -> (i32, i32) {
    %c0_i32 = arith.constant 0 : i32
    %c0_i32_0 = arith.constant 0 : i32
    %c0_i32_1 = arith.constant 0 : i32
    return %c0_i32, %c0_i32_0 : i32, i32
  }
  func.func @transform_14(%arg0: i32) -> (i32, i32) {
    %c0_i32 = arith.constant 0 : i32
    %c0_i32_0 = arith.constant 0 : i32
    return %arg0, %c0_i32 : i32, i32
  }
  func.func @transform_15(%arg0: i32) -> (i32, i32) {
    %c0_i32 = arith.constant 0 : i32
    %c0_i32_0 = arith.constant 0 : i32
    return %arg0, %c0_i32 : i32, i32
  }
}

</mosaic_0001>

<llo_original>
// kernel: vae_forward.1
$region0: #{vae_forward.1}
  #allocation0 [shape = 'u32[]', space=smem, size = 0x4, offset = 0x4, fixed_abs, tag = 'smem constant byte address 0x4 - core index']
  #allocation1 [shape = 'u32[144,128]{1,0:T(1,128)}', space=vmem, size = 0x12000, scoped, tag = 'internal scratch']
  %s0 = inlined_call_operand.vmem [shape: bf16[100,784], index: 0, kind: input, shape index: {}]
  %s1 = inlined_call_operand.vmem [shape: bf16[100,128], index: 1, kind: input, shape index: {}]
  %s2 = inlined_call_operand.vmem [shape: bf16[784,256], index: 2, kind: input, shape index: {}]
  %s3 = inlined_call_operand.vmem [shape: f32[1,256], index: 3, kind: input, shape index: {}]
  %s4 = inlined_call_operand.vmem [shape: bf16[256,128], index: 4, kind: input, shape index: {}]
  %s5 = inlined_call_operand.vmem [shape: f32[1,128], index: 5, kind: input, shape index: {}]
  %s6 = inlined_call_operand.vmem [shape: bf16[128,256], index: 6, kind: input, shape index: {}]
  %s7 = inlined_call_operand.vmem [shape: f32[1,256], index: 7, kind: input, shape index: {}]
  %s8 = inlined_call_operand.vmem [shape: bf16[128,128], index: 8, kind: input, shape index: {}]
  %s9 = inlined_call_operand.vmem [shape: f32[1,128], index: 9, kind: input, shape index: {}]
  %s10 = inlined_call_operand.vmem [shape: bf16[128,256], index: 10, kind: input, shape index: {}]
  %s11 = inlined_call_operand.vmem [shape: f32[1,256], index: 11, kind: input, shape index: {}]
  %s12 = inlined_call_operand.vmem [shape: bf16[256,784], index: 12, kind: input, shape index: {}]
  %s13 = inlined_call_operand.vmem [shape: f32[1,784], index: 13, kind: input, shape index: {}]
  %s14 = inlined_call_operand.hbm [shape: f32[100,784], index: 14, kind: output, shape index: {0}]
  %s15 = inlined_call_operand.vmem [shape: f32[100,256], index: 15, kind: output, shape index: {1}]
  %16 = xla_tuple %s14, %s15
  %s17 = sld [smem:[#allocation0]]
  $region123: #{vae_forward.1} parent=0
    _
  %s19 = ssub.s32 1, %s17
  %s20 = scalar_select 0, %s19, %s17
  $region1: #{vae_forward.1} parent=0
    #allocation2 [shape = 'u8[229376]{0}', space=vmem, size = 0x38000, scoped, tag = 'output window, operand 0']
    #allocation3 [shape = 's32[2]{0}', space=sflag, size = 0x8, scoped, tag = 'scoped memory for vae_forward.1']
    #allocation4 [shape = 'u8[65536]{0}', space=vmem, size = 0x10000, scoped, tag = 'output window, operand 1']
    %21 = vsyncpa [#allocation3], 0
    %s22 = scalar_lea.sflag [#allocation3], 1
    %23 = vsyncpa %s22, 0
    loop: start=0, step=1, limit=6
    $region2: #{vae_forward.1} parent=1 // loop_pre_header
      _
    $region3: #{vae_forward.1} parent=1 // loop_header
      %s25 = sphi 0, %s29
      %p26 = scmp.ge.s32.totalorder %s25, 6
      %s35 = sphi 0, %s37
      %s38 = sphi 0, %s35
      %s39 = sphi 0, %s38
      %s55 = sphi 0, %s39
      %s61 = sphi 0, %s63
      %s64 = sphi 0, %s61
      %s65 = sphi 0, %s64
      %s81 = sphi 0, %s65
      %s85 = sphi 0, %s85
      %s87 = sphi 0, %s85
      %s88 = sphi 0, %s87
      %s102 = sphi 0, %s88
      %s106 = sphi 0, %s106
      %s108 = sphi 0, %s106
      %s109 = sphi 0, %s108
      %s123 = sphi 0, %s109
      %s127 = sphi 0, %s127
      %s129 = sphi 0, %s127
      %s130 = sphi 0, %s129
      %s144 = sphi 0, %s130
      %s148 = sphi 0, %s148
      %s150 = sphi 0, %s148
      %s151 = sphi 0, %s150
      %s165 = sphi 0, %s151
      %s169 = sphi 0, %s169
      %s171 = sphi 0, %s169
      %s172 = sphi 0, %s171
      %s186 = sphi 0, %s172
      %s190 = sphi 0, %s190
      %s192 = sphi 0, %s190
      %s193 = sphi 0, %s192
      %s207 = sphi 0, %s193
      %s211 = sphi 0, %s211
      %s213 = sphi 0, %s211
      %s214 = sphi 0, %s213
      %s228 = sphi 0, %s214
      %s232 = sphi 0, %s232
      %s234 = sphi 0, %s232
      %s235 = sphi 0, %s234
      %s249 = sphi 0, %s235
      %s253 = sphi 0, %s253
      %s255 = sphi 0, %s253
      %s256 = sphi 0, %s255
      %s270 = sphi 0, %s256
      %s274 = sphi 0, %s274
      %s276 = sphi 0, %s274
      %s277 = sphi 0, %s276
      %s291 = sphi 0, %s277
      %s295 = sphi 0, %s295
      %s297 = sphi 0, %s295
      %s298 = sphi 0, %s297
      %s312 = sphi 0, %s298
      %s316 = sphi 0, %s316
      %s318 = sphi 0, %s316
      %s319 = sphi 0, %s318
      %s333 = sphi 0, %s319
      %s339 = sphi 0, %s341
      %s342 = sphi 0, %s339
      %s343 = sphi 0, %s342
      %s359 = sphi 0, %s343
      %s365 = sphi 0, %s367
      %s368 = sphi 0, %s365
      %s369 = sphi 0, %s368
      %s385 = sphi 0, %s369
    $region4: #{vae_forward.1} parent=1 // loop_header_branch
      %28 = sbr.rel (%p26) target = $region8
    $region5: #{vae_forward.1} parent=1 // loop_body
      %s30 = ssub.s32 %s25, 1
      %s31 = ssub.s32 %s25, 2
      %s32 = sadd.s32 %s25, 1
      %s33 = ssub.s32 %s25, %s32
      %p34 = scmp.eq.s32.totalorder %s33, 0
      %s36 = sadd.s32 %s35, 1
      %s37 = scalar_select %p34, %s35, %s36
      %p40 = pneg %p34
      %p41 = scmp.eq.s32.totalorder %s25, 3
      %p42 = por %p40, %p41
      %p43 = scmp.ne.s32.totalorder %s35, %s38
      %p44 = scmp.eq.s32.totalorder %s25, 0
      %p45 = por %p43, %p44
      %p46 = scmp.ne.s32.totalorder %s35, %s38
      %p47 = scmp.eq.s32.totalorder %s30, 3
      %p48 = por %p46, %p47
      %p49 = scmp.ne.s32.totalorder %s38, %s39
      %p50 = scmp.eq.s32.totalorder %s30, 0
      %p51 = por %p49, %p50
      %p52 = scmp.ne.s32.totalorder %s38, %s39
      %p53 = scmp.eq.s32.totalorder %s31, 3
      %p54 = por %p52, %p53
      %p56 = scmp.ne.s32.totalorder %s39, %s55
      %p57 = scmp.eq.s32.totalorder %s31, 0
      %p58 = por %p56, %p57
      %s59 = ssub.s32 %s25, %s32
      %p60 = scmp.eq.s32.totalorder %s59, 0
      %s62 = sadd.s32 %s61, 1
      %s63 = scalar_select %p60, %s61, %s62
      %p66 = pneg %p60
      %p67 = scmp.eq.s32.totalorder %s25, 3
      %p68 = por %p66, %p67
      %p69 = scmp.ne.s32.totalorder %s61, %s64
      %p70 = scmp.eq.s32.totalorder %s25, 0
      %p71 = por %p69, %p70
      %p72 = scmp.ne.s32.totalorder %s61, %s64
      %p73 = scmp.eq.s32.totalorder %s30, 3
      %p74 = por %p72, %p73
      %p75 = scmp.ne.s32.totalorder %s64, %s65
      %p76 = scmp.eq.s32.totalorder %s30, 0
      %p77 = por %p75, %p76
      %p78 = scmp.ne.s32.totalorder %s64, %s65
      %p79 = scmp.eq.s32.totalorder %s31, 3
      %p80 = por %p78, %p79
      %p82 = scmp.ne.s32.totalorder %s65, %s81
      %p83 = scmp.eq.s32.totalorder %s31, 0
      %p84 = por %p82, %p83
      %s86 = sadd.s32 %s85, 1
      %p89 = scmp.eq.s32.totalorder %s25, 3
      %p90 = scmp.ne.s32.totalorder %s85, %s87
      %p91 = scmp.eq.s32.totalorder %s25, 0
      %p92 = por %p90, %p91
      %p93 = scmp.ne.s32.totalorder %s85, %s87
      %p94 = scmp.eq.s32.totalorder %s30, 3
      %p95 = por %p93, %p94
      %p96 = scmp.ne.s32.totalorder %s87, %s88
      %p97 = scmp.eq.s32.totalorder %s30, 0
      %p98 = por %p96, %p97
      %p99 = scmp.ne.s32.totalorder %s87, %s88
      %p100 = scmp.eq.s32.totalorder %s31, 3
      %p101 = por %p99, %p100
      %p103 = scmp.ne.s32.totalorder %s88, %s102
      %p104 = scmp.eq.s32.totalorder %s31, 0
      %p105 = por %p103, %p104
      %s107 = sadd.s32 %s106, 1
      %p110 = scmp.eq.s32.totalorder %s25, 3
      %p111 = scmp.ne.s32.totalorder %s106, %s108
      %p112 = scmp.eq.s32.totalorder %s25, 0
      %p113 = por %p111, %p112
      %p114 = scmp.ne.s32.totalorder %s106, %s108
      %p115 = scmp.eq.s32.totalorder %s30, 3
      %p116 = por %p114, %p115
      %p117 = scmp.ne.s32.totalorder %s108, %s109
      %p118 = scmp.eq.s32.totalorder %s30, 0
      %p119 = por %p117, %p118
      %p120 = scmp.ne.s32.totalorder %s108, %s109
      %p121 = scmp.eq.s32.totalorder %s31, 3
      %p122 = por %p120, %p121
      %p124 = scmp.ne.s32.totalorder %s109, %s123
      %p125 = scmp.eq.s32.totalorder %s31, 0
      %p126 = por %p124, %p125
      %s128 = sadd.s32 %s127, 1
      %p131 = scmp.eq.s32.totalorder %s25, 3
      %p132 = scmp.ne.s32.totalorder %s127, %s129
      %p133 = scmp.eq.s32.totalorder %s25, 0
      %p134 = por %p132, %p133
      %p135 = scmp.ne.s32.totalorder %s127, %s129
      %p136 = scmp.eq.s32.totalorder %s30, 3
      %p137 = por %p135, %p136
      %p138 = scmp.ne.s32.totalorder %s129, %s130
      %p139 = scmp.eq.s32.totalorder %s30, 0
      %p140 = por %p138, %p139
      %p141 = scmp.ne.s32.totalorder %s129, %s130
      %p142 = scmp.eq.s32.totalorder %s31, 3
      %p143 = por %p141, %p142
      %p145 = scmp.ne.s32.totalorder %s130, %s144
      %p146 = scmp.eq.s32.totalorder %s31, 0
      %p147 = por %p145, %p146
      %s149 = sadd.s32 %s148, 1
      %p152 = scmp.eq.s32.totalorder %s25, 3
      %p153 = scmp.ne.s32.totalorder %s148, %s150
      %p154 = scmp.eq.s32.totalorder %s25, 0
      %p155 = por %p153, %p154
      %p156 = scmp.ne.s32.totalorder %s148, %s150
      %p157 = scmp.eq.s32.totalorder %s30, 3
      %p158 = por %p156, %p157
      %p159 = scmp.ne.s32.totalorder %s150, %s151
      %p160 = scmp.eq.s32.totalorder %s30, 0
      %p161 = por %p159, %p160
      %p162 = scmp.ne.s32.totalorder %s150, %s151
      %p163 = scmp.eq.s32.totalorder %s31, 3
      %p164 = por %p162, %p163
      %p166 = scmp.ne.s32.totalorder %s151, %s165
      %p167 = scmp.eq.s32.totalorder %s31, 0
      %p168 = por %p166, %p167
      %s170 = sadd.s32 %s169, 1
      %p173 = scmp.eq.s32.totalorder %s25, 3
      %p174 = scmp.ne.s32.totalorder %s169, %s171
      %p175 = scmp.eq.s32.totalorder %s25, 0
      %p176 = por %p174, %p175
      %p177 = scmp.ne.s32.totalorder %s169, %s171
      %p178 = scmp.eq.s32.totalorder %s30, 3
      %p179 = por %p177, %p178
      %p180 = scmp.ne.s32.totalorder %s171, %s172
      %p181 = scmp.eq.s32.totalorder %s30, 0
      %p182 = por %p180, %p181
      %p183 = scmp.ne.s32.totalorder %s171, %s172
      %p184 = scmp.eq.s32.totalorder %s31, 3
      %p185 = por %p183, %p184
      %p187 = scmp.ne.s32.totalorder %s172, %s186
      %p188 = scmp.eq.s32.totalorder %s31, 0
      %p189 = por %p187, %p188
      %s191 = sadd.s32 %s190, 1
      %p194 = scmp.eq.s32.totalorder %s25, 3
      %p195 = scmp.ne.s32.totalorder %s190, %s192
      %p196 = scmp.eq.s32.totalorder %s25, 0
      %p197 = por %p195, %p196
      %p198 = scmp.ne.s32.totalorder %s190, %s192
      %p199 = scmp.eq.s32.totalorder %s30, 3
      %p200 = por %p198, %p199
      %p201 = scmp.ne.s32.totalorder %s192, %s193
      %p202 = scmp.eq.s32.totalorder %s30, 0
      %p203 = por %p201, %p202
      %p204 = scmp.ne.s32.totalorder %s192, %s193
      %p205 = scmp.eq.s32.totalorder %s31, 3
      %p206 = por %p204, %p205
      %p208 = scmp.ne.s32.totalorder %s193, %s207
      %p209 = scmp.eq.s32.totalorder %s31, 0
      %p210 = por %p208, %p209
      %s212 = sadd.s32 %s211, 1
      %p215 = scmp.eq.s32.totalorder %s25, 3
      %p216 = scmp.ne.s32.totalorder %s211, %s213
      %p217 = scmp.eq.s32.totalorder %s25, 0
      %p218 = por %p216, %p217
      %p219 = scmp.ne.s32.totalorder %s211, %s213
      %p220 = scmp.eq.s32.totalorder %s30, 3
      %p221 = por %p219, %p220
      %p222 = scmp.ne.s32.totalorder %s213, %s214
      %p223 = scmp.eq.s32.totalorder %s30, 0
      %p224 = por %p222, %p223
      %p225 = scmp.ne.s32.totalorder %s213, %s214
      %p226 = scmp.eq.s32.totalorder %s31, 3
      %p227 = por %p225, %p226
      %p229 = scmp.ne.s32.totalorder %s214, %s228
      %p230 = scmp.eq.s32.totalorder %s31, 0
      %p231 = por %p229, %p230
      %s233 = sadd.s32 %s232, 1
      %p236 = scmp.eq.s32.totalorder %s25, 3
      %p237 = scmp.ne.s32.totalorder %s232, %s234
      %p238 = scmp.eq.s32.totalorder %s25, 0
      %p239 = por %p237, %p238
      %p240 = scmp.ne.s32.totalorder %s232, %s234
      %p241 = scmp.eq.s32.totalorder %s30, 3
      %p242 = por %p240, %p241
      %p243 = scmp.ne.s32.totalorder %s234, %s235
      %p244 = scmp.eq.s32.totalorder %s30, 0
      %p245 = por %p243, %p244
      %p246 = scmp.ne.s32.totalorder %s234, %s235
      %p247 = scmp.eq.s32.totalorder %s31, 3
      %p248 = por %p246, %p247
      %p250 = scmp.ne.s32.totalorder %s235, %s249
      %p251 = scmp.eq.s32.totalorder %s31, 0
      %p252 = por %p250, %p251
      %s254 = sadd.s32 %s253, 1
      %p257 = scmp.eq.s32.totalorder %s25, 3
      %p258 = scmp.ne.s32.totalorder %s253, %s255
      %p259 = scmp.eq.s32.totalorder %s25, 0
      %p260 = por %p258, %p259
      %p261 = scmp.ne.s32.totalorder %s253, %s255
      %p262 = scmp.eq.s32.totalorder %s30, 3
      %p263 = por %p261, %p262
      %p264 = scmp.ne.s32.totalorder %s255, %s256
      %p265 = scmp.eq.s32.totalorder %s30, 0
      %p266 = por %p264, %p265
      %p267 = scmp.ne.s32.totalorder %s255, %s256
      %p268 = scmp.eq.s32.totalorder %s31, 3
      %p269 = por %p267, %p268
      %p271 = scmp.ne.s32.totalorder %s256, %s270
      %p272 = scmp.eq.s32.totalorder %s31, 0
      %p273 = por %p271, %p272
      %s275 = sadd.s32 %s274, 1
      %p278 = scmp.eq.s32.totalorder %s25, 3
      %p279 = scmp.ne.s32.totalorder %s274, %s276
      %p280 = scmp.eq.s32.totalorder %s25, 0
      %p281 = por %p279, %p280
      %p282 = scmp.ne.s32.totalorder %s274, %s276
      %p283 = scmp.eq.s32.totalorder %s30, 3
      %p284 = por %p282, %p283
      %p285 = scmp.ne.s32.totalorder %s276, %s277
      %p286 = scmp.eq.s32.totalorder %s30, 0
      %p287 = por %p285, %p286
      %p288 = scmp.ne.s32.totalorder %s276, %s277
      %p289 = scmp.eq.s32.totalorder %s31, 3
      %p290 = por %p288, %p289
      %p292 = scmp.ne.s32.totalorder %s277, %s291
      %p293 = scmp.eq.s32.totalorder %s31, 0
      %p294 = por %p292, %p293
      %s296 = sadd.s32 %s295, 1
      %p299 = scmp.eq.s32.totalorder %s25, 3
      %p300 = scmp.ne.s32.totalorder %s295, %s297
      %p301 = scmp.eq.s32.totalorder %s25, 0
      %p302 = por %p300, %p301
      %p303 = scmp.ne.s32.totalorder %s295, %s297
      %p304 = scmp.eq.s32.totalorder %s30, 3
      %p305 = por %p303, %p304
      %p306 = scmp.ne.s32.totalorder %s297, %s298
      %p307 = scmp.eq.s32.totalorder %s30, 0
      %p308 = por %p306, %p307
      %p309 = scmp.ne.s32.totalorder %s297, %s298
      %p310 = scmp.eq.s32.totalorder %s31, 3
      %p311 = por %p309, %p310
      %p313 = scmp.ne.s32.totalorder %s298, %s312
      %p314 = scmp.eq.s32.totalorder %s31, 0
      %p315 = por %p313, %p314
      %s317 = sadd.s32 %s316, 1
      %p320 = scmp.eq.s32.totalorder %s25, 3
      %p321 = scmp.ne.s32.totalorder %s316, %s318
      %p322 = scmp.eq.s32.totalorder %s25, 0
      %p323 = por %p321, %p322
      %p324 = scmp.ne.s32.totalorder %s316, %s318
      %p325 = scmp.eq.s32.totalorder %s30, 3
      %p326 = por %p324, %p325
      %p327 = scmp.ne.s32.totalorder %s318, %s319
      %p328 = scmp.eq.s32.totalorder %s30, 0
      %p329 = por %p327, %p328
      %p330 = scmp.ne.s32.totalorder %s318, %s319
      %p331 = scmp.eq.s32.totalorder %s31, 3
      %p332 = por %p330, %p331
      %p334 = scmp.ne.s32.totalorder %s319, %s333
      %p335 = scmp.eq.s32.totalorder %s31, 0
      %p336 = por %p334, %p335
      %s337 = ssub.s32 %s25, %s32
      %p338 = scmp.eq.s32.totalorder %s337, 0
      %s340 = sadd.s32 %s339, 1
      %s341 = scalar_select %p338, %s339, %s340
      %p344 = pneg %p338
      %p345 = scmp.eq.s32.totalorder %s25, 3
      %p346 = por %p344, %p345
      %p347 = scmp.ne.s32.totalorder %s339, %s342
      %p348 = scmp.eq.s32.totalorder %s25, 0
      %p349 = por %p347, %p348
      %p350 = scmp.ne.s32.totalorder %s339, %s342
      %p351 = scmp.eq.s32.totalorder %s30, 3
      %p352 = por %p350, %p351
      %p353 = scmp.ne.s32.totalorder %s342, %s343
      %p354 = scmp.eq.s32.totalorder %s30, 0
      %p355 = por %p353, %p354
      %p356 = scmp.ne.s32.totalorder %s342, %s343
      %p357 = scmp.eq.s32.totalorder %s31, 3
      %p358 = por %p356, %p357
      %p360 = scmp.ne.s32.totalorder %s343, %s359
      %p361 = scmp.eq.s32.totalorder %s31, 0
      %p362 = por %p360, %p361
      %s363 = ssub.s32 %s25, %s32
      %p364 = scmp.eq.s32.totalorder %s363, 0
      %s366 = sadd.s32 %s365, 1
      %s367 = scalar_select %p364, %s365, %s366
      %p370 = pneg %p364
      %p371 = scmp.eq.s32.totalorder %s25, 3
      %p372 = por %p370, %p371
      %p373 = scmp.ne.s32.totalorder %s365, %s368
      %p374 = scmp.eq.s32.totalorder %s25, 0
      %p375 = por %p373, %p374
      %p376 = scmp.ne.s32.totalorder %s365, %s368
      %p377 = scmp.eq.s32.totalorder %s30, 3
      %p378 = por %p376, %p377
      %p379 = scmp.ne.s32.totalorder %s368, %s369
      %p380 = scmp.eq.s32.totalorder %s30, 0
      %p381 = por %p379, %p380
      %p382 = scmp.ne.s32.totalorder %s368, %s369
      %p383 = scmp.eq.s32.totalorder %s31, 3
      %p384 = por %p382, %p383
      %p386 = scmp.ne.s32.totalorder %s369, %s385
      %p387 = scmp.eq.s32.totalorder %s31, 0
      %p388 = por %p386, %p387
      %p389 = scmp.le.s32.totalorder 1, %s25
      %p390 = scmp.lt.s32.totalorder %s25, 5
      %p391 = pnand %p389, %p390
      %p392 = pneg %p391
      // Predicated region
      $region9: #{vae_forward.1} parent=5 // pred_check
        _
      $region10: #{vae_forward.1} parent=5 // pred_check_branch
        %394 = sbr.rel (%p391) target = $region12
      $region11: #{vae_forward.1} parent=5 // pred_region
        %s395 = ssub.s32 %s25, 1
        // Predicated region
        $region13: #{vae_forward.1} parent=11 // pred_check
          %p396 = pneg %p98
        $region14: #{vae_forward.1} parent=11 // pred_check_branch
          %398 = sbr.rel (%p396) target = $region16
        $region15: #{vae_forward.1} parent=11 // pred_region
          _
        $region16: #{vae_forward.1} parent=11 // pred_fallthru
          _
        // Predicated region
        $region17: #{vae_forward.1} parent=11 // pred_check
          %p399 = pneg %p119
        $region18: #{vae_forward.1} parent=11 // pred_check_branch
          %401 = sbr.rel (%p399) target = $region20
        $region19: #{vae_forward.1} parent=11 // pred_region
          _
        $region20: #{vae_forward.1} parent=11 // pred_fallthru
          _
        // Predicated region
        $region21: #{vae_forward.1} parent=11 // pred_check
          %p402 = pneg %p140
        $region22: #{vae_forward.1} parent=11 // pred_check_branch
          %404 = sbr.rel (%p402) target = $region24
        $region23: #{vae_forward.1} parent=11 // pred_region
          _
        $region24: #{vae_forward.1} parent=11 // pred_fallthru
          _
        // Predicated region
        $region25: #{vae_forward.1} parent=11 // pred_check
          %p405 = pneg %p161
        $region26: #{vae_forward.1} parent=11 // pred_check_branch
          %407 = sbr.rel (%p405) target = $region28
        $region27: #{vae_forward.1} parent=11 // pred_region
          _
        $region28: #{vae_forward.1} parent=11 // pred_fallthru
          _
        // Predicated region
        $region29: #{vae_forward.1} parent=11 // pred_check
          %p408 = pneg %p182
        $region30: #{vae_forward.1} parent=11 // pred_check_branch
          %410 = sbr.rel (%p408) target = $region32
        $region31: #{vae_forward.1} parent=11 // pred_region
          _
        $region32: #{vae_forward.1} parent=11 // pred_fallthru
          _
        // Predicated region
        $region33: #{vae_forward.1} parent=11 // pred_check
          %p411 = pneg %p203
        $region34: #{vae_forward.1} parent=11 // pred_check_branch
          %413 = sbr.rel (%p411) target = $region36
        $region35: #{vae_forward.1} parent=11 // pred_region
          _
        $region36: #{vae_forward.1} parent=11 // pred_fallthru
          _
        // Predicated region
        $region37: #{vae_forward.1} parent=11 // pred_check
          %p414 = pneg %p224
        $region38: #{vae_forward.1} parent=11 // pred_check_branch
          %416 = sbr.rel (%p414) target = $region40
        $region39: #{vae_forward.1} parent=11 // pred_region
          _
        $region40: #{vae_forward.1} parent=11 // pred_fallthru
          _
        // Predicated region
        $region41: #{vae_forward.1} parent=11 // pred_check
          %p417 = pneg %p245
        $region42: #{vae_forward.1} parent=11 // pred_check_branch
          %419 = sbr.rel (%p417) target = $region44
        $region43: #{vae_forward.1} parent=11 // pred_region
          _
        $region44: #{vae_forward.1} parent=11 // pred_fallthru
          _
        // Predicated region
        $region45: #{vae_forward.1} parent=11 // pred_check
          %p420 = pneg %p266
        $region46: #{vae_forward.1} parent=11 // pred_check_branch
          %422 = sbr.rel (%p420) target = $region48
        $region47: #{vae_forward.1} parent=11 // pred_region
          _
        $region48: #{vae_forward.1} parent=11 // pred_fallthru
          _
        // Predicated region
        $region49: #{vae_forward.1} parent=11 // pred_check
          %p423 = pneg %p287
        $region50: #{vae_forward.1} parent=11 // pred_check_branch
          %425 = sbr.rel (%p423) target = $region52
        $region51: #{vae_forward.1} parent=11 // pred_region
          _
        $region52: #{vae_forward.1} parent=11 // pred_fallthru
          _
        // Predicated region
        $region53: #{vae_forward.1} parent=11 // pred_check
          %p426 = pneg %p308
        $region54: #{vae_forward.1} parent=11 // pred_check_branch
          %428 = sbr.rel (%p426) target = $region56
        $region55: #{vae_forward.1} parent=11 // pred_region
          _
        $region56: #{vae_forward.1} parent=11 // pred_fallthru
          _
        // Predicated region
        $region57: #{vae_forward.1} parent=11 // pred_check
          %p429 = pneg %p329
        $region58: #{vae_forward.1} parent=11 // pred_check_branch
          %431 = sbr.rel (%p429) target = $region60
        $region59: #{vae_forward.1} parent=11 // pred_region
          _
        $region60: #{vae_forward.1} parent=11 // pred_fallthru
          _
      $region12: #{vae_forward.1} parent=5 // pred_fallthru
        _
      %p432 = scmp.lt.s32.totalorder %s25, 4
      // Predicated region
      $region61: #{vae_forward.1} parent=5 // pred_check
        %p433 = pneg %p432
      $region62: #{vae_forward.1} parent=5 // pred_check_branch
        %435 = sbr.rel (%p433) target = $region64
      $region63: #{vae_forward.1} parent=5 // pred_region
        // Predicated region
        $region65: #{vae_forward.1} parent=63 // pred_check
          %p436 = pneg %p45
        $region66: #{vae_forward.1} parent=63 // pred_check_branch
          %438 = sbr.rel (%p436) target = $region68
        $region67: #{vae_forward.1} parent=63 // pred_region
          %s439 = smul.u32 4, %s25
          %s440 = ssub.s32 13, %s439
          %p441 = scmp.lt.s32.totalorder %s440, 4
          %s442 = scalar_select %p441, %s440, 4
          %s443 = smul.u32 64, %s442
          %s444 = smul.u32 %s443, 7
          %p445 = scmp.lt.s32.totalorder %s439, 12
          %s446 = scalar_select %p445, %s439, 12
          %s447 = smul.addr %s446, 7
          %s448 = smul.addr %s447, 4
          %s449 = scalar_lea.vmem %s0, %s448
          %s450 = smul.u32 4, %s25
          %s451 = ssub.s32 13, %s450
          %p452 = scmp.lt.s32.totalorder %s451, 4
          %s453 = scalar_select %p452, %s451, 4
          %s454 = smul.u32 64, %s453
          %s455 = smul.u32 %s454, 7
        $region68: #{vae_forward.1} parent=63 // pred_fallthru
          _
        // Predicated region
        $region69: #{vae_forward.1} parent=63 // pred_check
          %p456 = pneg %p71
        $region70: #{vae_forward.1} parent=63 // pred_check_branch
          %458 = sbr.rel (%p456) target = $region72
        $region71: #{vae_forward.1} parent=63 // pred_region
          %s459 = smul.u32 4, %s25
          %s460 = ssub.s32 13, %s459
          %p461 = scmp.lt.s32.totalorder %s460, 4
          %s462 = scalar_select %p461, %s460, 4
          %s463 = smul.u32 64, %s462
          %p464 = scmp.lt.s32.totalorder %s459, 12
          %s465 = scalar_select %p464, %s459, 12
          %s466 = smul.addr %s465, 4
          %s467 = scalar_lea.vmem %s1, %s466
          %s468 = smul.u32 4, %s25
          %s469 = ssub.s32 13, %s468
          %p470 = scmp.lt.s32.totalorder %s469, 4
          %s471 = scalar_select %p470, %s469, 4
          %s472 = smul.u32 64, %s471
        $region72: #{vae_forward.1} parent=63 // pred_fallthru
          _
      $region64: #{vae_forward.1} parent=5 // pred_fallthru
        _
      %p473 = scmp.le.s32.totalorder 1, %s25
      %p474 = scmp.lt.s32.totalorder %s25, 5
      %p475 = pnand %p473, %p474
      %p476 = pneg %p475
      // Predicated region
      $region73: #{vae_forward.1} parent=5 // pred_check
        _
      $region74: #{vae_forward.1} parent=5 // pred_check_branch
        %478 = sbr.rel (%p475) target = $region76
      $region75: #{vae_forward.1} parent=5 // pred_region
        %s479 = ssub.s32 %s25, 1
        %s480 = smul.u32 4, %s30
        %s481 = ssub.s32 13, %s480
        %p482 = scmp.lt.s32.totalorder %s481, 4
        %s483 = scalar_select %p482, %s481, 4
        %s484 = smul.u32 64, %s483
        %s485 = smul.u32 %s484, 7
        %p486 = scmp.lt.s32.totalorder %s480, 12
        %s487 = scalar_select %p486, %s480, 12
        %s488 = smul.addr %s487, 7
        %s489 = smul.addr %s488, 4
        %s490 = scalar_lea.vmem %s0, %s489
        %p491 = pneg %p51
        %p492 = pneg %p48
        %s493 = smul.u32 4, %s30
        %s494 = ssub.s32 13, %s493
        %p495 = scmp.lt.s32.totalorder %s494, 4
        %s496 = scalar_select %p495, %s494, 4
        %s497 = smul.u32 64, %s496
        %p498 = scmp.lt.s32.totalorder %s493, 12
        %s499 = scalar_select %p498, %s493, 12
        %s500 = smul.addr %s499, 4
        %s501 = scalar_lea.vmem %s1, %s500
        %p502 = pneg %p77
        %p503 = pneg %p74
        %p504 = pneg %p98
        %p505 = pneg %p95
        %p506 = pneg %p119
        %p507 = pneg %p116
        %p508 = pneg %p140
        %p509 = pneg %p137
        %p510 = pneg %p161
        %p511 = pneg %p158
        %p512 = pneg %p182
        %p513 = pneg %p179
        %p514 = pneg %p203
        %p515 = pneg %p200
        %p516 = pneg %p224
        %p517 = pneg %p221
        %p518 = pneg %p245
        %p519 = pneg %p242
        %p520 = pneg %p266
        %p521 = pneg %p263
        %p522 = pneg %p287
        %p523 = pneg %p284
        %p524 = pneg %p308
        %p525 = pneg %p305
        %p526 = pneg %p329
        %p527 = pneg %p326
        %p528 = pneg %p355
        %p529 = pneg %p352
        %s530 = sand.u32 %s342, 1
        %s531 = scalar_lea.sflag [#allocation3], %s530
        %s532 = sand.u32 %s342, 1
        %s533 = smul.addr %s532, 224
        %s534 = scalar_lea.vmem [#allocation2], %s533
        %p535 = pneg %p381
        %p536 = pneg %p378
        %s537 = sand.u32 %s368, 1
        %s538 = sand.u32 %s368, 1
        %s539 = smul.addr %s538, 64
        %s540 = scalar_lea.vmem [#allocation4], %s539
        %s541 = smul.u32 4, %s30
        %s542 = ssub.s32 13, %s541
        %p543 = scmp.lt.s32.totalorder %s542, 4
        %s544 = scalar_select %p543, %s542, 4
        %s545 = smul.u32 64, %s544
        %s546 = smul.u32 %s545, 7
        %p547 = scmp.lt.s32.totalorder %s541, 12
        %s548 = scalar_select %p547, %s541, 12
        %s549 = smul.addr %s548, 7
        %s550 = smul.addr %s549, 4
        %s551 = scalar_lea.vmem %s0, %s550
        %s552 = smul.u32 4, %s30
        %s553 = ssub.s32 13, %s552
        %p554 = scmp.lt.s32.totalorder %s553, 4
        %s555 = scalar_select %p554, %s553, 4
        %s556 = smul.u32 64, %s555
        %s557 = smul.u32 %s556, 7
        %s558 = smul.u32 4, %s30
        %s559 = ssub.s32 13, %s558
        %p560 = scmp.lt.s32.totalorder %s559, 4
        %s561 = scalar_select %p560, %s559, 4
        %s562 = smul.u32 64, %s561
        %p563 = scmp.lt.s32.totalorder %s558, 12
        %s564 = scalar_select %p563, %s558, 12
        %s565 = smul.addr %s564, 4
        %s566 = scalar_lea.vmem %s1, %s565
        %s567 = smul.u32 4, %s30
        %s568 = ssub.s32 13, %s567
        %p569 = scmp.lt.s32.totalorder %s568, 4
        %s570 = scalar_select %p569, %s568, 4
        %s571 = smul.u32 64, %s570
        %s572 = smul.u32 4, %s30
        %s573 = ssub.s32 13, %s572
        %p574 = scmp.lt.s32.totalorder %s573, 4
        %s575 = scalar_select %p574, %s573, 4
        %s576 = smul.u32 128, %s575
        %s577 = smul.u32 %s576, 7
        %s578 = smul.u32 4, %s30
        %s579 = ssub.s32 13, %s578
        %p580 = scmp.lt.s32.totalorder %s579, 4
        %s581 = scalar_select %p580, %s579, 4
        %s582 = smul.u32 128, %s581
        %s583 = smul.u32 %s582, 2
        %v585 = vld [vmem:[%s551] sm:$0xff]
        %v586 = vld [vmem:[%s551 + $0x8] sm:$0xff]
        %v587 = vld [vmem:[%s551 + $0x10] sm:$0xff]
        %v588 = vld [vmem:[%s551 + $0x18] sm:$0xf]
        %v589 = vld [vmem:[%s551 + $0x1c] sm:$0xff]
        %v590 = vld [vmem:[%s551 + $0x24] sm:$0xff]
        %v591 = vld [vmem:[%s551 + $0x2c] sm:$0xff]
        %v592 = vld [vmem:[%s551 + $0x34] sm:$0xf]
        %v593 = vld [vmem:[%s551 + $0x38] sm:$0xff]
        %v594 = vld [vmem:[%s551 + $0x40] sm:$0xff]
        %v595 = vld [vmem:[%s551 + $0x48] sm:$0xff]
        %v596 = vld [vmem:[%s551 + $0x50] sm:$0xf]
        %v597 = vld [vmem:[%s551 + $0x54] sm:$0xff]
        %v598 = vld [vmem:[%s551 + $0x5c] sm:$0xff]
        %v599 = vld [vmem:[%s551 + $0x64] sm:$0xff]
        %v600 = vld [vmem:[%s551 + $0x6c] sm:$0xf]
        %v601 = vld [vmem:[%s2] sm:$0xff]
        %v602 = vld [vmem:[%s2 + $0x8] sm:$0xff]
        %v603 = vld [vmem:[%s2 + $0x10] sm:$0xff]
        %v604 = vld [vmem:[%s2 + $0x18] sm:$0xff]
        %v605 = vld [vmem:[%s2 + $0x20] sm:$0xff]
        %v606 = vld [vmem:[%s2 + $0x28] sm:$0xff]
        %v607 = vld [vmem:[%s2 + $0x30] sm:$0xff]
        %v608 = vld [vmem:[%s2 + $0x38] sm:$0xff]
        %v609 = vld [vmem:[%s2 + $0x40] sm:$0xff]
        %v610 = vld [vmem:[%s2 + $0x48] sm:$0xff]
        %v611 = vld [vmem:[%s2 + $0x50] sm:$0xff]
        %v612 = vld [vmem:[%s2 + $0x58] sm:$0xff]
        %v613 = vld [vmem:[%s2 + $0x60] sm:$0xff]
        %v614 = vld [vmem:[%s2 + $0x68] sm:$0xff]
        %v615 = vld [vmem:[%s2 + $0x70] sm:$0xff]
        %v616 = vld [vmem:[%s2 + $0x78] sm:$0xff]
        %v617 = vld [vmem:[%s2 + $0x80] sm:$0xff]
        %v618 = vld [vmem:[%s2 + $0x88] sm:$0xff]
        %v619 = vld [vmem:[%s2 + $0x90] sm:$0xff]
        %v620 = vld [vmem:[%s2 + $0x98] sm:$0xff]
        %v621 = vld [vmem:[%s2 + $0xa0] sm:$0xff]
        %v622 = vld [vmem:[%s2 + $0xa8] sm:$0xff]
        %v623 = vld [vmem:[%s2 + $0xb0] sm:$0xff]
        %v624 = vld [vmem:[%s2 + $0xb8] sm:$0xff]
        %v625 = vld [vmem:[%s2 + $0xc0] sm:$0xff]
        %v626 = vld [vmem:[%s2 + $0xc8] sm:$0xff]
        %v627 = vld [vmem:[%s2 + $0xd0] sm:$0xff]
        %v628 = vld [vmem:[%s2 + $0xd8] sm:$0xff]
        %v629 = vld [vmem:[%s2 + $0xe0] sm:$0xff]
        %v630 = vld [vmem:[%s2 + $0xe8] sm:$0xff]
        %v631 = vld [vmem:[%s2 + $0xf0] sm:$0xff]
        %v632 = vld [vmem:[%s2 + $0xf8] sm:$0xff]
        %v633 = vld [vmem:[%s2 + $0x100] sm:$0xff]
        %v634 = vld [vmem:[%s2 + $0x108] sm:$0xff]
        %v635 = vld [vmem:[%s2 + $0x110] sm:$0xff]
        %v636 = vld [vmem:[%s2 + $0x118] sm:$0xff]
        %v637 = vld [vmem:[%s2 + $0x120] sm:$0xff]
        %v638 = vld [vmem:[%s2 + $0x128] sm:$0xff]
        %v639 = vld [vmem:[%s2 + $0x130] sm:$0xff]
        %v640 = vld [vmem:[%s2 + $0x138] sm:$0xff]
        %v641 = vld [vmem:[%s2 + $0x140] sm:$0xff]
        %v642 = vld [vmem:[%s2 + $0x148] sm:$0xff]
        %v643 = vld [vmem:[%s2 + $0x150] sm:$0xff]
        %v644 = vld [vmem:[%s2 + $0x158] sm:$0xff]
        %v645 = vld [vmem:[%s2 + $0x160] sm:$0xff]
        %v646 = vld [vmem:[%s2 + $0x168] sm:$0xff]
        %v647 = vld [vmem:[%s2 + $0x170] sm:$0xff]
        %v648 = vld [vmem:[%s2 + $0x178] sm:$0xff]
        %v649 = vld [vmem:[%s2 + $0x180] sm:$0xff]
        %v650 = vld [vmem:[%s2 + $0x188] sm:$0xff]
        %v651 = vld [vmem:[%s2 + $0x190] sm:$0xff]
        %v652 = vld [vmem:[%s2 + $0x198] sm:$0xff]
        %v653 = vld [vmem:[%s2 + $0x1a0] sm:$0xff]
        %v654 = vld [vmem:[%s2 + $0x1a8] sm:$0xff]
        %v655 = vld [vmem:[%s2 + $0x1b0] sm:$0xff]
        %v656 = vld [vmem:[%s2 + $0x1b8] sm:$0xff]
        %v657 = vld [vmem:[%s2 + $0x1c0] sm:$0xff]
        %v658 = vld [vmem:[%s2 + $0x1c8] sm:$0xff]
        %v659 = vld [vmem:[%s2 + $0x1d0] sm:$0xff]
        %v660 = vld [vmem:[%s2 + $0x1d8] sm:$0xff]
        %v661 = vld [vmem:[%s2 + $0x1e0] sm:$0xff]
        %v662 = vld [vmem:[%s2 + $0x1e8] sm:$0xff]
        %v663 = vld [vmem:[%s2 + $0x1f0] sm:$0xff]
        %v664 = vld [vmem:[%s2 + $0x1f8] sm:$0xff]
        %v665 = vld [vmem:[%s2 + $0x200] sm:$0xff]
        %v666 = vld [vmem:[%s2 + $0x208] sm:$0xff]
        %v667 = vld [vmem:[%s2 + $0x210] sm:$0xff]
        %v668 = vld [vmem:[%s2 + $0x218] sm:$0xff]
        %v669 = vld [vmem:[%s2 + $0x220] sm:$0xff]
        %v670 = vld [vmem:[%s2 + $0x228] sm:$0xff]
        %v671 = vld [vmem:[%s2 + $0x230] sm:$0xff]
        %v672 = vld [vmem:[%s2 + $0x238] sm:$0xff]
        %v673 = vld [vmem:[%s2 + $0x240] sm:$0xff]
        %v674 = vld [vmem:[%s2 + $0x248] sm:$0xff]
        %v675 = vld [vmem:[%s2 + $0x250] sm:$0xff]
        %v676 = vld [vmem:[%s2 + $0x258] sm:$0xff]
        %v677 = vld [vmem:[%s2 + $0x260] sm:$0xff]
        %v678 = vld [vmem:[%s2 + $0x268] sm:$0xff]
        %v679 = vld [vmem:[%s2 + $0x270] sm:$0xff]
        %v680 = vld [vmem:[%s2 + $0x278] sm:$0xff]
        %v681 = vld [vmem:[%s2 + $0x280] sm:$0xff]
        %v682 = vld [vmem:[%s2 + $0x288] sm:$0xff]
        %v683 = vld [vmem:[%s2 + $0x290] sm:$0xff]
        %v684 = vld [vmem:[%s2 + $0x298] sm:$0xff]
        %v685 = vld [vmem:[%s2 + $0x2a0] sm:$0xff]
        %v686 = vld [vmem:[%s2 + $0x2a8] sm:$0xff]
        %v687 = vld [vmem:[%s2 + $0x2b0] sm:$0xff]
        %v688 = vld [vmem:[%s2 + $0x2b8] sm:$0xff]
        %v689 = vld [vmem:[%s2 + $0x2c0] sm:$0xff]
        %v690 = vld [vmem:[%s2 + $0x2c8] sm:$0xff]
        %v691 = vld [vmem:[%s2 + $0x2d0] sm:$0xff]
        %v692 = vld [vmem:[%s2 + $0x2d8] sm:$0xff]
        %v693 = vld [vmem:[%s2 + $0x2e0] sm:$0xff]
        %v694 = vld [vmem:[%s2 + $0x2e8] sm:$0xff]
        %v695 = vld [vmem:[%s2 + $0x2f0] sm:$0xff]
        %v696 = vld [vmem:[%s2 + $0x2f8] sm:$0xff]
        %v697 = vld [vmem:[%s2 + $0x300] sm:$0xff]
        %v698 = vld [vmem:[%s2 + $0x308] sm:$0xff]
        %v699 = vld [vmem:[%s3] sm:$0x3]
        %v701 = vlaneseq
        %v702 = vshrl.u32 %v701, 7
        %v703 = vsub.s32 0, %v702
        %v704 = vrot.slane %v699, %v703
        %v705 = vlaneseq
        %v706 = vshrl.u32 %v705, 7
        %v707 = vsub.s32 1, %v706
        %v708 = vrot.slane %v699, %v707
        %v727 = vunpack.c.l.b16 %v585
        %v728 = vunpack.c.h.b16 %v585
        %v729 = vunpack.c.l.b16 %v586
        %v730 = vunpack.c.h.b16 %v586
        %v731 = vunpack.c.l.b16 %v587
        %v732 = vunpack.c.h.b16 %v587
        %v733 = vunpack.c.l.b16 %v588
        %v734 = vunpack.c.l.b16 %v589
        %v735 = vunpack.c.h.b16 %v589
        %v736 = vunpack.c.l.b16 %v590
        %v737 = vunpack.c.h.b16 %v590
        %v738 = vunpack.c.l.b16 %v591
        %v739 = vunpack.c.h.b16 %v591
        %v740 = vunpack.c.l.b16 %v592
        %v741 = vunpack.c.l.b16 %v593
        %v742 = vunpack.c.h.b16 %v593
        %v743 = vunpack.c.l.b16 %v594
        %v744 = vunpack.c.h.b16 %v594
        %v745 = vunpack.c.l.b16 %v595
        %v746 = vunpack.c.h.b16 %v595
        %v747 = vunpack.c.l.b16 %v596
        %v748 = vunpack.c.l.b16 %v597
        %v749 = vunpack.c.h.b16 %v597
        %v750 = vunpack.c.l.b16 %v598
        %v751 = vunpack.c.h.b16 %v598
        %v752 = vunpack.c.l.b16 %v599
        %v753 = vunpack.c.h.b16 %v599
        %v754 = vunpack.c.l.b16 %v600
        %v755 = vpack.c.b16 %v734, %v727
        %v756 = vpack.c.b16 %v735, %v728
        %v757 = vpack.c.b16 %v736, %v729
        %v758 = vpack.c.b16 %v737, %v730
        %v759 = vpack.c.b16 %v738, %v731
        %v760 = vpack.c.b16 %v739, %v732
        %v761 = vpack.c.b16 %v740, %v733
        %v762 = vpack.c.b16 %v748, %v741
        %v763 = vpack.c.b16 %v749, %v742
        %v764 = vpack.c.b16 %v750, %v743
        %v765 = vpack.c.b16 %v751, %v744
        %v766 = vpack.c.b16 %v752, %v745
        %v767 = vpack.c.b16 %v753, %v746
        %v768 = vpack.c.b16 %v754, %v747
        %v879 = vunpack.c.l.b16 %v601
        %v880 = vunpack.c.h.b16 %v601
        %v881 = vunpack.c.l.b16 %v602
        %v882 = vunpack.c.h.b16 %v602
        %v883 = vunpack.c.l.b16 %v603
        %v884 = vunpack.c.h.b16 %v603
        %v885 = vunpack.c.l.b16 %v604
        %v886 = vunpack.c.h.b16 %v604
        %v887 = vunpack.c.l.b16 %v605
        %v888 = vunpack.c.h.b16 %v605
        %v889 = vunpack.c.l.b16 %v606
        %v890 = vunpack.c.h.b16 %v606
        %v891 = vunpack.c.l.b16 %v607
        %v892 = vunpack.c.h.b16 %v607
        %v893 = vunpack.c.l.b16 %v608
        %v894 = vunpack.c.h.b16 %v608
        %v895 = vunpack.c.l.b16 %v609
        %v896 = vunpack.c.h.b16 %v609
        %v897 = vunpack.c.l.b16 %v610
        %v898 = vunpack.c.h.b16 %v610
        %v899 = vunpack.c.l.b16 %v611
        %v900 = vunpack.c.h.b16 %v611
        %v901 = vunpack.c.l.b16 %v612
        %v902 = vunpack.c.h.b16 %v612
        %v903 = vunpack.c.l.b16 %v613
        %v904 = vunpack.c.h.b16 %v613
        %v905 = vunpack.c.l.b16 %v614
        %v906 = vunpack.c.h.b16 %v614
        %v907 = vunpack.c.l.b16 %v615
        %v908 = vunpack.c.h.b16 %v615
        %v909 = vunpack.c.l.b16 %v616
        %v910 = vunpack.c.h.b16 %v616
        %v911 = vunpack.c.l.b16 %v617
        %v912 = vunpack.c.h.b16 %v617
        %v913 = vunpack.c.l.b16 %v618
        %v914 = vunpack.c.h.b16 %v618
        %v915 = vunpack.c.l.b16 %v619
        %v916 = vunpack.c.h.b16 %v619
        %v917 = vunpack.c.l.b16 %v620
        %v918 = vunpack.c.h.b16 %v620
        %v919 = vunpack.c.l.b16 %v621
        %v920 = vunpack.c.h.b16 %v621
        %v921 = vunpack.c.l.b16 %v622
        %v922 = vunpack.c.h.b16 %v622
        %v923 = vunpack.c.l.b16 %v623
        %v924 = vunpack.c.h.b16 %v623
        %v925 = vunpack.c.l.b16 %v624
        %v926 = vunpack.c.h.b16 %v624
        %v927 = vunpack.c.l.b16 %v625
        %v928 = vunpack.c.h.b16 %v625
        %v929 = vunpack.c.l.b16 %v626
        %v930 = vunpack.c.h.b16 %v626
        %v931 = vunpack.c.l.b16 %v627
        %v932 = vunpack.c.h.b16 %v627
        %v933 = vunpack.c.l.b16 %v628
        %v934 = vunpack.c.h.b16 %v628
        %v935 = vunpack.c.l.b16 %v629
        %v936 = vunpack.c.h.b16 %v629
        %v937 = vunpack.c.l.b16 %v630
        %v938 = vunpack.c.h.b16 %v630
        %v939 = vunpack.c.l.b16 %v631
        %v940 = vunpack.c.h.b16 %v631
        %v941 = vunpack.c.l.b16 %v632
        %v942 = vunpack.c.h.b16 %v632
        %v943 = vunpack.c.l.b16 %v633
        %v944 = vunpack.c.h.b16 %v633
        %v945 = vunpack.c.l.b16 %v634
        %v946 = vunpack.c.h.b16 %v634
        %v947 = vunpack.c.l.b16 %v635
        %v948 = vunpack.c.h.b16 %v635
        %v949 = vunpack.c.l.b16 %v636
        %v950 = vunpack.c.h.b16 %v636
        %v951 = vunpack.c.l.b16 %v637
        %v952 = vunpack.c.h.b16 %v637
        %v953 = vunpack.c.l.b16 %v638
        %v954 = vunpack.c.h.b16 %v638
        %v955 = vunpack.c.l.b16 %v639
        %v956 = vunpack.c.h.b16 %v639
        %v957 = vunpack.c.l.b16 %v640
        %v958 = vunpack.c.h.b16 %v640
        %v959 = vunpack.c.l.b16 %v641
        %v960 = vunpack.c.h.b16 %v641
        %v961 = vunpack.c.l.b16 %v642
        %v962 = vunpack.c.h.b16 %v642
        %v963 = vunpack.c.l.b16 %v643
        %v964 = vunpack.c.h.b16 %v643
        %v965 = vunpack.c.l.b16 %v644
        %v966 = vunpack.c.h.b16 %v644
        %v967 = vunpack.c.l.b16 %v645
        %v968 = vunpack.c.h.b16 %v645
        %v969 = vunpack.c.l.b16 %v646
        %v970 = vunpack.c.h.b16 %v646
        %v971 = vunpack.c.l.b16 %v647
        %v972 = vunpack.c.h.b16 %v647
        %v973 = vunpack.c.l.b16 %v648
        %v974 = vunpack.c.h.b16 %v648
        %v975 = vunpack.c.l.b16 %v649
        %v976 = vunpack.c.h.b16 %v649
        %v977 = vunpack.c.l.b16 %v650
        %v978 = vunpack.c.h.b16 %v650
        %v979 = vunpack.c.l.b16 %v651
        %v980 = vunpack.c.h.b16 %v651
        %v981 = vunpack.c.l.b16 %v652
        %v982 = vunpack.c.h.b16 %v652
        %v983 = vunpack.c.l.b16 %v653
        %v984 = vunpack.c.h.b16 %v653
        %v985 = vunpack.c.l.b16 %v654
        %v986 = vunpack.c.h.b16 %v654
        %v987 = vunpack.c.l.b16 %v655
        %v988 = vunpack.c.h.b16 %v655
        %v989 = vunpack.c.l.b16 %v656
        %v990 = vunpack.c.h.b16 %v656
        %v991 = vunpack.c.l.b16 %v657
        %v992 = vunpack.c.h.b16 %v657
        %v993 = vunpack.c.l.b16 %v658
        %v994 = vunpack.c.h.b16 %v658
        %v995 = vunpack.c.l.b16 %v659
        %v996 = vunpack.c.h.b16 %v659
        %v997 = vunpack.c.l.b16 %v660
        %v998 = vunpack.c.h.b16 %v660
        %v999 = vunpack.c.l.b16 %v661
        %v1000 = vunpack.c.h.b16 %v661
        %v1001 = vunpack.c.l.b16 %v662
        %v1002 = vunpack.c.h.b16 %v662
        %v1003 = vunpack.c.l.b16 %v663
        %v1004 = vunpack.c.h.b16 %v663
        %v1005 = vunpack.c.l.b16 %v664
        %v1006 = vunpack.c.h.b16 %v664
        %v1007 = vunpack.c.l.b16 %v665
        %v1008 = vunpack.c.h.b16 %v665
        %v1009 = vunpack.c.l.b16 %v666
        %v1010 = vunpack.c.h.b16 %v666
        %v1011 = vunpack.c.l.b16 %v667
        %v1012 = vunpack.c.h.b16 %v667
        %v1013 = vunpack.c.l.b16 %v668
        %v1014 = vunpack.c.h.b16 %v668
        %v1015 = vunpack.c.l.b16 %v669
        %v1016 = vunpack.c.h.b16 %v669
        %v1017 = vunpack.c.l.b16 %v670
        %v1018 = vunpack.c.h.b16 %v670
        %v1019 = vunpack.c.l.b16 %v671
        %v1020 = vunpack.c.h.b16 %v671
        %v1021 = vunpack.c.l.b16 %v672
        %v1022 = vunpack.c.h.b16 %v672
        %v1023 = vunpack.c.l.b16 %v673
        %v1024 = vunpack.c.h.b16 %v673
        %v1025 = vunpack.c.l.b16 %v674
        %v1026 = vunpack.c.h.b16 %v674
        %v1027 = vunpack.c.l.b16 %v675
        %v1028 = vunpack.c.h.b16 %v675
        %v1029 = vunpack.c.l.b16 %v676
        %v1030 = vunpack.c.h.b16 %v676
        %v1031 = vunpack.c.l.b16 %v677
        %v1032 = vunpack.c.h.b16 %v677
        %v1033 = vunpack.c.l.b16 %v678
        %v1034 = vunpack.c.h.b16 %v678
        %v1035 = vunpack.c.l.b16 %v679
        %v1036 = vunpack.c.h.b16 %v679
        %v1037 = vunpack.c.l.b16 %v680
        %v1038 = vunpack.c.h.b16 %v680
        %v1039 = vunpack.c.l.b16 %v681
        %v1040 = vunpack.c.h.b16 %v681
        %v1041 = vunpack.c.l.b16 %v682
        %v1042 = vunpack.c.h.b16 %v682
        %v1043 = vunpack.c.l.b16 %v683
        %v1044 = vunpack.c.h.b16 %v683
        %v1045 = vunpack.c.l.b16 %v684
        %v1046 = vunpack.c.h.b16 %v684
        %v1047 = vunpack.c.l.b16 %v685
        %v1048 = vunpack.c.h.b16 %v685
        %v1049 = vunpack.c.l.b16 %v686
        %v1050 = vunpack.c.h.b16 %v686
        %v1051 = vunpack.c.l.b16 %v687
        %v1052 = vunpack.c.h.b16 %v687
        %v1053 = vunpack.c.l.b16 %v688
        %v1054 = vunpack.c.h.b16 %v688
        %v1055 = vunpack.c.l.b16 %v689
        %v1056 = vunpack.c.h.b16 %v689
        %v1057 = vunpack.c.l.b16 %v690
        %v1058 = vunpack.c.h.b16 %v690
        %v1059 = vunpack.c.l.b16 %v691
        %v1060 = vunpack.c.h.b16 %v691
        %v1061 = vunpack.c.l.b16 %v692
        %v1062 = vunpack.c.h.b16 %v692
        %v1063 = vunpack.c.l.b16 %v693
        %v1064 = vunpack.c.h.b16 %v693
        %v1065 = vunpack.c.l.b16 %v694
        %v1066 = vunpack.c.h.b16 %v694
        %v1067 = vunpack.c.l.b16 %v695
        %v1068 = vunpack.c.h.b16 %v695
        %v1069 = vunpack.c.l.b16 %v696
        %v1070 = vunpack.c.h.b16 %v696
        %v1071 = vunpack.c.l.b16 %v697
        %v1072 = vunpack.c.h.b16 %v697
        %v1073 = vunpack.c.l.b16 %v698
        %v1074 = vunpack.c.h.b16 %v698
        %v1075 = vpack.c.b16 %v881, %v879
        %v1076 = vpack.c.b16 %v882, %v880
        %v1077 = vpack.c.b16 %v885, %v883
        %v1078 = vpack.c.b16 %v886, %v884
        %v1079 = vpack.c.b16 %v889, %v887
        %v1080 = vpack.c.b16 %v890, %v888
        %v1081 = vpack.c.b16 %v893, %v891
        %v1082 = vpack.c.b16 %v894, %v892
        %v1083 = vpack.c.b16 %v897, %v895
        %v1084 = vpack.c.b16 %v898, %v896
        %v1085 = vpack.c.b16 %v901, %v899
        %v1086 = vpack.c.b16 %v902, %v900
        %v1087 = vpack.c.b16 %v905, %v903
        %v1088 = vpack.c.b16 %v906, %v904
        %v1089 = vpack.c.b16 %v909, %v907
        %v1090 = vpack.c.b16 %v910, %v908
        %v1091 = vpack.c.b16 %v913, %v911
        %v1092 = vpack.c.b16 %v914, %v912
        %v1093 = vpack.c.b16 %v917, %v915
        %v1094 = vpack.c.b16 %v918, %v916
        %v1095 = vpack.c.b16 %v921, %v919
        %v1096 = vpack.c.b16 %v922, %v920
        %v1097 = vpack.c.b16 %v925, %v923
        %v1098 = vpack.c.b16 %v926, %v924
        %v1099 = vpack.c.b16 %v929, %v927
        %v1100 = vpack.c.b16 %v930, %v928
        %v1101 = vpack.c.b16 %v933, %v931
        %v1102 = vpack.c.b16 %v934, %v932
        %v1103 = vpack.c.b16 %v937, %v935
        %v1104 = vpack.c.b16 %v938, %v936
        %v1105 = vpack.c.b16 %v941, %v939
        %v1106 = vpack.c.b16 %v942, %v940
        %v1107 = vpack.c.b16 %v945, %v943
        %v1108 = vpack.c.b16 %v946, %v944
        %v1109 = vpack.c.b16 %v949, %v947
        %v1110 = vpack.c.b16 %v950, %v948
        %v1111 = vpack.c.b16 %v953, %v951
        %v1112 = vpack.c.b16 %v954, %v952
        %v1113 = vpack.c.b16 %v957, %v955
        %v1114 = vpack.c.b16 %v958, %v956
        %v1115 = vpack.c.b16 %v961, %v959
        %v1116 = vpack.c.b16 %v962, %v960
        %v1117 = vpack.c.b16 %v965, %v963
        %v1118 = vpack.c.b16 %v966, %v964
        %v1119 = vpack.c.b16 %v969, %v967
        %v1120 = vpack.c.b16 %v970, %v968
        %v1121 = vpack.c.b16 %v973, %v971
        %v1122 = vpack.c.b16 %v974, %v972
        %v1123 = vpack.c.b16 %v977, %v975
        %v1124 = vpack.c.b16 %v978, %v976
        %v1125 = vpack.c.b16 %v981, %v979
        %v1126 = vpack.c.b16 %v982, %v980
        %v1127 = vpack.c.b16 %v985, %v983
        %v1128 = vpack.c.b16 %v986, %v984
        %v1129 = vpack.c.b16 %v989, %v987
        %v1130 = vpack.c.b16 %v990, %v988
        %v1131 = vpack.c.b16 %v993, %v991
        %v1132 = vpack.c.b16 %v994, %v992
        %v1133 = vpack.c.b16 %v997, %v995
        %v1134 = vpack.c.b16 %v998, %v996
        %v1135 = vpack.c.b16 %v1001, %v999
        %v1136 = vpack.c.b16 %v1002, %v1000
        %v1137 = vpack.c.b16 %v1005, %v1003
        %v1138 = vpack.c.b16 %v1006, %v1004
        %v1139 = vpack.c.b16 %v1009, %v1007
        %v1140 = vpack.c.b16 %v1010, %v1008
        %v1141 = vpack.c.b16 %v1013, %v1011
        %v1142 = vpack.c.b16 %v1014, %v1012
        %v1143 = vpack.c.b16 %v1017, %v1015
        %v1144 = vpack.c.b16 %v1018, %v1016
        %v1145 = vpack.c.b16 %v1021, %v1019
        %v1146 = vpack.c.b16 %v1022, %v1020
        %v1147 = vpack.c.b16 %v1025, %v1023
        %v1148 = vpack.c.b16 %v1026, %v1024
        %v1149 = vpack.c.b16 %v1029, %v1027
        %v1150 = vpack.c.b16 %v1030, %v1028
        %v1151 = vpack.c.b16 %v1033, %v1031
        %v1152 = vpack.c.b16 %v1034, %v1032
        %v1153 = vpack.c.b16 %v1037, %v1035
        %v1154 = vpack.c.b16 %v1038, %v1036
        %v1155 = vpack.c.b16 %v1041, %v1039
        %v1156 = vpack.c.b16 %v1042, %v1040
        %v1157 = vpack.c.b16 %v1045, %v1043
        %v1158 = vpack.c.b16 %v1046, %v1044
        %v1159 = vpack.c.b16 %v1049, %v1047
        %v1160 = vpack.c.b16 %v1050, %v1048
        %v1161 = vpack.c.b16 %v1053, %v1051
        %v1162 = vpack.c.b16 %v1054, %v1052
        %v1163 = vpack.c.b16 %v1057, %v1055
        %v1164 = vpack.c.b16 %v1058, %v1056
        %v1165 = vpack.c.b16 %v1061, %v1059
        %v1166 = vpack.c.b16 %v1062, %v1060
        %v1167 = vpack.c.b16 %v1065, %v1063
        %v1168 = vpack.c.b16 %v1066, %v1064
        %v1169 = vpack.c.b16 %v1069, %v1067
        %v1170 = vpack.c.b16 %v1070, %v1068
        %v1171 = vpack.c.b16 %v1073, %v1071
        %v1172 = vpack.c.b16 %v1074, %v1072
        %vm1271 = vcmask 130048
        %v1273 = vsel %vm1271, %v761, 0
        %v1276 = vsel %vm1271, %v768, 0
        %1278 = vmatprep.subr.bf16.mxu0 %v1090
        %1279 = vmatpush1.bf16.msra.mxu0 %v1089
        %1280 = vmatprep.subr.bf16.mxu0 %v1088
        %1281 = vmatpush1.bf16.msra.mxu0 %v1087
        %1282 = vmatprep.subr.bf16.mxu0 %v1086
        %1283 = vmatpush1.bf16.msra.mxu0 %v1085
        %1284 = vmatprep.subr.bf16.mxu0 %v1084
        %1285 = vmatpush1.bf16.msra.mxu0 %v1083
        %1286 = vmatprep.subr.bf16.mxu0 %v1082
        %1287 = vmatpush1.bf16.msra.mxu0 %v1081
        %1288 = vmatprep.subr.bf16.mxu0 %v1080
        %1289 = vmatpush1.bf16.msra.mxu0 %v1079
        %1290 = vmatprep.subr.bf16.mxu0 %v1078
        %1291 = vmatpush1.bf16.msra.mxu0 %v1077
        %1292 = vmatprep.subr.bf16.mxu0 %v1076
        %1293 = vmatpush1.bf16.msra.mxu0 %v1075
        %1294 = vmatprep.subr.bf16.mxu0 %v1106
        %1295 = vmatpush2.bf16.msra.mxu0 %v1105
        %1296 = vmatprep.subr.bf16.mxu0 %v1104
        %1297 = vmatpush2.bf16.msra.mxu0 %v1103
        %1298 = vmatprep.subr.bf16.mxu0 %v1102
        %1299 = vmatpush2.bf16.msra.mxu0 %v1101
        %1300 = vmatprep.subr.bf16.mxu0 %v1100
        %1301 = vmatpush2.bf16.msra.mxu0 %v1099
        %1302 = vmatprep.subr.bf16.mxu0 %v1098
        %1303 = vmatpush2.bf16.msra.mxu0 %v1097
        %1304 = vmatprep.subr.bf16.mxu0 %v1096
        %1305 = vmatpush2.bf16.msra.mxu0 %v1095
        %1306 = vmatprep.subr.bf16.mxu0 %v1094
        %1307 = vmatpush2.bf16.msra.mxu0 %v1093
        %1308 = vmatprep.subr.bf16.mxu0 %v1092
        %1309 = vmatpush2.bf16.msra.mxu0 %v1091
        %1310 = vmatprep.mubr.bf16.mxu0 %v756
        %1311 = vmatmul.mubr.bf16.gmra.mxu0 %v755
        %v1312 = vpop.f32.mrf.mxu0
        %v1313 = vadd.f32 %v704, %v1312
        %v1314 = vpop.f32.mrf.mxu0
        %v1315 = vadd.f32 %v708, %v1314
        %v1316 = vpop.f32.mrf.mxu0
        %v1317 = vadd.f32 %v704, %v1316
        %v1318 = vpop.f32.mrf.mxu0
        %v1319 = vadd.f32 %v708, %v1318
        %1320 = vmatprep.mubr.bf16.mxu0 %v763
        %1321 = vmatmul.mubr.bf16.gmra.mxu0 %v762
        %v1322 = vpop.f32.mrf.mxu0
        %v1323 = vadd.f32 %v704, %v1322
        %v1324 = vpop.f32.mrf.mxu0
        %v1325 = vadd.f32 %v708, %v1324
        %v1326 = vpop.f32.mrf.mxu0
        %v1327 = vadd.f32 %v704, %v1326
        %v1328 = vpop.f32.mrf.mxu0
        %v1329 = vadd.f32 %v708, %v1328
        %1330 = vdwg.mxu0
        %1331 = vmatprep.subr.bf16.mxu0 %v1122
        %1332 = vmatpush1.bf16.msra.mxu0 %v1121
        %1333 = vmatprep.subr.bf16.mxu0 %v1120
        %1334 = vmatpush1.bf16.msra.mxu0 %v1119
        %1335 = vmatprep.subr.bf16.mxu0 %v1118
        %1336 = vmatpush1.bf16.msra.mxu0 %v1117
        %1337 = vmatprep.subr.bf16.mxu0 %v1116
        %1338 = vmatpush1.bf16.msra.mxu0 %v1115
        %1339 = vmatprep.subr.bf16.mxu0 %v1114
        %1340 = vmatpush1.bf16.msra.mxu0 %v1113
        %1341 = vmatprep.subr.bf16.mxu0 %v1112
        %1342 = vmatpush1.bf16.msra.mxu0 %v1111
        %1343 = vmatprep.subr.bf16.mxu0 %v1110
        %1344 = vmatpush1.bf16.msra.mxu0 %v1109
        %1345 = vmatprep.subr.bf16.mxu0 %v1108
        %1346 = vmatpush1.bf16.msra.mxu0 %v1107
        %1347 = vmatprep.subr.bf16.mxu0 %v1138
        %1348 = vmatpush2.bf16.msra.mxu0 %v1137
        %1349 = vmatprep.subr.bf16.mxu0 %v1136
        %1350 = vmatpush2.bf16.msra.mxu0 %v1135
        %1351 = vmatprep.subr.bf16.mxu0 %v1134
        %1352 = vmatpush2.bf16.msra.mxu0 %v1133
        %1353 = vmatprep.subr.bf16.mxu0 %v1132
        %1354 = vmatpush2.bf16.msra.mxu0 %v1131
        %1355 = vmatprep.subr.bf16.mxu0 %v1130
        %1356 = vmatpush2.bf16.msra.mxu0 %v1129
        %1357 = vmatprep.subr.bf16.mxu0 %v1128
        %1358 = vmatpush2.bf16.msra.mxu0 %v1127
        %1359 = vmatprep.subr.bf16.mxu0 %v1126
        %1360 = vmatpush2.bf16.msra.mxu0 %v1125
        %1361 = vmatprep.subr.bf16.mxu0 %v1124
        %1362 = vmatpush2.bf16.msra.mxu0 %v1123
        %1363 = vmatprep.mubr.bf16.mxu0 %v758
        %1364 = vmatmul.mubr.bf16.gmra.mxu0 %v757
        %v1365 = vpop.f32.mrf.mxu0
        %v1366 = vadd.f32 %v1313, %v1365
        %v1367 = vpop.f32.mrf.mxu0
        %v1368 = vadd.f32 %v1315, %v1367
        %v1369 = vpop.f32.mrf.mxu0
        %v1370 = vadd.f32 %v1317, %v1369
        %v1371 = vpop.f32.mrf.mxu0
        %v1372 = vadd.f32 %v1319, %v1371
        %1373 = vmatprep.mubr.bf16.mxu0 %v765
        %1374 = vmatmul.mubr.bf16.gmra.mxu0 %v764
        %v1375 = vpop.f32.mrf.mxu0
        %v1376 = vadd.f32 %v1323, %v1375
        %v1377 = vpop.f32.mrf.mxu0
        %v1378 = vadd.f32 %v1325, %v1377
        %v1379 = vpop.f32.mrf.mxu0
        %v1380 = vadd.f32 %v1327, %v1379
        %v1381 = vpop.f32.mrf.mxu0
        %v1382 = vadd.f32 %v1329, %v1381
        %1383 = vdwg.mxu0
        %1384 = vmatprep.subr.bf16.mxu0 %v1154
        %1385 = vmatpush1.bf16.msra.mxu0 %v1153
        %1386 = vmatprep.subr.bf16.mxu0 %v1152
        %1387 = vmatpush1.bf16.msra.mxu0 %v1151
        %1388 = vmatprep.subr.bf16.mxu0 %v1150
        %1389 = vmatpush1.bf16.msra.mxu0 %v1149
        %1390 = vmatprep.subr.bf16.mxu0 %v1148
        %1391 = vmatpush1.bf16.msra.mxu0 %v1147
        %1392 = vmatprep.subr.bf16.mxu0 %v1146
        %1393 = vmatpush1.bf16.msra.mxu0 %v1145
        %1394 = vmatprep.subr.bf16.mxu0 %v1144
        %1395 = vmatpush1.bf16.msra.mxu0 %v1143
        %1396 = vmatprep.subr.bf16.mxu0 %v1142
        %1397 = vmatpush1.bf16.msra.mxu0 %v1141
        %1398 = vmatprep.subr.bf16.mxu0 %v1140
        %1399 = vmatpush1.bf16.msra.mxu0 %v1139
        %1400 = vmatprep.subr.bf16.mxu0 %v1170
        %1401 = vmatpush2.bf16.msra.mxu0 %v1169
        %1402 = vmatprep.subr.bf16.mxu0 %v1168
        %1403 = vmatpush2.bf16.msra.mxu0 %v1167
        %1404 = vmatprep.subr.bf16.mxu0 %v1166
        %1405 = vmatpush2.bf16.msra.mxu0 %v1165
        %1406 = vmatprep.subr.bf16.mxu0 %v1164
        %1407 = vmatpush2.bf16.msra.mxu0 %v1163
        %1408 = vmatprep.subr.bf16.mxu0 %v1162
        %1409 = vmatpush2.bf16.msra.mxu0 %v1161
        %1410 = vmatprep.subr.bf16.mxu0 %v1160
        %1411 = vmatpush2.bf16.msra.mxu0 %v1159
        %1412 = vmatprep.subr.bf16.mxu0 %v1158
        %1413 = vmatpush2.bf16.msra.mxu0 %v1157
        %1414 = vmatprep.subr.bf16.mxu0 %v1156
        %1415 = vmatpush2.bf16.msra.mxu0 %v1155
        %1416 = vmatprep.mubr.bf16.mxu0 %v760
        %1417 = vmatmul.mubr.bf16.gmra.mxu0 %v759
        %v1418 = vpop.f32.mrf.mxu0
        %v1419 = vadd.f32 %v1366, %v1418
        %v1420 = vpop.f32.mrf.mxu0
        %v1421 = vadd.f32 %v1368, %v1420
        %v1422 = vpop.f32.mrf.mxu0
        %v1423 = vadd.f32 %v1370, %v1422
        %v1424 = vpop.f32.mrf.mxu0
        %v1425 = vadd.f32 %v1372, %v1424
        %1426 = vmatprep.mubr.bf16.mxu0 %v767
        %1427 = vmatmul.mubr.bf16.gmra.mxu0 %v766
        %v1428 = vpop.f32.mrf.mxu0
        %v1429 = vadd.f32 %v1376, %v1428
        %v1430 = vpop.f32.mrf.mxu0
        %v1431 = vadd.f32 %v1378, %v1430
        %v1432 = vpop.f32.mrf.mxu0
        %v1433 = vadd.f32 %v1380, %v1432
        %v1434 = vpop.f32.mrf.mxu0
        %v1435 = vadd.f32 %v1382, %v1434
        %1436 = vdwg.mxu0
        %1437 = vmatprep.subr.bf16.mxu0 0
        %1438 = vmatpush1.bf16.msra.mxu0 0
        %1439 = vmatprep.subr.bf16.mxu0 0
        %1440 = vmatpush1.bf16.msra.mxu0 0
        %1441 = vmatprep.subr.bf16.mxu0 0
        %1442 = vmatpush1.bf16.msra.mxu0 0
        %1443 = vmatprep.subr.bf16.mxu0 0
        %1444 = vmatpush1.bf16.msra.mxu0 0
        %1445 = vmatprep.subr.bf16.mxu0 0
        %1446 = vmatpush1.bf16.msra.mxu0 0
        %1447 = vmatprep.subr.bf16.mxu0 0
        %1448 = vmatpush1.bf16.msra.mxu0 0
        %1449 = vmatprep.subr.bf16.mxu0 0
        %1450 = vmatpush1.bf16.msra.mxu0 0
        %1451 = vmatprep.subr.bf16.mxu0 %v1172
        %1452 = vmatpush1.bf16.msra.mxu0 %v1171
        %1453 = vmatprep.subr.bf16.mxu0 0
        %1454 = vmatpush2.bf16.msra.mxu0 0
        %1455 = vmatprep.subr.bf16.mxu0 0
        %1456 = vmatpush2.bf16.msra.mxu0 0
        %1457 = vmatprep.subr.bf16.mxu0 0
        %1458 = vmatpush2.bf16.msra.mxu0 0
        %1459 = vmatprep.subr.bf16.mxu0 0
        %1460 = vmatpush2.bf16.msra.mxu0 0
        %1461 = vmatprep.subr.bf16.mxu0 0
        %1462 = vmatpush2.bf16.msra.mxu0 0
        %1463 = vmatprep.subr.bf16.mxu0 0
        %1464 = vmatpush2.bf16.msra.mxu0 0
        %1465 = vmatprep.subr.bf16.mxu0 0
        %1466 = vmatpush2.bf16.msra.mxu0 0
        %1467 = vmatprep.subr.bf16.mxu0 0
        %1468 = vmatpush2.bf16.msra.mxu0 0
        %1469 = vmatprep.mubr.bf16.mxu0 0
        %1470 = vmatmul.mubr.bf16.gmra.mxu0 %v1273
        %v1471 = vpop.f32.mrf.mxu0
        %v1472 = vadd.f32 %v1419, %v1471
        %v1473 = vpop.f32.mrf.mxu0
        %v1474 = vadd.f32 %v1421, %v1473
        %v1475 = vpop.f32.mrf.mxu0
        %v1476 = vadd.f32 %v1423, %v1475
        %v1477 = vpop.f32.mrf.mxu0
        %v1478 = vadd.f32 %v1425, %v1477
        %1479 = vmatprep.mubr.bf16.mxu0 0
        %1480 = vmatmul.mubr.bf16.gmra.mxu0 %v1276
        %v1481 = vpop.f32.mrf.mxu0
        %v1482 = vadd.f32 %v1429, %v1481
        %v1483 = vpop.f32.mrf.mxu0
        %v1484 = vadd.f32 %v1431, %v1483
        %v1485 = vpop.f32.mrf.mxu0
        %v1486 = vadd.f32 %v1433, %v1485
        %v1487 = vpop.f32.mrf.mxu0
        %v1488 = vadd.f32 %v1435, %v1487
        %1489 = vdwg.mxu0
        %v1490 = vmax.f32 %v1472, 0.0
        %v1491 = vmax.f32 %v1474, 0.0
        %v1492 = vmax.f32 %v1476, 0.0
        %v1493 = vmax.f32 %v1478, 0.0
        %v1494 = vmax.f32 %v1482, 0.0
        %v1495 = vmax.f32 %v1484, 0.0
        %v1496 = vmax.f32 %v1486, 0.0
        %v1497 = vmax.f32 %v1488, 0.0
        %v1498 = vpack.c.bf16 %v1492, %v1490
        %v1499 = vpack.c.bf16 %v1493, %v1491
        %v1500 = vpack.c.bf16 %v1496, %v1494
        %v1501 = vpack.c.bf16 %v1497, %v1495
        %v1502 = vld [vmem:[%s4] sm:$0xf]
        %v1503 = vld [vmem:[%s4 + $0x4] sm:$0xf]
        %v1504 = vld [vmem:[%s4 + $0x8] sm:$0xf]
        %v1505 = vld [vmem:[%s4 + $0xc] sm:$0xf]
        %v1506 = vld [vmem:[%s4 + $0x10] sm:$0xf]
        %v1507 = vld [vmem:[%s4 + $0x14] sm:$0xf]
        %v1508 = vld [vmem:[%s4 + $0x18] sm:$0xf]
        %v1509 = vld [vmem:[%s4 + $0x1c] sm:$0xf]
        %v1510 = vld [vmem:[%s4 + $0x20] sm:$0xf]
        %v1511 = vld [vmem:[%s4 + $0x24] sm:$0xf]
        %v1512 = vld [vmem:[%s4 + $0x28] sm:$0xf]
        %v1513 = vld [vmem:[%s4 + $0x2c] sm:$0xf]
        %v1514 = vld [vmem:[%s4 + $0x30] sm:$0xf]
        %v1515 = vld [vmem:[%s4 + $0x34] sm:$0xf]
        %v1516 = vld [vmem:[%s4 + $0x38] sm:$0xf]
        %v1517 = vld [vmem:[%s4 + $0x3c] sm:$0xf]
        %v1518 = vld [vmem:[%s4 + $0x40] sm:$0xf]
        %v1519 = vld [vmem:[%s4 + $0x44] sm:$0xf]
        %v1520 = vld [vmem:[%s4 + $0x48] sm:$0xf]
        %v1521 = vld [vmem:[%s4 + $0x4c] sm:$0xf]
        %v1522 = vld [vmem:[%s4 + $0x50] sm:$0xf]
        %v1523 = vld [vmem:[%s4 + $0x54] sm:$0xf]
        %v1524 = vld [vmem:[%s4 + $0x58] sm:$0xf]
        %v1525 = vld [vmem:[%s4 + $0x5c] sm:$0xf]
        %v1526 = vld [vmem:[%s4 + $0x60] sm:$0xf]
        %v1527 = vld [vmem:[%s4 + $0x64] sm:$0xf]
        %v1528 = vld [vmem:[%s4 + $0x68] sm:$0xf]
        %v1529 = vld [vmem:[%s4 + $0x6c] sm:$0xf]
        %v1530 = vld [vmem:[%s4 + $0x70] sm:$0xf]
        %v1531 = vld [vmem:[%s4 + $0x74] sm:$0xf]
        %v1532 = vld [vmem:[%s4 + $0x78] sm:$0xf]
        %v1533 = vld [vmem:[%s4 + $0x7c] sm:$0xf]
        %v1534 = vld [vmem:[%s5] sm:$0x1]
        %v1536 = vlaneseq
        %v1537 = vshrl.u32 %v1536, 7
        %v1538 = vsub.s32 0, %v1537
        %v1539 = vrot.slane %v1534, %v1538
        %v1573 = vunpack.c.l.b16 %v1502
        %v1574 = vunpack.c.l.b16 %v1503
        %v1575 = vunpack.c.l.b16 %v1504
        %v1576 = vunpack.c.l.b16 %v1505
        %v1577 = vunpack.c.l.b16 %v1506
        %v1578 = vunpack.c.l.b16 %v1507
        %v1579 = vunpack.c.l.b16 %v1508
        %v1580 = vunpack.c.l.b16 %v1509
        %v1581 = vunpack.c.l.b16 %v1510
        %v1582 = vunpack.c.l.b16 %v1511
        %v1583 = vunpack.c.l.b16 %v1512
        %v1584 = vunpack.c.l.b16 %v1513
        %v1585 = vunpack.c.l.b16 %v1514
        %v1586 = vunpack.c.l.b16 %v1515
        %v1587 = vunpack.c.l.b16 %v1516
        %v1588 = vunpack.c.l.b16 %v1517
        %v1589 = vunpack.c.l.b16 %v1518
        %v1590 = vunpack.c.l.b16 %v1519
        %v1591 = vunpack.c.l.b16 %v1520
        %v1592 = vunpack.c.l.b16 %v1521
        %v1593 = vunpack.c.l.b16 %v1522
        %v1594 = vunpack.c.l.b16 %v1523
        %v1595 = vunpack.c.l.b16 %v1524
        %v1596 = vunpack.c.l.b16 %v1525
        %v1597 = vunpack.c.l.b16 %v1526
        %v1598 = vunpack.c.l.b16 %v1527
        %v1599 = vunpack.c.l.b16 %v1528
        %v1600 = vunpack.c.l.b16 %v1529
        %v1601 = vunpack.c.l.b16 %v1530
        %v1602 = vunpack.c.l.b16 %v1531
        %v1603 = vunpack.c.l.b16 %v1532
        %v1604 = vunpack.c.l.b16 %v1533
        %v1605 = vpack.c.b16 %v1574, %v1573
        %v1606 = vpack.c.b16 %v1576, %v1575
        %v1607 = vpack.c.b16 %v1578, %v1577
        %v1608 = vpack.c.b16 %v1580, %v1579
        %v1609 = vpack.c.b16 %v1582, %v1581
        %v1610 = vpack.c.b16 %v1584, %v1583
        %v1611 = vpack.c.b16 %v1586, %v1585
        %v1612 = vpack.c.b16 %v1588, %v1587
        %v1613 = vpack.c.b16 %v1590, %v1589
        %v1614 = vpack.c.b16 %v1592, %v1591
        %v1615 = vpack.c.b16 %v1594, %v1593
        %v1616 = vpack.c.b16 %v1596, %v1595
        %v1617 = vpack.c.b16 %v1598, %v1597
        %v1618 = vpack.c.b16 %v1600, %v1599
        %v1619 = vpack.c.b16 %v1602, %v1601
        %v1620 = vpack.c.b16 %v1604, %v1603
        %1637 = vmatprep.subr.bf16.mxu0 0
        %1638 = vmatpush1.bf16.msra.mxu0 %v1612
        %1639 = vmatprep.subr.bf16.mxu0 0
        %1640 = vmatpush1.bf16.msra.mxu0 %v1611
        %1641 = vmatprep.subr.bf16.mxu0 0
        %1642 = vmatpush1.bf16.msra.mxu0 %v1610
        %1643 = vmatprep.subr.bf16.mxu0 0
        %1644 = vmatpush1.bf16.msra.mxu0 %v1609
        %1645 = vmatprep.subr.bf16.mxu0 0
        %1646 = vmatpush1.bf16.msra.mxu0 %v1608
        %1647 = vmatprep.subr.bf16.mxu0 0
        %1648 = vmatpush1.bf16.msra.mxu0 %v1607
        %1649 = vmatprep.subr.bf16.mxu0 0
        %1650 = vmatpush1.bf16.msra.mxu0 %v1606
        %1651 = vmatprep.subr.bf16.mxu0 0
        %1652 = vmatpush1.bf16.msra.mxu0 %v1605
        %1653 = vmatprep.subr.bf16.mxu0 0
        %1654 = vmatpush2.bf16.msra.mxu0 %v1620
        %1655 = vmatprep.subr.bf16.mxu0 0
        %1656 = vmatpush2.bf16.msra.mxu0 %v1619
        %1657 = vmatprep.subr.bf16.mxu0 0
        %1658 = vmatpush2.bf16.msra.mxu0 %v1618
        %1659 = vmatprep.subr.bf16.mxu0 0
        %1660 = vmatpush2.bf16.msra.mxu0 %v1617
        %1661 = vmatprep.subr.bf16.mxu0 0
        %1662 = vmatpush2.bf16.msra.mxu0 %v1616
        %1663 = vmatprep.subr.bf16.mxu0 0
        %1664 = vmatpush2.bf16.msra.mxu0 %v1615
        %1665 = vmatprep.subr.bf16.mxu0 0
        %1666 = vmatpush2.bf16.msra.mxu0 %v1614
        %1667 = vmatprep.subr.bf16.mxu0 0
        %1668 = vmatpush2.bf16.msra.mxu0 %v1613
        %1669 = vmatprep.mubr.bf16.mxu0 %v1499
        %1670 = vmatmul.mubr.bf16.gmra.mxu0 %v1498
        %v1671 = vpop.f32.mrf.mxu0
        %v1672 = vadd.f32 %v1539, %v1671
        %v1673 = vpop.f32.mrf.mxu0
        %v1674 = vpop.f32.mrf.mxu0
        %v1675 = vadd.f32 %v1539, %v1674
        %v1676 = vpop.f32.mrf.mxu0
        %1677 = vmatprep.mubr.bf16.mxu0 %v1501
        %1678 = vmatmul.mubr.bf16.gmra.mxu0 %v1500
        %v1679 = vpop.f32.mrf.mxu0
        %v1680 = vadd.f32 %v1539, %v1679
        %v1681 = vpop.f32.mrf.mxu0
        %v1682 = vpop.f32.mrf.mxu0
        %v1683 = vadd.f32 %v1539, %v1682
        %v1684 = vpop.f32.mrf.mxu0
        %1685 = vdwg.mxu0
        %v1686 = vmax.f32 %v1672, 0.0
        %v1687 = vmax.f32 %v1675, 0.0
        %v1688 = vmax.f32 %v1680, 0.0
        %v1689 = vmax.f32 %v1683, 0.0
        %v1690 = vpack.c.bf16 %v1687, %v1686
        %v1691 = vpack.c.bf16 %v1689, %v1688
        %v1692 = vld [vmem:[%s6] sm:$0xff]
        %v1693 = vld [vmem:[%s6 + $0x8] sm:$0xff]
        %v1694 = vld [vmem:[%s6 + $0x10] sm:$0xff]
        %v1695 = vld [vmem:[%s6 + $0x18] sm:$0xff]
        %v1696 = vld [vmem:[%s6 + $0x20] sm:$0xff]
        %v1697 = vld [vmem:[%s6 + $0x28] sm:$0xff]
        %v1698 = vld [vmem:[%s6 + $0x30] sm:$0xff]
        %v1699 = vld [vmem:[%s6 + $0x38] sm:$0xff]
        %v1700 = vld [vmem:[%s6 + $0x40] sm:$0xff]
        %v1701 = vld [vmem:[%s6 + $0x48] sm:$0xff]
        %v1702 = vld [vmem:[%s6 + $0x50] sm:$0xff]
        %v1703 = vld [vmem:[%s6 + $0x58] sm:$0xff]
        %v1704 = vld [vmem:[%s6 + $0x60] sm:$0xff]
        %v1705 = vld [vmem:[%s6 + $0x68] sm:$0xff]
        %v1706 = vld [vmem:[%s6 + $0x70] sm:$0xff]
        %v1707 = vld [vmem:[%s6 + $0x78] sm:$0xff]
        %v1708 = vld [vmem:[%s7] sm:$0x3]
        %v1710 = vlaneseq
        %v1711 = vshrl.u32 %v1710, 7
        %v1712 = vsub.s32 0, %v1711
        %v1713 = vrot.slane %v1708, %v1712
        %v1714 = vlaneseq
        %v1715 = vshrl.u32 %v1714, 7
        %v1716 = vsub.s32 1, %v1715
        %v1717 = vrot.slane %v1708, %v1716
        %v1736 = vunpack.c.l.b16 %v1692
        %v1737 = vunpack.c.h.b16 %v1692
        %v1738 = vunpack.c.l.b16 %v1693
        %v1739 = vunpack.c.h.b16 %v1693
        %v1740 = vunpack.c.l.b16 %v1694
        %v1741 = vunpack.c.h.b16 %v1694
        %v1742 = vunpack.c.l.b16 %v1695
        %v1743 = vunpack.c.h.b16 %v1695
        %v1744 = vunpack.c.l.b16 %v1696
        %v1745 = vunpack.c.h.b16 %v1696
        %v1746 = vunpack.c.l.b16 %v1697
        %v1747 = vunpack.c.h.b16 %v1697
        %v1748 = vunpack.c.l.b16 %v1698
        %v1749 = vunpack.c.h.b16 %v1698
        %v1750 = vunpack.c.l.b16 %v1699
        %v1751 = vunpack.c.h.b16 %v1699
        %v1752 = vunpack.c.l.b16 %v1700
        %v1753 = vunpack.c.h.b16 %v1700
        %v1754 = vunpack.c.l.b16 %v1701
        %v1755 = vunpack.c.h.b16 %v1701
        %v1756 = vunpack.c.l.b16 %v1702
        %v1757 = vunpack.c.h.b16 %v1702
        %v1758 = vunpack.c.l.b16 %v1703
        %v1759 = vunpack.c.h.b16 %v1703
        %v1760 = vunpack.c.l.b16 %v1704
        %v1761 = vunpack.c.h.b16 %v1704
        %v1762 = vunpack.c.l.b16 %v1705
        %v1763 = vunpack.c.h.b16 %v1705
        %v1764 = vunpack.c.l.b16 %v1706
        %v1765 = vunpack.c.h.b16 %v1706
        %v1766 = vunpack.c.l.b16 %v1707
        %v1767 = vunpack.c.h.b16 %v1707
        %v1768 = vpack.c.b16 %v1738, %v1736
        %v1769 = vpack.c.b16 %v1739, %v1737
        %v1770 = vpack.c.b16 %v1742, %v1740
        %v1771 = vpack.c.b16 %v1743, %v1741
        %v1772 = vpack.c.b16 %v1746, %v1744
        %v1773 = vpack.c.b16 %v1747, %v1745
        %v1774 = vpack.c.b16 %v1750, %v1748
        %v1775 = vpack.c.b16 %v1751, %v1749
        %v1776 = vpack.c.b16 %v1754, %v1752
        %v1777 = vpack.c.b16 %v1755, %v1753
        %v1778 = vpack.c.b16 %v1758, %v1756
        %v1779 = vpack.c.b16 %v1759, %v1757
        %v1780 = vpack.c.b16 %v1762, %v1760
        %v1781 = vpack.c.b16 %v1763, %v1761
        %v1782 = vpack.c.b16 %v1766, %v1764
        %v1783 = vpack.c.b16 %v1767, %v1765
        %1800 = vmatprep.subr.bf16.mxu0 %v1783
        %1801 = vmatpush1.bf16.msra.mxu0 %v1782
        %1802 = vmatprep.subr.bf16.mxu0 %v1781
        %1803 = vmatpush1.bf16.msra.mxu0 %v1780
        %1804 = vmatprep.subr.bf16.mxu0 %v1779
        %1805 = vmatpush1.bf16.msra.mxu0 %v1778
        %1806 = vmatprep.subr.bf16.mxu0 %v1777
        %1807 = vmatpush1.bf16.msra.mxu0 %v1776
        %1808 = vmatprep.subr.bf16.mxu0 %v1775
        %1809 = vmatpush1.bf16.msra.mxu0 %v1774
        %1810 = vmatprep.subr.bf16.mxu0 %v1773
        %1811 = vmatpush1.bf16.msra.mxu0 %v1772
        %1812 = vmatprep.subr.bf16.mxu0 %v1771
        %1813 = vmatpush1.bf16.msra.mxu0 %v1770
        %1814 = vmatprep.subr.bf16.mxu0 %v1769
        %1815 = vmatpush1.bf16.msra.mxu0 %v1768
        %1816 = vmatprep.subr.bf16.mxu0 0
        %1817 = vmatpush2.bf16.msra.mxu0 0
        %1818 = vmatprep.subr.bf16.mxu0 0
        %1819 = vmatpush2.bf16.msra.mxu0 0
        %1820 = vmatprep.subr.bf16.mxu0 0
        %1821 = vmatpush2.bf16.msra.mxu0 0
        %1822 = vmatprep.subr.bf16.mxu0 0
        %1823 = vmatpush2.bf16.msra.mxu0 0
        %1824 = vmatprep.subr.bf16.mxu0 0
        %1825 = vmatpush2.bf16.msra.mxu0 0
        %1826 = vmatprep.subr.bf16.mxu0 0
        %1827 = vmatpush2.bf16.msra.mxu0 0
        %1828 = vmatprep.subr.bf16.mxu0 0
        %1829 = vmatpush2.bf16.msra.mxu0 0
        %1830 = vmatprep.subr.bf16.mxu0 0
        %1831 = vmatpush2.bf16.msra.mxu0 0
        %1832 = vmatprep.mubr.bf16.mxu0 0
        %1833 = vmatmul.mubr.bf16.gmra.mxu0 %v1690
        %v1834 = vpop.f32.mrf.mxu0
        %v1835 = vadd.f32 %v1713, %v1834
        %v1836 = vpop.f32.mrf.mxu0
        %v1837 = vadd.f32 %v1717, %v1836
        %v1838 = vpop.f32.mrf.mxu0
        %v1839 = vadd.f32 %v1713, %v1838
        %v1840 = vpop.f32.mrf.mxu0
        %v1841 = vadd.f32 %v1717, %v1840
        %1842 = vmatprep.mubr.bf16.mxu0 0
        %1843 = vmatmul.mubr.bf16.gmra.mxu0 %v1691
        %v1844 = vpop.f32.mrf.mxu0
        %v1845 = vadd.f32 %v1713, %v1844
        %v1846 = vpop.f32.mrf.mxu0
        %v1847 = vadd.f32 %v1717, %v1846
        %v1848 = vpop.f32.mrf.mxu0
        %v1849 = vadd.f32 %v1713, %v1848
        %v1850 = vpop.f32.mrf.mxu0
        %v1851 = vadd.f32 %v1717, %v1850
        %1852 = vdwg.mxu0
        %v1853 = vld [vmem:[%s566] sm:$0xf]
        %v1854 = vld [vmem:[%s566 + $0x4] sm:$0xf]
        %v1855 = vld [vmem:[%s566 + $0x8] sm:$0xf]
        %v1856 = vld [vmem:[%s566 + $0xc] sm:$0xf]
        %v1857 = vunpack.c.l.bf16 %v1853
        %v1858 = vunpack.c.l.bf16 %v1854
        %v1859 = vunpack.c.l.bf16 %v1855
        %v1860 = vunpack.c.l.bf16 %v1856
        %v1861 = vmul.f32 %v1837, 0.5
        %v1862 = vmul.f32 %v1841, 0.5
        %v1863 = vmul.f32 %v1847, 0.5
        %v1864 = vmul.f32 %v1851, 0.5
        %v1865 = vmul.f32 %v1861, 1.442695
        %v1866 = vpow.pop %v1865
        %v1867 = vmul.f32 %v1862, 1.442695
        %v1868 = vpow.pop %v1867
        %v1869 = vmul.f32 %v1863, 1.442695
        %v1870 = vpow.pop %v1869
        %v1871 = vmul.f32 %v1864, 1.442695
        %v1872 = vpow.pop %v1871
        %v1873 = vmul.f32 %v1857, %v1866
        %v1874 = vmul.f32 %v1858, %v1868
        %v1875 = vmul.f32 %v1859, %v1870
        %v1876 = vmul.f32 %v1860, %v1872
        %v1877 = vadd.f32 %v1873, %v1835
        %v1878 = vadd.f32 %v1874, %v1839
        %v1879 = vadd.f32 %v1875, %v1845
        %v1880 = vadd.f32 %v1876, %v1849
        %v1881 = vpack.c.bf16 %v1878, %v1877
        %v1882 = vpack.c.bf16 %v1880, %v1879
        %v1883 = vld [vmem:[%s8] sm:$0xf]
        %v1884 = vld [vmem:[%s8 + $0x4] sm:$0xf]
        %v1885 = vld [vmem:[%s8 + $0x8] sm:$0xf]
        %v1886 = vld [vmem:[%s8 + $0xc] sm:$0xf]
        %v1887 = vld [vmem:[%s8 + $0x10] sm:$0xf]
        %v1888 = vld [vmem:[%s8 + $0x14] sm:$0xf]
        %v1889 = vld [vmem:[%s8 + $0x18] sm:$0xf]
        %v1890 = vld [vmem:[%s8 + $0x1c] sm:$0xf]
        %v1891 = vld [vmem:[%s8 + $0x20] sm:$0xf]
        %v1892 = vld [vmem:[%s8 + $0x24] sm:$0xf]
        %v1893 = vld [vmem:[%s8 + $0x28] sm:$0xf]
        %v1894 = vld [vmem:[%s8 + $0x2c] sm:$0xf]
        %v1895 = vld [vmem:[%s8 + $0x30] sm:$0xf]
        %v1896 = vld [vmem:[%s8 + $0x34] sm:$0xf]
        %v1897 = vld [vmem:[%s8 + $0x38] sm:$0xf]
        %v1898 = vld [vmem:[%s8 + $0x3c] sm:$0xf]
        %v1899 = vld [vmem:[%s9] sm:$0x1]
        %v1901 = vlaneseq
        %v1902 = vshrl.u32 %v1901, 7
        %v1903 = vsub.s32 0, %v1902
        %v1904 = vrot.slane %v1899, %v1903
        %v1922 = vunpack.c.l.b16 %v1883
        %v1923 = vunpack.c.l.b16 %v1884
        %v1924 = vunpack.c.l.b16 %v1885
        %v1925 = vunpack.c.l.b16 %v1886
        %v1926 = vunpack.c.l.b16 %v1887
        %v1927 = vunpack.c.l.b16 %v1888
        %v1928 = vunpack.c.l.b16 %v1889
        %v1929 = vunpack.c.l.b16 %v1890
        %v1930 = vunpack.c.l.b16 %v1891
        %v1931 = vunpack.c.l.b16 %v1892
        %v1932 = vunpack.c.l.b16 %v1893
        %v1933 = vunpack.c.l.b16 %v1894
        %v1934 = vunpack.c.l.b16 %v1895
        %v1935 = vunpack.c.l.b16 %v1896
        %v1936 = vunpack.c.l.b16 %v1897
        %v1937 = vunpack.c.l.b16 %v1898
        %v1938 = vpack.c.b16 %v1923, %v1922
        %v1939 = vpack.c.b16 %v1925, %v1924
        %v1940 = vpack.c.b16 %v1927, %v1926
        %v1941 = vpack.c.b16 %v1929, %v1928
        %v1942 = vpack.c.b16 %v1931, %v1930
        %v1943 = vpack.c.b16 %v1933, %v1932
        %v1944 = vpack.c.b16 %v1935, %v1934
        %v1945 = vpack.c.b16 %v1937, %v1936
        %1954 = vmatprep.subr.bf16.mxu0 0
        %1955 = vmatpush1.bf16.msra.mxu0 %v1945
        %1956 = vmatprep.subr.bf16.mxu0 0
        %1957 = vmatpush1.bf16.msra.mxu0 %v1944
        %1958 = vmatprep.subr.bf16.mxu0 0
        %1959 = vmatpush1.bf16.msra.mxu0 %v1943
        %1960 = vmatprep.subr.bf16.mxu0 0
        %1961 = vmatpush1.bf16.msra.mxu0 %v1942
        %1962 = vmatprep.subr.bf16.mxu0 0
        %1963 = vmatpush1.bf16.msra.mxu0 %v1941
        %1964 = vmatprep.subr.bf16.mxu0 0
        %1965 = vmatpush1.bf16.msra.mxu0 %v1940
        %1966 = vmatprep.subr.bf16.mxu0 0
        %1967 = vmatpush1.bf16.msra.mxu0 %v1939
        %1968 = vmatprep.subr.bf16.mxu0 0
        %1969 = vmatpush1.bf16.msra.mxu0 %v1938
        %1970 = vmatprep.subr.bf16.mxu0 0
        %1971 = vmatpush2.bf16.msra.mxu0 0
        %1972 = vmatprep.subr.bf16.mxu0 0
        %1973 = vmatpush2.bf16.msra.mxu0 0
        %1974 = vmatprep.subr.bf16.mxu0 0
        %1975 = vmatpush2.bf16.msra.mxu0 0
        %1976 = vmatprep.subr.bf16.mxu0 0
        %1977 = vmatpush2.bf16.msra.mxu0 0
        %1978 = vmatprep.subr.bf16.mxu0 0
        %1979 = vmatpush2.bf16.msra.mxu0 0
        %1980 = vmatprep.subr.bf16.mxu0 0
        %1981 = vmatpush2.bf16.msra.mxu0 0
        %1982 = vmatprep.subr.bf16.mxu0 0
        %1983 = vmatpush2.bf16.msra.mxu0 0
        %1984 = vmatprep.subr.bf16.mxu0 0
        %1985 = vmatpush2.bf16.msra.mxu0 0
        %1986 = vmatprep.mubr.bf16.mxu0 0
        %1987 = vmatmul.mubr.bf16.gmra.mxu0 %v1881
        %v1988 = vpop.f32.mrf.mxu0
        %v1989 = vadd.f32 %v1904, %v1988
        %v1990 = vpop.f32.mrf.mxu0
        %v1991 = vpop.f32.mrf.mxu0
        %v1992 = vadd.f32 %v1904, %v1991
        %v1993 = vpop.f32.mrf.mxu0
        %1994 = vmatprep.mubr.bf16.mxu0 0
        %1995 = vmatmul.mubr.bf16.gmra.mxu0 %v1882
        %v1996 = vpop.f32.mrf.mxu0
        %v1997 = vadd.f32 %v1904, %v1996
        %v1998 = vpop.f32.mrf.mxu0
        %v1999 = vpop.f32.mrf.mxu0
        %v2000 = vadd.f32 %v1904, %v1999
        %v2001 = vpop.f32.mrf.mxu0
        %2002 = vdwg.mxu0
        %v2003 = vmax.f32 %v1989, 0.0
        %v2004 = vmax.f32 %v1992, 0.0
        %v2005 = vmax.f32 %v1997, 0.0
        %v2006 = vmax.f32 %v2000, 0.0
        %v2007 = vpack.c.bf16 %v2004, %v2003
        %v2008 = vpack.c.bf16 %v2006, %v2005
        %v2009 = vld [vmem:[%s10] sm:$0xff]
        %v2010 = vld [vmem:[%s10 + $0x8] sm:$0xff]
        %v2011 = vld [vmem:[%s10 + $0x10] sm:$0xff]
        %v2012 = vld [vmem:[%s10 + $0x18] sm:$0xff]
        %v2013 = vld [vmem:[%s10 + $0x20] sm:$0xff]
        %v2014 = vld [vmem:[%s10 + $0x28] sm:$0xff]
        %v2015 = vld [vmem:[%s10 + $0x30] sm:$0xff]
        %v2016 = vld [vmem:[%s10 + $0x38] sm:$0xff]
        %v2017 = vld [vmem:[%s10 + $0x40] sm:$0xff]
        %v2018 = vld [vmem:[%s10 + $0x48] sm:$0xff]
        %v2019 = vld [vmem:[%s10 + $0x50] sm:$0xff]
        %v2020 = vld [vmem:[%s10 + $0x58] sm:$0xff]
        %v2021 = vld [vmem:[%s10 + $0x60] sm:$0xff]
        %v2022 = vld [vmem:[%s10 + $0x68] sm:$0xff]
        %v2023 = vld [vmem:[%s10 + $0x70] sm:$0xff]
        %v2024 = vld [vmem:[%s10 + $0x78] sm:$0xff]
        %v2025 = vld [vmem:[%s11] sm:$0x3]
        %v2027 = vlaneseq
        %v2028 = vshrl.u32 %v2027, 7
        %v2029 = vsub.s32 0, %v2028
        %v2030 = vrot.slane %v2025, %v2029
        %v2031 = vlaneseq
        %v2032 = vshrl.u32 %v2031, 7
        %v2033 = vsub.s32 1, %v2032
        %v2034 = vrot.slane %v2025, %v2033
        %v2053 = vunpack.c.l.b16 %v2009
        %v2054 = vunpack.c.h.b16 %v2009
        %v2055 = vunpack.c.l.b16 %v2010
        %v2056 = vunpack.c.h.b16 %v2010
        %v2057 = vunpack.c.l.b16 %v2011
        %v2058 = vunpack.c.h.b16 %v2011
        %v2059 = vunpack.c.l.b16 %v2012
        %v2060 = vunpack.c.h.b16 %v2012
        %v2061 = vunpack.c.l.b16 %v2013
        %v2062 = vunpack.c.h.b16 %v2013
        %v2063 = vunpack.c.l.b16 %v2014
        %v2064 = vunpack.c.h.b16 %v2014
        %v2065 = vunpack.c.l.b16 %v2015
        %v2066 = vunpack.c.h.b16 %v2015
        %v2067 = vunpack.c.l.b16 %v2016
        %v2068 = vunpack.c.h.b16 %v2016
        %v2069 = vunpack.c.l.b16 %v2017
        %v2070 = vunpack.c.h.b16 %v2017
        %v2071 = vunpack.c.l.b16 %v2018
        %v2072 = vunpack.c.h.b16 %v2018
        %v2073 = vunpack.c.l.b16 %v2019
        %v2074 = vunpack.c.h.b16 %v2019
        %v2075 = vunpack.c.l.b16 %v2020
        %v2076 = vunpack.c.h.b16 %v2020
        %v2077 = vunpack.c.l.b16 %v2021
        %v2078 = vunpack.c.h.b16 %v2021
        %v2079 = vunpack.c.l.b16 %v2022
        %v2080 = vunpack.c.h.b16 %v2022
        %v2081 = vunpack.c.l.b16 %v2023
        %v2082 = vunpack.c.h.b16 %v2023
        %v2083 = vunpack.c.l.b16 %v2024
        %v2084 = vunpack.c.h.b16 %v2024
        %v2085 = vpack.c.b16 %v2055, %v2053
        %v2086 = vpack.c.b16 %v2056, %v2054
        %v2087 = vpack.c.b16 %v2059, %v2057
        %v2088 = vpack.c.b16 %v2060, %v2058
        %v2089 = vpack.c.b16 %v2063, %v2061
        %v2090 = vpack.c.b16 %v2064, %v2062
        %v2091 = vpack.c.b16 %v2067, %v2065
        %v2092 = vpack.c.b16 %v2068, %v2066
        %v2093 = vpack.c.b16 %v2071, %v2069
        %v2094 = vpack.c.b16 %v2072, %v2070
        %v2095 = vpack.c.b16 %v2075, %v2073
        %v2096 = vpack.c.b16 %v2076, %v2074
        %v2097 = vpack.c.b16 %v2079, %v2077
        %v2098 = vpack.c.b16 %v2080, %v2078
        %v2099 = vpack.c.b16 %v2083, %v2081
        %v2100 = vpack.c.b16 %v2084, %v2082
        %2117 = vmatprep.subr.bf16.mxu0 %v2100
        %2118 = vmatpush1.bf16.msra.mxu0 %v2099
        %2119 = vmatprep.subr.bf16.mxu0 %v2098
        %2120 = vmatpush1.bf16.msra.mxu0 %v2097
        %2121 = vmatprep.subr.bf16.mxu0 %v2096
        %2122 = vmatpush1.bf16.msra.mxu0 %v2095
        %2123 = vmatprep.subr.bf16.mxu0 %v2094
        %2124 = vmatpush1.bf16.msra.mxu0 %v2093
        %2125 = vmatprep.subr.bf16.mxu0 %v2092
        %2126 = vmatpush1.bf16.msra.mxu0 %v2091
        %2127 = vmatprep.subr.bf16.mxu0 %v2090
        %2128 = vmatpush1.bf16.msra.mxu0 %v2089
        %2129 = vmatprep.subr.bf16.mxu0 %v2088
        %2130 = vmatpush1.bf16.msra.mxu0 %v2087
        %2131 = vmatprep.subr.bf16.mxu0 %v2086
        %2132 = vmatpush1.bf16.msra.mxu0 %v2085
        %2133 = vmatprep.subr.bf16.mxu0 0
        %2134 = vmatpush2.bf16.msra.mxu0 0
        %2135 = vmatprep.subr.bf16.mxu0 0
        %2136 = vmatpush2.bf16.msra.mxu0 0
        %2137 = vmatprep.subr.bf16.mxu0 0
        %2138 = vmatpush2.bf16.msra.mxu0 0
        %2139 = vmatprep.subr.bf16.mxu0 0
        %2140 = vmatpush2.bf16.msra.mxu0 0
        %2141 = vmatprep.subr.bf16.mxu0 0
        %2142 = vmatpush2.bf16.msra.mxu0 0
        %2143 = vmatprep.subr.bf16.mxu0 0
        %2144 = vmatpush2.bf16.msra.mxu0 0
        %2145 = vmatprep.subr.bf16.mxu0 0
        %2146 = vmatpush2.bf16.msra.mxu0 0
        %2147 = vmatprep.subr.bf16.mxu0 0
        %2148 = vmatpush2.bf16.msra.mxu0 0
        %2149 = vmatprep.mubr.bf16.mxu0 0
        %2150 = vmatmul.mubr.bf16.gmra.mxu0 %v2007
        %v2151 = vpop.f32.mrf.mxu0
        %v2152 = vadd.f32 %v2030, %v2151
        %v2153 = vpop.f32.mrf.mxu0
        %v2154 = vadd.f32 %v2034, %v2153
        %v2155 = vpop.f32.mrf.mxu0
        %v2156 = vadd.f32 %v2030, %v2155
        %v2157 = vpop.f32.mrf.mxu0
        %v2158 = vadd.f32 %v2034, %v2157
        %2159 = vmatprep.mubr.bf16.mxu0 0
        %2160 = vmatmul.mubr.bf16.gmra.mxu0 %v2008
        %v2161 = vpop.f32.mrf.mxu0
        %v2162 = vadd.f32 %v2030, %v2161
        %v2163 = vpop.f32.mrf.mxu0
        %v2164 = vadd.f32 %v2034, %v2163
        %v2165 = vpop.f32.mrf.mxu0
        %v2166 = vadd.f32 %v2030, %v2165
        %v2167 = vpop.f32.mrf.mxu0
        %v2168 = vadd.f32 %v2034, %v2167
        %2169 = vdwg.mxu0
        %v2170 = vmax.f32 %v2152, 0.0
        %v2171 = vmax.f32 %v2154, 0.0
        %v2172 = vmax.f32 %v2156, 0.0
        %v2173 = vmax.f32 %v2158, 0.0
        %v2174 = vmax.f32 %v2162, 0.0
        %v2175 = vmax.f32 %v2164, 0.0
        %v2176 = vmax.f32 %v2166, 0.0
        %v2177 = vmax.f32 %v2168, 0.0
        %v2178 = vpack.c.bf16 %v2172, %v2170
        %v2179 = vpack.c.bf16 %v2173, %v2171
        %v2180 = vpack.c.bf16 %v2176, %v2174
        %v2181 = vpack.c.bf16 %v2177, %v2175
        %v2182 = vld [vmem:[%s12] sm:$0xff]
        %v2183 = vld [vmem:[%s12 + $0x8] sm:$0xff]
        %v2184 = vld [vmem:[%s12 + $0x10] sm:$0xff]
        %v2185 = vld [vmem:[%s12 + $0x18] sm:$0xf]
        %v2186 = vld [vmem:[%s12 + $0x1c] sm:$0xff]
        %v2187 = vld [vmem:[%s12 + $0x24] sm:$0xff]
        %v2188 = vld [vmem:[%s12 + $0x2c] sm:$0xff]
        %v2189 = vld [vmem:[%s12 + $0x34] sm:$0xf]
        %v2190 = vld [vmem:[%s12 + $0x38] sm:$0xff]
        %v2191 = vld [vmem:[%s12 + $0x40] sm:$0xff]
        %v2192 = vld [vmem:[%s12 + $0x48] sm:$0xff]
        %v2193 = vld [vmem:[%s12 + $0x50] sm:$0xf]
        %v2194 = vld [vmem:[%s12 + $0x54] sm:$0xff]
        %v2195 = vld [vmem:[%s12 + $0x5c] sm:$0xff]
        %v2196 = vld [vmem:[%s12 + $0x64] sm:$0xff]
        %v2197 = vld [vmem:[%s12 + $0x6c] sm:$0xf]
        %v2198 = vld [vmem:[%s12 + $0x70] sm:$0xff]
        %v2199 = vld [vmem:[%s12 + $0x78] sm:$0xff]
        %v2200 = vld [vmem:[%s12 + $0x80] sm:$0xff]
        %v2201 = vld [vmem:[%s12 + $0x88] sm:$0xf]
        %v2202 = vld [vmem:[%s12 + $0x8c] sm:$0xff]
        %v2203 = vld [vmem:[%s12 + $0x94] sm:$0xff]
        %v2204 = vld [vmem:[%s12 + $0x9c] sm:$0xff]
        %v2205 = vld [vmem:[%s12 + $0xa4] sm:$0xf]
        %v2206 = vld [vmem:[%s12 + $0xa8] sm:$0xff]
        %v2207 = vld [vmem:[%s12 + $0xb0] sm:$0xff]
        %v2208 = vld [vmem:[%s12 + $0xb8] sm:$0xff]
        %v2209 = vld [vmem:[%s12 + $0xc0] sm:$0xf]
        %v2210 = vld [vmem:[%s12 + $0xc4] sm:$0xff]
        %v2211 = vld [vmem:[%s12 + $0xcc] sm:$0xff]
        %v2212 = vld [vmem:[%s12 + $0xd4] sm:$0xff]
        %v2213 = vld [vmem:[%s12 + $0xdc] sm:$0xf]
        %v2214 = vld [vmem:[%s12 + $0xe0] sm:$0xff]
        %v2215 = vld [vmem:[%s12 + $0xe8] sm:$0xff]
        %v2216 = vld [vmem:[%s12 + $0xf0] sm:$0xff]
        %v2217 = vld [vmem:[%s12 + $0xf8] sm:$0xf]
        %v2218 = vld [vmem:[%s12 + $0xfc] sm:$0xff]
        %v2219 = vld [vmem:[%s12 + $0x104] sm:$0xff]
        %v2220 = vld [vmem:[%s12 + $0x10c] sm:$0xff]
        %v2221 = vld [vmem:[%s12 + $0x114] sm:$0xf]
        %v2222 = vld [vmem:[%s12 + $0x118] sm:$0xff]
        %v2223 = vld [vmem:[%s12 + $0x120] sm:$0xff]
        %v2224 = vld [vmem:[%s12 + $0x128] sm:$0xff]
        %v2225 = vld [vmem:[%s12 + $0x130] sm:$0xf]
        %v2226 = vld [vmem:[%s12 + $0x134] sm:$0xff]
        %v2227 = vld [vmem:[%s12 + $0x13c] sm:$0xff]
        %v2228 = vld [vmem:[%s12 + $0x144] sm:$0xff]
        %v2229 = vld [vmem:[%s12 + $0x14c] sm:$0xf]
        %v2230 = vld [vmem:[%s12 + $0x150] sm:$0xff]
        %v2231 = vld [vmem:[%s12 + $0x158] sm:$0xff]
        %v2232 = vld [vmem:[%s12 + $0x160] sm:$0xff]
        %v2233 = vld [vmem:[%s12 + $0x168] sm:$0xf]
        %v2234 = vld [vmem:[%s12 + $0x16c] sm:$0xff]
        %v2235 = vld [vmem:[%s12 + $0x174] sm:$0xff]
        %v2236 = vld [vmem:[%s12 + $0x17c] sm:$0xff]
        %v2237 = vld [vmem:[%s12 + $0x184] sm:$0xf]
        %v2238 = vld [vmem:[%s12 + $0x188] sm:$0xff]
        %v2239 = vld [vmem:[%s12 + $0x190] sm:$0xff]
        %v2240 = vld [vmem:[%s12 + $0x198] sm:$0xff]
        %v2241 = vld [vmem:[%s12 + $0x1a0] sm:$0xf]
        %v2242 = vld [vmem:[%s12 + $0x1a4] sm:$0xff]
        %v2243 = vld [vmem:[%s12 + $0x1ac] sm:$0xff]
        %v2244 = vld [vmem:[%s12 + $0x1b4] sm:$0xff]
        %v2245 = vld [vmem:[%s12 + $0x1bc] sm:$0xf]
        %v2246 = vld [vmem:[%s12 + $0x1c0] sm:$0xff]
        %v2247 = vld [vmem:[%s12 + $0x1c8] sm:$0xff]
        %v2248 = vld [vmem:[%s12 + $0x1d0] sm:$0xff]
        %v2249 = vld [vmem:[%s12 + $0x1d8] sm:$0xf]
        %v2250 = vld [vmem:[%s12 + $0x1dc] sm:$0xff]
        %v2251 = vld [vmem:[%s12 + $0x1e4] sm:$0xff]
        %v2252 = vld [vmem:[%s12 + $0x1ec] sm:$0xff]
        %v2253 = vld [vmem:[%s12 + $0x1f4] sm:$0xf]
        %v2254 = vld [vmem:[%s12 + $0x1f8] sm:$0xff]
        %v2255 = vld [vmem:[%s12 + $0x200] sm:$0xff]
        %v2256 = vld [vmem:[%s12 + $0x208] sm:$0xff]
        %v2257 = vld [vmem:[%s12 + $0x210] sm:$0xf]
        %v2258 = vld [vmem:[%s12 + $0x214] sm:$0xff]
        %v2259 = vld [vmem:[%s12 + $0x21c] sm:$0xff]
        %v2260 = vld [vmem:[%s12 + $0x224] sm:$0xff]
        %v2261 = vld [vmem:[%s12 + $0x22c] sm:$0xf]
        %v2262 = vld [vmem:[%s12 + $0x230] sm:$0xff]
        %v2263 = vld [vmem:[%s12 + $0x238] sm:$0xff]
        %v2264 = vld [vmem:[%s12 + $0x240] sm:$0xff]
        %v2265 = vld [vmem:[%s12 + $0x248] sm:$0xf]
        %v2266 = vld [vmem:[%s12 + $0x24c] sm:$0xff]
        %v2267 = vld [vmem:[%s12 + $0x254] sm:$0xff]
        %v2268 = vld [vmem:[%s12 + $0x25c] sm:$0xff]
        %v2269 = vld [vmem:[%s12 + $0x264] sm:$0xf]
        %v2270 = vld [vmem:[%s12 + $0x268] sm:$0xff]
        %v2271 = vld [vmem:[%s12 + $0x270] sm:$0xff]
        %v2272 = vld [vmem:[%s12 + $0x278] sm:$0xff]
        %v2273 = vld [vmem:[%s12 + $0x280] sm:$0xf]
        %v2274 = vld [vmem:[%s12 + $0x284] sm:$0xff]
        %v2275 = vld [vmem:[%s12 + $0x28c] sm:$0xff]
        %v2276 = vld [vmem:[%s12 + $0x294] sm:$0xff]
        %v2277 = vld [vmem:[%s12 + $0x29c] sm:$0xf]
        %v2278 = vld [vmem:[%s12 + $0x2a0] sm:$0xff]
        %v2279 = vld [vmem:[%s12 + $0x2a8] sm:$0xff]
        %v2280 = vld [vmem:[%s12 + $0x2b0] sm:$0xff]
        %v2281 = vld [vmem:[%s12 + $0x2b8] sm:$0xf]
        %v2282 = vld [vmem:[%s12 + $0x2bc] sm:$0xff]
        %v2283 = vld [vmem:[%s12 + $0x2c4] sm:$0xff]
        %v2284 = vld [vmem:[%s12 + $0x2cc] sm:$0xff]
        %v2285 = vld [vmem:[%s12 + $0x2d4] sm:$0xf]
        %v2286 = vld [vmem:[%s12 + $0x2d8] sm:$0xff]
        %v2287 = vld [vmem:[%s12 + $0x2e0] sm:$0xff]
        %v2288 = vld [vmem:[%s12 + $0x2e8] sm:$0xff]
        %v2289 = vld [vmem:[%s12 + $0x2f0] sm:$0xf]
        %v2290 = vld [vmem:[%s12 + $0x2f4] sm:$0xff]
        %v2291 = vld [vmem:[%s12 + $0x2fc] sm:$0xff]
        %v2292 = vld [vmem:[%s12 + $0x304] sm:$0xff]
        %v2293 = vld [vmem:[%s12 + $0x30c] sm:$0xf]
        %v2294 = vld [vmem:[%s12 + $0x310] sm:$0xff]
        %v2295 = vld [vmem:[%s12 + $0x318] sm:$0xff]
        %v2296 = vld [vmem:[%s12 + $0x320] sm:$0xff]
        %v2297 = vld [vmem:[%s12 + $0x328] sm:$0xf]
        %v2298 = vld [vmem:[%s12 + $0x32c] sm:$0xff]
        %v2299 = vld [vmem:[%s12 + $0x334] sm:$0xff]
        %v2300 = vld [vmem:[%s12 + $0x33c] sm:$0xff]
        %v2301 = vld [vmem:[%s12 + $0x344] sm:$0xf]
        %v2302 = vld [vmem:[%s12 + $0x348] sm:$0xff]
        %v2303 = vld [vmem:[%s12 + $0x350] sm:$0xff]
        %v2304 = vld [vmem:[%s12 + $0x358] sm:$0xff]
        %v2305 = vld [vmem:[%s12 + $0x360] sm:$0xf]
        %v2306 = vld [vmem:[%s12 + $0x364] sm:$0xff]
        %v2307 = vld [vmem:[%s12 + $0x36c] sm:$0xff]
        %v2308 = vld [vmem:[%s12 + $0x374] sm:$0xff]
        %v2309 = vld [vmem:[%s12 + $0x37c] sm:$0xf]
        %v2310 = vld [vmem:[%s13] sm:$0x7f]
        %v2312 = vlaneseq
        %v2313 = vshrl.u32 %v2312, 7
        %v2314 = vsub.s32 0, %v2313
        %v2315 = vrot.slane %v2310, %v2314
        %v2316 = vlaneseq
        %v2317 = vshrl.u32 %v2316, 7
        %v2318 = vsub.s32 1, %v2317
        %v2319 = vrot.slane %v2310, %v2318
        %v2320 = vlaneseq
        %v2321 = vshrl.u32 %v2320, 7
        %v2322 = vsub.s32 2, %v2321
        %v2323 = vrot.slane %v2310, %v2322
        %v2324 = vlaneseq
        %v2325 = vshrl.u32 %v2324, 7
        %v2326 = vsub.s32 3, %v2325
        %v2327 = vrot.slane %v2310, %v2326
        %v2328 = vlaneseq
        %v2329 = vshrl.u32 %v2328, 7
        %v2330 = vsub.s32 4, %v2329
        %v2331 = vrot.slane %v2310, %v2330
        %v2332 = vlaneseq
        %v2333 = vshrl.u32 %v2332, 7
        %v2334 = vsub.s32 5, %v2333
        %v2335 = vrot.slane %v2310, %v2334
        %v2336 = vlaneseq
        %v2337 = vshrl.u32 %v2336, 7
        %v2338 = vsub.s32 6, %v2337
        %v2339 = vrot.slane %v2310, %v2338
        %v2475 = vunpack.c.l.b16 %v2182
        %v2476 = vunpack.c.h.b16 %v2182
        %v2477 = vunpack.c.l.b16 %v2183
        %v2478 = vunpack.c.h.b16 %v2183
        %v2479 = vunpack.c.l.b16 %v2184
        %v2480 = vunpack.c.h.b16 %v2184
        %v2481 = vunpack.c.l.b16 %v2185
        %v2482 = vunpack.c.l.b16 %v2186
        %v2483 = vunpack.c.h.b16 %v2186
        %v2484 = vunpack.c.l.b16 %v2187
        %v2485 = vunpack.c.h.b16 %v2187
        %v2486 = vunpack.c.l.b16 %v2188
        %v2487 = vunpack.c.h.b16 %v2188
        %v2488 = vunpack.c.l.b16 %v2189
        %v2489 = vunpack.c.l.b16 %v2190
        %v2490 = vunpack.c.h.b16 %v2190
        %v2491 = vunpack.c.l.b16 %v2191
        %v2492 = vunpack.c.h.b16 %v2191
        %v2493 = vunpack.c.l.b16 %v2192
        %v2494 = vunpack.c.h.b16 %v2192
        %v2495 = vunpack.c.l.b16 %v2193
        %v2496 = vunpack.c.l.b16 %v2194
        %v2497 = vunpack.c.h.b16 %v2194
        %v2498 = vunpack.c.l.b16 %v2195
        %v2499 = vunpack.c.h.b16 %v2195
        %v2500 = vunpack.c.l.b16 %v2196
        %v2501 = vunpack.c.h.b16 %v2196
        %v2502 = vunpack.c.l.b16 %v2197
        %v2503 = vunpack.c.l.b16 %v2198
        %v2504 = vunpack.c.h.b16 %v2198
        %v2505 = vunpack.c.l.b16 %v2199
        %v2506 = vunpack.c.h.b16 %v2199
        %v2507 = vunpack.c.l.b16 %v2200
        %v2508 = vunpack.c.h.b16 %v2200
        %v2509 = vunpack.c.l.b16 %v2201
        %v2510 = vunpack.c.l.b16 %v2202
        %v2511 = vunpack.c.h.b16 %v2202
        %v2512 = vunpack.c.l.b16 %v2203
        %v2513 = vunpack.c.h.b16 %v2203
        %v2514 = vunpack.c.l.b16 %v2204
        %v2515 = vunpack.c.h.b16 %v2204
        %v2516 = vunpack.c.l.b16 %v2205
        %v2517 = vunpack.c.l.b16 %v2206
        %v2518 = vunpack.c.h.b16 %v2206
        %v2519 = vunpack.c.l.b16 %v2207
        %v2520 = vunpack.c.h.b16 %v2207
        %v2521 = vunpack.c.l.b16 %v2208
        %v2522 = vunpack.c.h.b16 %v2208
        %v2523 = vunpack.c.l.b16 %v2209
        %v2524 = vunpack.c.l.b16 %v2210
        %v2525 = vunpack.c.h.b16 %v2210
        %v2526 = vunpack.c.l.b16 %v2211
        %v2527 = vunpack.c.h.b16 %v2211
        %v2528 = vunpack.c.l.b16 %v2212
        %v2529 = vunpack.c.h.b16 %v2212
        %v2530 = vunpack.c.l.b16 %v2213
        %v2531 = vunpack.c.l.b16 %v2214
        %v2532 = vunpack.c.h.b16 %v2214
        %v2533 = vunpack.c.l.b16 %v2215
        %v2534 = vunpack.c.h.b16 %v2215
        %v2535 = vunpack.c.l.b16 %v2216
        %v2536 = vunpack.c.h.b16 %v2216
        %v2537 = vunpack.c.l.b16 %v2217
        %v2538 = vunpack.c.l.b16 %v2218
        %v2539 = vunpack.c.h.b16 %v2218
        %v2540 = vunpack.c.l.b16 %v2219
        %v2541 = vunpack.c.h.b16 %v2219
        %v2542 = vunpack.c.l.b16 %v2220
        %v2543 = vunpack.c.h.b16 %v2220
        %v2544 = vunpack.c.l.b16 %v2221
        %v2545 = vunpack.c.l.b16 %v2222
        %v2546 = vunpack.c.h.b16 %v2222
        %v2547 = vunpack.c.l.b16 %v2223
        %v2548 = vunpack.c.h.b16 %v2223
        %v2549 = vunpack.c.l.b16 %v2224
        %v2550 = vunpack.c.h.b16 %v2224
        %v2551 = vunpack.c.l.b16 %v2225
        %v2552 = vunpack.c.l.b16 %v2226
        %v2553 = vunpack.c.h.b16 %v2226
        %v2554 = vunpack.c.l.b16 %v2227
        %v2555 = vunpack.c.h.b16 %v2227
        %v2556 = vunpack.c.l.b16 %v2228
        %v2557 = vunpack.c.h.b16 %v2228
        %v2558 = vunpack.c.l.b16 %v2229
        %v2559 = vunpack.c.l.b16 %v2230
        %v2560 = vunpack.c.h.b16 %v2230
        %v2561 = vunpack.c.l.b16 %v2231
        %v2562 = vunpack.c.h.b16 %v2231
        %v2563 = vunpack.c.l.b16 %v2232
        %v2564 = vunpack.c.h.b16 %v2232
        %v2565 = vunpack.c.l.b16 %v2233
        %v2566 = vunpack.c.l.b16 %v2234
        %v2567 = vunpack.c.h.b16 %v2234
        %v2568 = vunpack.c.l.b16 %v2235
        %v2569 = vunpack.c.h.b16 %v2235
        %v2570 = vunpack.c.l.b16 %v2236
        %v2571 = vunpack.c.h.b16 %v2236
        %v2572 = vunpack.c.l.b16 %v2237
        %v2573 = vunpack.c.l.b16 %v2238
        %v2574 = vunpack.c.h.b16 %v2238
        %v2575 = vunpack.c.l.b16 %v2239
        %v2576 = vunpack.c.h.b16 %v2239
        %v2577 = vunpack.c.l.b16 %v2240
        %v2578 = vunpack.c.h.b16 %v2240
        %v2579 = vunpack.c.l.b16 %v2241
        %v2580 = vunpack.c.l.b16 %v2242
        %v2581 = vunpack.c.h.b16 %v2242
        %v2582 = vunpack.c.l.b16 %v2243
        %v2583 = vunpack.c.h.b16 %v2243
        %v2584 = vunpack.c.l.b16 %v2244
        %v2585 = vunpack.c.h.b16 %v2244
        %v2586 = vunpack.c.l.b16 %v2245
        %v2587 = vunpack.c.l.b16 %v2246
        %v2588 = vunpack.c.h.b16 %v2246
        %v2589 = vunpack.c.l.b16 %v2247
        %v2590 = vunpack.c.h.b16 %v2247
        %v2591 = vunpack.c.l.b16 %v2248
        %v2592 = vunpack.c.h.b16 %v2248
        %v2593 = vunpack.c.l.b16 %v2249
        %v2594 = vunpack.c.l.b16 %v2250
        %v2595 = vunpack.c.h.b16 %v2250
        %v2596 = vunpack.c.l.b16 %v2251
        %v2597 = vunpack.c.h.b16 %v2251
        %v2598 = vunpack.c.l.b16 %v2252
        %v2599 = vunpack.c.h.b16 %v2252
        %v2600 = vunpack.c.l.b16 %v2253
        %v2601 = vunpack.c.l.b16 %v2254
        %v2602 = vunpack.c.h.b16 %v2254
        %v2603 = vunpack.c.l.b16 %v2255
        %v2604 = vunpack.c.h.b16 %v2255
        %v2605 = vunpack.c.l.b16 %v2256
        %v2606 = vunpack.c.h.b16 %v2256
        %v2607 = vunpack.c.l.b16 %v2257
        %v2608 = vunpack.c.l.b16 %v2258
        %v2609 = vunpack.c.h.b16 %v2258
        %v2610 = vunpack.c.l.b16 %v2259
        %v2611 = vunpack.c.h.b16 %v2259
        %v2612 = vunpack.c.l.b16 %v2260
        %v2613 = vunpack.c.h.b16 %v2260
        %v2614 = vunpack.c.l.b16 %v2261
        %v2615 = vunpack.c.l.b16 %v2262
        %v2616 = vunpack.c.h.b16 %v2262
        %v2617 = vunpack.c.l.b16 %v2263
        %v2618 = vunpack.c.h.b16 %v2263
        %v2619 = vunpack.c.l.b16 %v2264
        %v2620 = vunpack.c.h.b16 %v2264
        %v2621 = vunpack.c.l.b16 %v2265
        %v2622 = vunpack.c.l.b16 %v2266
        %v2623 = vunpack.c.h.b16 %v2266
        %v2624 = vunpack.c.l.b16 %v2267
        %v2625 = vunpack.c.h.b16 %v2267
        %v2626 = vunpack.c.l.b16 %v2268
        %v2627 = vunpack.c.h.b16 %v2268
        %v2628 = vunpack.c.l.b16 %v2269
        %v2629 = vunpack.c.l.b16 %v2270
        %v2630 = vunpack.c.h.b16 %v2270
        %v2631 = vunpack.c.l.b16 %v2271
        %v2632 = vunpack.c.h.b16 %v2271
        %v2633 = vunpack.c.l.b16 %v2272
        %v2634 = vunpack.c.h.b16 %v2272
        %v2635 = vunpack.c.l.b16 %v2273
        %v2636 = vunpack.c.l.b16 %v2274
        %v2637 = vunpack.c.h.b16 %v2274
        %v2638 = vunpack.c.l.b16 %v2275
        %v2639 = vunpack.c.h.b16 %v2275
        %v2640 = vunpack.c.l.b16 %v2276
        %v2641 = vunpack.c.h.b16 %v2276
        %v2642 = vunpack.c.l.b16 %v2277
        %v2643 = vunpack.c.l.b16 %v2278
        %v2644 = vunpack.c.h.b16 %v2278
        %v2645 = vunpack.c.l.b16 %v2279
        %v2646 = vunpack.c.h.b16 %v2279
        %v2647 = vunpack.c.l.b16 %v2280
        %v2648 = vunpack.c.h.b16 %v2280
        %v2649 = vunpack.c.l.b16 %v2281
        %v2650 = vunpack.c.l.b16 %v2282
        %v2651 = vunpack.c.h.b16 %v2282
        %v2652 = vunpack.c.l.b16 %v2283
        %v2653 = vunpack.c.h.b16 %v2283
        %v2654 = vunpack.c.l.b16 %v2284
        %v2655 = vunpack.c.h.b16 %v2284
        %v2656 = vunpack.c.l.b16 %v2285
        %v2657 = vunpack.c.l.b16 %v2286
        %v2658 = vunpack.c.h.b16 %v2286
        %v2659 = vunpack.c.l.b16 %v2287
        %v2660 = vunpack.c.h.b16 %v2287
        %v2661 = vunpack.c.l.b16 %v2288
        %v2662 = vunpack.c.h.b16 %v2288
        %v2663 = vunpack.c.l.b16 %v2289
        %v2664 = vunpack.c.l.b16 %v2290
        %v2665 = vunpack.c.h.b16 %v2290
        %v2666 = vunpack.c.l.b16 %v2291
        %v2667 = vunpack.c.h.b16 %v2291
        %v2668 = vunpack.c.l.b16 %v2292
        %v2669 = vunpack.c.h.b16 %v2292
        %v2670 = vunpack.c.l.b16 %v2293
        %v2671 = vunpack.c.l.b16 %v2294
        %v2672 = vunpack.c.h.b16 %v2294
        %v2673 = vunpack.c.l.b16 %v2295
        %v2674 = vunpack.c.h.b16 %v2295
        %v2675 = vunpack.c.l.b16 %v2296
        %v2676 = vunpack.c.h.b16 %v2296
        %v2677 = vunpack.c.l.b16 %v2297
        %v2678 = vunpack.c.l.b16 %v2298
        %v2679 = vunpack.c.h.b16 %v2298
        %v2680 = vunpack.c.l.b16 %v2299
        %v2681 = vunpack.c.h.b16 %v2299
        %v2682 = vunpack.c.l.b16 %v2300
        %v2683 = vunpack.c.h.b16 %v2300
        %v2684 = vunpack.c.l.b16 %v2301
        %v2685 = vunpack.c.l.b16 %v2302
        %v2686 = vunpack.c.h.b16 %v2302
        %v2687 = vunpack.c.l.b16 %v2303
        %v2688 = vunpack.c.h.b16 %v2303
        %v2689 = vunpack.c.l.b16 %v2304
        %v2690 = vunpack.c.h.b16 %v2304
        %v2691 = vunpack.c.l.b16 %v2305
        %v2692 = vunpack.c.l.b16 %v2306
        %v2693 = vunpack.c.h.b16 %v2306
        %v2694 = vunpack.c.l.b16 %v2307
        %v2695 = vunpack.c.h.b16 %v2307
        %v2696 = vunpack.c.l.b16 %v2308
        %v2697 = vunpack.c.h.b16 %v2308
        %v2698 = vunpack.c.l.b16 %v2309
        %v2699 = vpack.c.b16 %v2482, %v2475
        %v2700 = vpack.c.b16 %v2483, %v2476
        %v2701 = vpack.c.b16 %v2484, %v2477
        %v2702 = vpack.c.b16 %v2485, %v2478
        %v2703 = vpack.c.b16 %v2486, %v2479
        %v2704 = vpack.c.b16 %v2487, %v2480
        %v2705 = vpack.c.b16 %v2488, %v2481
        %v2706 = vpack.c.b16 %v2496, %v2489
        %v2707 = vpack.c.b16 %v2497, %v2490
        %v2708 = vpack.c.b16 %v2498, %v2491
        %v2709 = vpack.c.b16 %v2499, %v2492
        %v2710 = vpack.c.b16 %v2500, %v2493
        %v2711 = vpack.c.b16 %v2501, %v2494
        %v2712 = vpack.c.b16 %v2502, %v2495
        %v2713 = vpack.c.b16 %v2510, %v2503
        %v2714 = vpack.c.b16 %v2511, %v2504
        %v2715 = vpack.c.b16 %v2512, %v2505
        %v2716 = vpack.c.b16 %v2513, %v2506
        %v2717 = vpack.c.b16 %v2514, %v2507
        %v2718 = vpack.c.b16 %v2515, %v2508
        %v2719 = vpack.c.b16 %v2516, %v2509
        %v2720 = vpack.c.b16 %v2524, %v2517
        %v2721 = vpack.c.b16 %v2525, %v2518
        %v2722 = vpack.c.b16 %v2526, %v2519
        %v2723 = vpack.c.b16 %v2527, %v2520
        %v2724 = vpack.c.b16 %v2528, %v2521
        %v2725 = vpack.c.b16 %v2529, %v2522
        %v2726 = vpack.c.b16 %v2530, %v2523
        %v2727 = vpack.c.b16 %v2538, %v2531
        %v2728 = vpack.c.b16 %v2539, %v2532
        %v2729 = vpack.c.b16 %v2540, %v2533
        %v2730 = vpack.c.b16 %v2541, %v2534
        %v2731 = vpack.c.b16 %v2542, %v2535
        %v2732 = vpack.c.b16 %v2543, %v2536
        %v2733 = vpack.c.b16 %v2544, %v2537
        %v2734 = vpack.c.b16 %v2552, %v2545
        %v2735 = vpack.c.b16 %v2553, %v2546
        %v2736 = vpack.c.b16 %v2554, %v2547
        %v2737 = vpack.c.b16 %v2555, %v2548
        %v2738 = vpack.c.b16 %v2556, %v2549
        %v2739 = vpack.c.b16 %v2557, %v2550
        %v2740 = vpack.c.b16 %v2558, %v2551
        %v2741 = vpack.c.b16 %v2566, %v2559
        %v2742 = vpack.c.b16 %v2567, %v2560
        %v2743 = vpack.c.b16 %v2568, %v2561
        %v2744 = vpack.c.b16 %v2569, %v2562
        %v2745 = vpack.c.b16 %v2570, %v2563
        %v2746 = vpack.c.b16 %v2571, %v2564
        %v2747 = vpack.c.b16 %v2572, %v2565
        %v2748 = vpack.c.b16 %v2580, %v2573
        %v2749 = vpack.c.b16 %v2581, %v2574
        %v2750 = vpack.c.b16 %v2582, %v2575
        %v2751 = vpack.c.b16 %v2583, %v2576
        %v2752 = vpack.c.b16 %v2584, %v2577
        %v2753 = vpack.c.b16 %v2585, %v2578
        %v2754 = vpack.c.b16 %v2586, %v2579
        %v2755 = vpack.c.b16 %v2594, %v2587
        %v2756 = vpack.c.b16 %v2595, %v2588
        %v2757 = vpack.c.b16 %v2596, %v2589
        %v2758 = vpack.c.b16 %v2597, %v2590
        %v2759 = vpack.c.b16 %v2598, %v2591
        %v2760 = vpack.c.b16 %v2599, %v2592
        %v2761 = vpack.c.b16 %v2600, %v2593
        %v2762 = vpack.c.b16 %v2608, %v2601
        %v2763 = vpack.c.b16 %v2609, %v2602
        %v2764 = vpack.c.b16 %v2610, %v2603
        %v2765 = vpack.c.b16 %v2611, %v2604
        %v2766 = vpack.c.b16 %v2612, %v2605
        %v2767 = vpack.c.b16 %v2613, %v2606
        %v2768 = vpack.c.b16 %v2614, %v2607
        %v2769 = vpack.c.b16 %v2622, %v2615
        %v2770 = vpack.c.b16 %v2623, %v2616
        %v2771 = vpack.c.b16 %v2624, %v2617
        %v2772 = vpack.c.b16 %v2625, %v2618
        %v2773 = vpack.c.b16 %v2626, %v2619
        %v2774 = vpack.c.b16 %v2627, %v2620
        %v2775 = vpack.c.b16 %v2628, %v2621
        %v2776 = vpack.c.b16 %v2636, %v2629
        %v2777 = vpack.c.b16 %v2637, %v2630
        %v2778 = vpack.c.b16 %v2638, %v2631
        %v2779 = vpack.c.b16 %v2639, %v2632
        %v2780 = vpack.c.b16 %v2640, %v2633
        %v2781 = vpack.c.b16 %v2641, %v2634
        %v2782 = vpack.c.b16 %v2642, %v2635
        %v2783 = vpack.c.b16 %v2650, %v2643
        %v2784 = vpack.c.b16 %v2651, %v2644
        %v2785 = vpack.c.b16 %v2652, %v2645
        %v2786 = vpack.c.b16 %v2653, %v2646
        %v2787 = vpack.c.b16 %v2654, %v2647
        %v2788 = vpack.c.b16 %v2655, %v2648
        %v2789 = vpack.c.b16 %v2656, %v2649
        %v2790 = vpack.c.b16 %v2664, %v2657
        %v2791 = vpack.c.b16 %v2665, %v2658
        %v2792 = vpack.c.b16 %v2666, %v2659
        %v2793 = vpack.c.b16 %v2667, %v2660
        %v2794 = vpack.c.b16 %v2668, %v2661
        %v2795 = vpack.c.b16 %v2669, %v2662
        %v2796 = vpack.c.b16 %v2670, %v2663
        %v2797 = vpack.c.b16 %v2678, %v2671
        %v2798 = vpack.c.b16 %v2679, %v2672
        %v2799 = vpack.c.b16 %v2680, %v2673
        %v2800 = vpack.c.b16 %v2681, %v2674
        %v2801 = vpack.c.b16 %v2682, %v2675
        %v2802 = vpack.c.b16 %v2683, %v2676
        %v2803 = vpack.c.b16 %v2684, %v2677
        %v2804 = vpack.c.b16 %v2692, %v2685
        %v2805 = vpack.c.b16 %v2693, %v2686
        %v2806 = vpack.c.b16 %v2694, %v2687
        %v2807 = vpack.c.b16 %v2695, %v2688
        %v2808 = vpack.c.b16 %v2696, %v2689
        %v2809 = vpack.c.b16 %v2697, %v2690
        %v2810 = vpack.c.b16 %v2698, %v2691
        %2923 = vmatprep.subr.bf16.mxu0 %v2749
        %2924 = vmatpush1.bf16.msra.mxu0 %v2748
        %2925 = vmatprep.subr.bf16.mxu0 %v2742
        %2926 = vmatpush1.bf16.msra.mxu0 %v2741
        %2927 = vmatprep.subr.bf16.mxu0 %v2735
        %2928 = vmatpush1.bf16.msra.mxu0 %v2734
        %2929 = vmatprep.subr.bf16.mxu0 %v2728
        %2930 = vmatpush1.bf16.msra.mxu0 %v2727
        %2931 = vmatprep.subr.bf16.mxu0 %v2721
        %2932 = vmatpush1.bf16.msra.mxu0 %v2720
        %2933 = vmatprep.subr.bf16.mxu0 %v2714
        %2934 = vmatpush1.bf16.msra.mxu0 %v2713
        %2935 = vmatprep.subr.bf16.mxu0 %v2707
        %2936 = vmatpush1.bf16.msra.mxu0 %v2706
        %2937 = vmatprep.subr.bf16.mxu0 %v2700
        %2938 = vmatpush1.bf16.msra.mxu0 %v2699
        %2939 = vmatprep.subr.bf16.mxu0 %v2805
        %2940 = vmatpush2.bf16.msra.mxu0 %v2804
        %2941 = vmatprep.subr.bf16.mxu0 %v2798
        %2942 = vmatpush2.bf16.msra.mxu0 %v2797
        %2943 = vmatprep.subr.bf16.mxu0 %v2791
        %2944 = vmatpush2.bf16.msra.mxu0 %v2790
        %2945 = vmatprep.subr.bf16.mxu0 %v2784
        %2946 = vmatpush2.bf16.msra.mxu0 %v2783
        %2947 = vmatprep.subr.bf16.mxu0 %v2777
        %2948 = vmatpush2.bf16.msra.mxu0 %v2776
        %2949 = vmatprep.subr.bf16.mxu0 %v2770
        %2950 = vmatpush2.bf16.msra.mxu0 %v2769
        %2951 = vmatprep.subr.bf16.mxu0 %v2763
        %2952 = vmatpush2.bf16.msra.mxu0 %v2762
        %2953 = vmatprep.subr.bf16.mxu0 %v2756
        %2954 = vmatpush2.bf16.msra.mxu0 %v2755
        %2955 = vmatprep.mubr.bf16.mxu0 %v2179
        %2956 = vmatmul.mubr.bf16.gmra.mxu0 %v2178
        %v2957 = vpop.f32.mrf.mxu0
        %v2958 = vadd.f32 %v2315, %v2957
        %v2959 = vpop.f32.mrf.mxu0
        %v2960 = vadd.f32 %v2319, %v2959
        %v2961 = vpop.f32.mrf.mxu0
        %v2962 = vadd.f32 %v2315, %v2961
        %v2963 = vpop.f32.mrf.mxu0
        %v2964 = vadd.f32 %v2319, %v2963
        %2965 = vmatprep.mubr.bf16.mxu0 %v2181
        %2966 = vmatmul.mubr.bf16.gmra.mxu0 %v2180
        %v2967 = vpop.f32.mrf.mxu0
        %v2968 = vadd.f32 %v2315, %v2967
        %v2969 = vpop.f32.mrf.mxu0
        %v2970 = vadd.f32 %v2319, %v2969
        %v2971 = vpop.f32.mrf.mxu0
        %v2972 = vadd.f32 %v2315, %v2971
        %v2973 = vpop.f32.mrf.mxu0
        %v2974 = vadd.f32 %v2319, %v2973
        %2975 = vdwg.mxu0
        %2976 = vmatprep.subr.bf16.mxu0 %v2751
        %2977 = vmatpush1.bf16.msra.mxu0 %v2750
        %2978 = vmatprep.subr.bf16.mxu0 %v2744
        %2979 = vmatpush1.bf16.msra.mxu0 %v2743
        %2980 = vmatprep.subr.bf16.mxu0 %v2737
        %2981 = vmatpush1.bf16.msra.mxu0 %v2736
        %2982 = vmatprep.subr.bf16.mxu0 %v2730
        %2983 = vmatpush1.bf16.msra.mxu0 %v2729
        %2984 = vmatprep.subr.bf16.mxu0 %v2723
        %2985 = vmatpush1.bf16.msra.mxu0 %v2722
        %2986 = vmatprep.subr.bf16.mxu0 %v2716
        %2987 = vmatpush1.bf16.msra.mxu0 %v2715
        %2988 = vmatprep.subr.bf16.mxu0 %v2709
        %2989 = vmatpush1.bf16.msra.mxu0 %v2708
        %2990 = vmatprep.subr.bf16.mxu0 %v2702
        %2991 = vmatpush1.bf16.msra.mxu0 %v2701
        %2992 = vmatprep.subr.bf16.mxu0 %v2807
        %2993 = vmatpush2.bf16.msra.mxu0 %v2806
        %2994 = vmatprep.subr.bf16.mxu0 %v2800
        %2995 = vmatpush2.bf16.msra.mxu0 %v2799
        %2996 = vmatprep.subr.bf16.mxu0 %v2793
        %2997 = vmatpush2.bf16.msra.mxu0 %v2792
        %2998 = vmatprep.subr.bf16.mxu0 %v2786
        %2999 = vmatpush2.bf16.msra.mxu0 %v2785
        %3000 = vmatprep.subr.bf16.mxu0 %v2779
        %3001 = vmatpush2.bf16.msra.mxu0 %v2778
        %3002 = vmatprep.subr.bf16.mxu0 %v2772
        %3003 = vmatpush2.bf16.msra.mxu0 %v2771
        %3004 = vmatprep.subr.bf16.mxu0 %v2765
        %3005 = vmatpush2.bf16.msra.mxu0 %v2764
        %3006 = vmatprep.subr.bf16.mxu0 %v2758
        %3007 = vmatpush2.bf16.msra.mxu0 %v2757
        %3008 = vmatprep.mubr.bf16.mxu0 %v2179
        %3009 = vmatmul.mubr.bf16.gmra.mxu0 %v2178
        %v3010 = vpop.f32.mrf.mxu0
        %v3011 = vadd.f32 %v2323, %v3010
        %v3012 = vpop.f32.mrf.mxu0
        %v3013 = vadd.f32 %v2327, %v3012
        %v3014 = vpop.f32.mrf.mxu0
        %v3015 = vadd.f32 %v2323, %v3014
        %v3016 = vpop.f32.mrf.mxu0
        %v3017 = vadd.f32 %v2327, %v3016
        %3018 = vmatprep.mubr.bf16.mxu0 %v2181
        %3019 = vmatmul.mubr.bf16.gmra.mxu0 %v2180
        %v3020 = vpop.f32.mrf.mxu0
        %v3021 = vadd.f32 %v2323, %v3020
        %v3022 = vpop.f32.mrf.mxu0
        %v3023 = vadd.f32 %v2327, %v3022
        %v3024 = vpop.f32.mrf.mxu0
        %v3025 = vadd.f32 %v2323, %v3024
        %v3026 = vpop.f32.mrf.mxu0
        %v3027 = vadd.f32 %v2327, %v3026
        %3028 = vdwg.mxu0
        %3029 = vmatprep.subr.bf16.mxu0 %v2753
        %3030 = vmatpush1.bf16.msra.mxu0 %v2752
        %3031 = vmatprep.subr.bf16.mxu0 %v2746
        %3032 = vmatpush1.bf16.msra.mxu0 %v2745
        %3033 = vmatprep.subr.bf16.mxu0 %v2739
        %3034 = vmatpush1.bf16.msra.mxu0 %v2738
        %3035 = vmatprep.subr.bf16.mxu0 %v2732
        %3036 = vmatpush1.bf16.msra.mxu0 %v2731
        %3037 = vmatprep.subr.bf16.mxu0 %v2725
        %3038 = vmatpush1.bf16.msra.mxu0 %v2724
        %3039 = vmatprep.subr.bf16.mxu0 %v2718
        %3040 = vmatpush1.bf16.msra.mxu0 %v2717
        %3041 = vmatprep.subr.bf16.mxu0 %v2711
        %3042 = vmatpush1.bf16.msra.mxu0 %v2710
        %3043 = vmatprep.subr.bf16.mxu0 %v2704
        %3044 = vmatpush1.bf16.msra.mxu0 %v2703
        %3045 = vmatprep.subr.bf16.mxu0 %v2809
        %3046 = vmatpush2.bf16.msra.mxu0 %v2808
        %3047 = vmatprep.subr.bf16.mxu0 %v2802
        %3048 = vmatpush2.bf16.msra.mxu0 %v2801
        %3049 = vmatprep.subr.bf16.mxu0 %v2795
        %3050 = vmatpush2.bf16.msra.mxu0 %v2794
        %3051 = vmatprep.subr.bf16.mxu0 %v2788
        %3052 = vmatpush2.bf16.msra.mxu0 %v2787
        %3053 = vmatprep.subr.bf16.mxu0 %v2781
        %3054 = vmatpush2.bf16.msra.mxu0 %v2780
        %3055 = vmatprep.subr.bf16.mxu0 %v2774
        %3056 = vmatpush2.bf16.msra.mxu0 %v2773
        %3057 = vmatprep.subr.bf16.mxu0 %v2767
        %3058 = vmatpush2.bf16.msra.mxu0 %v2766
        %3059 = vmatprep.subr.bf16.mxu0 %v2760
        %3060 = vmatpush2.bf16.msra.mxu0 %v2759
        %3061 = vmatprep.mubr.bf16.mxu0 %v2179
        %3062 = vmatmul.mubr.bf16.gmra.mxu0 %v2178
        %v3063 = vpop.f32.mrf.mxu0
        %v3064 = vadd.f32 %v2331, %v3063
        %v3065 = vpop.f32.mrf.mxu0
        %v3066 = vadd.f32 %v2335, %v3065
        %v3067 = vpop.f32.mrf.mxu0
        %v3068 = vadd.f32 %v2331, %v3067
        %v3069 = vpop.f32.mrf.mxu0
        %v3070 = vadd.f32 %v2335, %v3069
        %3071 = vmatprep.mubr.bf16.mxu0 %v2181
        %3072 = vmatmul.mubr.bf16.gmra.mxu0 %v2180
        %v3073 = vpop.f32.mrf.mxu0
        %v3074 = vadd.f32 %v2331, %v3073
        %v3075 = vpop.f32.mrf.mxu0
        %v3076 = vadd.f32 %v2335, %v3075
        %v3077 = vpop.f32.mrf.mxu0
        %v3078 = vadd.f32 %v2331, %v3077
        %v3079 = vpop.f32.mrf.mxu0
        %v3080 = vadd.f32 %v2335, %v3079
        %3081 = vdwg.mxu0
        %3082 = vmatprep.subr.bf16.mxu0 0
        %3083 = vmatpush1.bf16.msra.mxu0 %v2754
        %3084 = vmatprep.subr.bf16.mxu0 0
        %3085 = vmatpush1.bf16.msra.mxu0 %v2747
        %3086 = vmatprep.subr.bf16.mxu0 0
        %3087 = vmatpush1.bf16.msra.mxu0 %v2740
        %3088 = vmatprep.subr.bf16.mxu0 0
        %3089 = vmatpush1.bf16.msra.mxu0 %v2733
        %3090 = vmatprep.subr.bf16.mxu0 0
        %3091 = vmatpush1.bf16.msra.mxu0 %v2726
        %3092 = vmatprep.subr.bf16.mxu0 0
        %3093 = vmatpush1.bf16.msra.mxu0 %v2719
        %3094 = vmatprep.subr.bf16.mxu0 0
        %3095 = vmatpush1.bf16.msra.mxu0 %v2712
        %3096 = vmatprep.subr.bf16.mxu0 0
        %3097 = vmatpush1.bf16.msra.mxu0 %v2705
        %3098 = vmatprep.subr.bf16.mxu0 0
        %3099 = vmatpush2.bf16.msra.mxu0 %v2810
        %3100 = vmatprep.subr.bf16.mxu0 0
        %3101 = vmatpush2.bf16.msra.mxu0 %v2803
        %3102 = vmatprep.subr.bf16.mxu0 0
        %3103 = vmatpush2.bf16.msra.mxu0 %v2796
        %3104 = vmatprep.subr.bf16.mxu0 0
        %3105 = vmatpush2.bf16.msra.mxu0 %v2789
        %3106 = vmatprep.subr.bf16.mxu0 0
        %3107 = vmatpush2.bf16.msra.mxu0 %v2782
        %3108 = vmatprep.subr.bf16.mxu0 0
        %3109 = vmatpush2.bf16.msra.mxu0 %v2775
        %3110 = vmatprep.subr.bf16.mxu0 0
        %3111 = vmatpush2.bf16.msra.mxu0 %v2768
        %3112 = vmatprep.subr.bf16.mxu0 0
        %3113 = vmatpush2.bf16.msra.mxu0 %v2761
        %3114 = vmatprep.mubr.bf16.mxu0 %v2179
        %3115 = vmatmul.mubr.bf16.gmra.mxu0 %v2178
        %v3116 = vpop.f32.mrf.mxu0
        %v3117 = vadd.f32 %v2339, %v3116
        %v3118 = vpop.f32.mrf.mxu0
        %v3119 = vpop.f32.mrf.mxu0
        %v3120 = vadd.f32 %v2339, %v3119
        %v3121 = vpop.f32.mrf.mxu0
        %3122 = vmatprep.mubr.bf16.mxu0 %v2181
        %3123 = vmatmul.mubr.bf16.gmra.mxu0 %v2180
        %v3124 = vpop.f32.mrf.mxu0
        %v3125 = vadd.f32 %v2339, %v3124
        %v3126 = vpop.f32.mrf.mxu0
        %v3127 = vpop.f32.mrf.mxu0
        %v3128 = vadd.f32 %v2339, %v3127
        %v3129 = vpop.f32.mrf.mxu0
        %3130 = vdwg.mxu0
        %v3131 = vxor.u32 %v2958, 2147483648
        %v3132 = vxor.u32 %v2960, 2147483648
        %v3133 = vxor.u32 %v3011, 2147483648
        %v3134 = vxor.u32 %v3013, 2147483648
        %v3135 = vxor.u32 %v3064, 2147483648
        %v3136 = vxor.u32 %v3066, 2147483648
        %v3137 = vxor.u32 %v3117, 2147483648
        %v3138 = vxor.u32 %v2962, 2147483648
        %v3139 = vxor.u32 %v2964, 2147483648
        %v3140 = vxor.u32 %v3015, 2147483648
        %v3141 = vxor.u32 %v3017, 2147483648
        %v3142 = vxor.u32 %v3068, 2147483648
        %v3143 = vxor.u32 %v3070, 2147483648
        %v3144 = vxor.u32 %v3120, 2147483648
        %v3145 = vxor.u32 %v2968, 2147483648
        %v3146 = vxor.u32 %v2970, 2147483648
        %v3147 = vxor.u32 %v3021, 2147483648
        %v3148 = vxor.u32 %v3023, 2147483648
        %v3149 = vxor.u32 %v3074, 2147483648
        %v3150 = vxor.u32 %v3076, 2147483648
        %v3151 = vxor.u32 %v3125, 2147483648
        %v3152 = vxor.u32 %v2972, 2147483648
        %v3153 = vxor.u32 %v2974, 2147483648
        %v3154 = vxor.u32 %v3025, 2147483648
        %v3155 = vxor.u32 %v3027, 2147483648
        %v3156 = vxor.u32 %v3078, 2147483648
        %v3157 = vxor.u32 %v3080, 2147483648
        %v3158 = vxor.u32 %v3128, 2147483648
        %v3159 = vmul.f32 %v3131, 1.442695
        %v3160 = vpow.pop %v3159
        %v3161 = vmul.f32 %v3132, 1.442695
        %v3162 = vpow.pop %v3161
        %v3163 = vmul.f32 %v3133, 1.442695
        %v3164 = vpow.pop %v3163
        %v3165 = vmul.f32 %v3134, 1.442695
        %v3166 = vpow.pop %v3165
        %v3167 = vmul.f32 %v3135, 1.442695
        %v3168 = vpow.pop %v3167
        %v3169 = vmul.f32 %v3136, 1.442695
        %v3170 = vpow.pop %v3169
        %v3171 = vmul.f32 %v3137, 1.442695
        %v3172 = vpow.pop %v3171
        %v3173 = vmul.f32 %v3138, 1.442695
        %v3174 = vpow.pop %v3173
        %v3175 = vmul.f32 %v3139, 1.442695
        %v3176 = vpow.pop %v3175
        %v3177 = vmul.f32 %v3140, 1.442695
        %v3178 = vpow.pop %v3177
        %v3179 = vmul.f32 %v3141, 1.442695
        %v3180 = vpow.pop %v3179
        %v3181 = vmul.f32 %v3142, 1.442695
        %v3182 = vpow.pop %v3181
        %v3183 = vmul.f32 %v3143, 1.442695
        %v3184 = vpow.pop %v3183
        %v3185 = vmul.f32 %v3144, 1.442695
        %v3186 = vpow.pop %v3185
        %v3187 = vmul.f32 %v3145, 1.442695
        %v3188 = vpow.pop %v3187
        %v3189 = vmul.f32 %v3146, 1.442695
        %v3190 = vpow.pop %v3189
        %v3191 = vmul.f32 %v3147, 1.442695
        %v3192 = vpow.pop %v3191
        %v3193 = vmul.f32 %v3148, 1.442695
        %v3194 = vpow.pop %v3193
        %v3195 = vmul.f32 %v3149, 1.442695
        %v3196 = vpow.pop %v3195
        %v3197 = vmul.f32 %v3150, 1.442695
        %v3198 = vpow.pop %v3197
        %v3199 = vmul.f32 %v3151, 1.442695
        %v3200 = vpow.pop %v3199
        %v3201 = vmul.f32 %v3152, 1.442695
        %v3202 = vpow.pop %v3201
        %v3203 = vmul.f32 %v3153, 1.442695
        %v3204 = vpow.pop %v3203
        %v3205 = vmul.f32 %v3154, 1.442695
        %v3206 = vpow.pop %v3205
        %v3207 = vmul.f32 %v3155, 1.442695
        %v3208 = vpow.pop %v3207
        %v3209 = vmul.f32 %v3156, 1.442695
        %v3210 = vpow.pop %v3209
        %v3211 = vmul.f32 %v3157, 1.442695
        %v3212 = vpow.pop %v3211
        %v3213 = vmul.f32 %v3158, 1.442695
        %v3214 = vpow.pop %v3213
        %v3215 = vadd.f32 %v3160, 1.0
        %v3216 = vadd.f32 %v3162, 1.0
        %v3217 = vadd.f32 %v3164, 1.0
        %v3218 = vadd.f32 %v3166, 1.0
        %v3219 = vadd.f32 %v3168, 1.0
        %v3220 = vadd.f32 %v3170, 1.0
        %v3221 = vadd.f32 %v3172, 1.0
        %v3222 = vadd.f32 %v3174, 1.0
        %v3223 = vadd.f32 %v3176, 1.0
        %v3224 = vadd.f32 %v3178, 1.0
        %v3225 = vadd.f32 %v3180, 1.0
        %v3226 = vadd.f32 %v3182, 1.0
        %v3227 = vadd.f32 %v3184, 1.0
        %v3228 = vadd.f32 %v3186, 1.0
        %v3229 = vadd.f32 %v3188, 1.0
        %v3230 = vadd.f32 %v3190, 1.0
        %v3231 = vadd.f32 %v3192, 1.0
        %v3232 = vadd.f32 %v3194, 1.0
        %v3233 = vadd.f32 %v3196, 1.0
        %v3234 = vadd.f32 %v3198, 1.0
        %v3235 = vadd.f32 %v3200, 1.0
        %v3236 = vadd.f32 %v3202, 1.0
        %v3237 = vadd.f32 %v3204, 1.0
        %v3238 = vadd.f32 %v3206, 1.0
        %v3239 = vadd.f32 %v3208, 1.0
        %v3240 = vadd.f32 %v3210, 1.0
        %v3241 = vadd.f32 %v3212, 1.0
        %v3242 = vadd.f32 %v3214, 1.0
        %v3243 = vrcp.pop %v3215
        %v3244 = vmul.f32 1.0, %v3243
        %v3245 = vrcp.pop %v3216
        %v3246 = vmul.f32 1.0, %v3245
        %v3247 = vrcp.pop %v3217
        %v3248 = vmul.f32 1.0, %v3247
        %v3249 = vrcp.pop %v3218
        %v3250 = vmul.f32 1.0, %v3249
        %v3251 = vrcp.pop %v3219
        %v3252 = vmul.f32 1.0, %v3251
        %v3253 = vrcp.pop %v3220
        %v3254 = vmul.f32 1.0, %v3253
        %v3255 = vrcp.pop %v3221
        %v3256 = vmul.f32 1.0, %v3255
        %v3257 = vrcp.pop %v3222
        %v3258 = vmul.f32 1.0, %v3257
        %v3259 = vrcp.pop %v3223
        %v3260 = vmul.f32 1.0, %v3259
        %v3261 = vrcp.pop %v3224
        %v3262 = vmul.f32 1.0, %v3261
        %v3263 = vrcp.pop %v3225
        %v3264 = vmul.f32 1.0, %v3263
        %v3265 = vrcp.pop %v3226
        %v3266 = vmul.f32 1.0, %v3265
        %v3267 = vrcp.pop %v3227
        %v3268 = vmul.f32 1.0, %v3267
        %v3269 = vrcp.pop %v3228
        %v3270 = vmul.f32 1.0, %v3269
        %v3271 = vrcp.pop %v3229
        %v3272 = vmul.f32 1.0, %v3271
        %v3273 = vrcp.pop %v3230
        %v3274 = vmul.f32 1.0, %v3273
        %v3275 = vrcp.pop %v3231
        %v3276 = vmul.f32 1.0, %v3275
        %v3277 = vrcp.pop %v3232
        %v3278 = vmul.f32 1.0, %v3277
        %v3279 = vrcp.pop %v3233
        %v3280 = vmul.f32 1.0, %v3279
        %v3281 = vrcp.pop %v3234
        %v3282 = vmul.f32 1.0, %v3281
        %v3283 = vrcp.pop %v3235
        %v3284 = vmul.f32 1.0, %v3283
        %v3285 = vrcp.pop %v3236
        %v3286 = vmul.f32 1.0, %v3285
        %v3287 = vrcp.pop %v3237
        %v3288 = vmul.f32 1.0, %v3287
        %v3289 = vrcp.pop %v3238
        %v3290 = vmul.f32 1.0, %v3289
        %v3291 = vrcp.pop %v3239
        %v3292 = vmul.f32 1.0, %v3291
        %v3293 = vrcp.pop %v3240
        %v3294 = vmul.f32 1.0, %v3293
        %v3295 = vrcp.pop %v3241
        %v3296 = vmul.f32 1.0, %v3295
        %v3297 = vrcp.pop %v3242
        %v3298 = vmul.f32 1.0, %v3297
        %3299 = vst [vmem:[%s534] sm:$0xff] %v3244
        %3300 = vst [vmem:[%s534 + $0x8] sm:$0xff] %v3246
        %3301 = vst [vmem:[%s534 + $0x10] sm:$0xff] %v3248
        %3302 = vst [vmem:[%s534 + $0x18] sm:$0xff] %v3250
        %3303 = vst [vmem:[%s534 + $0x20] sm:$0xff] %v3252
        %3304 = vst [vmem:[%s534 + $0x28] sm:$0xff] %v3254
        %3305 = vst.msk [vmem:[%s534 + $0x30] sm:$0xff] %vm1271, %v3256
        %3306 = vst [vmem:[%s534 + $0x38] sm:$0xff] %v3258
        %3307 = vst [vmem:[%s534 + $0x40] sm:$0xff] %v3260
        %3308 = vst [vmem:[%s534 + $0x48] sm:$0xff] %v3262
        %3309 = vst [vmem:[%s534 + $0x50] sm:$0xff] %v3264
        %3310 = vst [vmem:[%s534 + $0x58] sm:$0xff] %v3266
        %3311 = vst [vmem:[%s534 + $0x60] sm:$0xff] %v3268
        %3312 = vst.msk [vmem:[%s534 + $0x68] sm:$0xff] %vm1271, %v3270
        %3313 = vst [vmem:[%s534 + $0x70] sm:$0xff] %v3272
        %3314 = vst [vmem:[%s534 + $0x78] sm:$0xff] %v3274
        %3315 = vst [vmem:[%s534 + $0x80] sm:$0xff] %v3276
        %3316 = vst [vmem:[%s534 + $0x88] sm:$0xff] %v3278
        %3317 = vst [vmem:[%s534 + $0x90] sm:$0xff] %v3280
        %3318 = vst [vmem:[%s534 + $0x98] sm:$0xff] %v3282
        %3319 = vst.msk [vmem:[%s534 + $0xa0] sm:$0xff] %vm1271, %v3284
        %3320 = vst [vmem:[%s534 + $0xa8] sm:$0xff] %v3286
        %3321 = vst [vmem:[%s534 + $0xb0] sm:$0xff] %v3288
        %3322 = vst [vmem:[%s534 + $0xb8] sm:$0xff] %v3290
        %3323 = vst [vmem:[%s534 + $0xc0] sm:$0xff] %v3292
        %3324 = vst [vmem:[%s534 + $0xc8] sm:$0xff] %v3294
        %3325 = vst [vmem:[%s534 + $0xd0] sm:$0xff] %v3296
        %3326 = vst.msk [vmem:[%s534 + $0xd8] sm:$0xff] %vm1271, %v3298
        %3327 = vst [vmem:[%s540] sm:$0xff] %v1835
        %3328 = vst [vmem:[%s540 + $0x8] sm:$0xff] %v1837
        %3329 = vst [vmem:[%s540 + $0x10] sm:$0xff] %v1839
        %3330 = vst [vmem:[%s540 + $0x18] sm:$0xff] %v1841
        %3331 = vst [vmem:[%s540 + $0x20] sm:$0xff] %v1845
        %3332 = vst [vmem:[%s540 + $0x28] sm:$0xff] %v1847
        %3333 = vst [vmem:[%s540 + $0x30] sm:$0xff] %v1849
        %3334 = vst [vmem:[%s540 + $0x38] sm:$0xff] %v1851
        %s3335 = sand.u32 %s342, 1
        %s3336 = scalar_lea.sflag [#allocation3], %s3335
        %s3337 = sand.u32 %s342, 1
        %s3338 = smul.addr %s3337, 224
        %s3339 = scalar_lea.vmem [#allocation2], %s3338
        %s3340 = sand.u32 %s368, 1
        %s3341 = sand.u32 %s368, 1
        %s3342 = smul.addr %s3341, 64
        %s3343 = scalar_lea.vmem [#allocation4], %s3342
        // Predicated region
        $region77: #{vae_forward.1} parent=75 // pred_check
          %p3344 = pneg %p352
        $region78: #{vae_forward.1} parent=75 // pred_check_branch
          %3346 = sbr.rel (%p3344) target = $region80
        $region79: #{vae_forward.1} parent=75 // pred_region
          %s3347 = smul.u32 4, %s30
          %s3348 = ssub.s32 13, %s3347
          %p3349 = scmp.lt.s32.totalorder %s3348, 4
          %s3350 = scalar_select %p3349, %s3348, 4
          %s3351 = smul.u32 128, %s3350
          %s3352 = smul.u32 %s3351, 7
          %s3354 = ssub.s32 3584, %s3352
          %3355 = vsyncadd %s3336, %s3354
          %p3356 = scmp.ne.s32.totalorder 0, %s3352
          %s3357 = smul.addr %s3347, 7
          %s3358 = smul.addr %s3357, 128
          %s3359 = scalar_lea.hbm %s14, %s3358
          %s3360 = smul.u32 56, %s3350
          %s3361 = sshll.u32 %s3339, 4
          %s3362 = int_to_ptr.vmem [resolvable:$true] %s3361
          %s3363 = sshll.u32 %s3360, 4
          %3367 = dma.vmem_to_hbm [thread:$0]  (%p3356), %s3362, %s3363, %s3359, %s3336, 896, 896, 56
        $region80: #{vae_forward.1} parent=75 // pred_fallthru
          _
        // Predicated region
        $region81: #{vae_forward.1} parent=75 // pred_check
          %p3368 = pneg %p378
        $region82: #{vae_forward.1} parent=75 // pred_check_branch
          %3370 = sbr.rel (%p3368) target = $region84
        $region83: #{vae_forward.1} parent=75 // pred_region
          %s3371 = smul.u32 4, %s30
          %s3372 = ssub.s32 13, %s3371
          %p3373 = scmp.lt.s32.totalorder %s3372, 4
          %s3374 = scalar_select %p3373, %s3372, 4
          %s3375 = smul.u32 128, %s3374
          %s3376 = smul.u32 %s3375, 2
          %p3377 = scmp.ne.s32.totalorder 0, %s3376
          %s3378 = smul.addr %s3371, 2
          %s3379 = smul.addr %s3378, 8
          %s3380 = scalar_lea.vmem %s15, %s3379
          // Predicated region
          $region85: #{vae_forward.1} parent=83 // pred_check
            %p3381 = pneg %p3377
          $region86: #{vae_forward.1} parent=83 // pred_check_branch
            %3383 = sbr.rel (%p3381) target = $region88
          $region87: #{vae_forward.1} parent=83 // pred_region
            // Predicated region
            $region89: #{vae_forward.1} parent=87 // pred_check
              _
            $region90: #{vae_forward.1} parent=87 // pred_check_branch
              %3385 = sbr.rel (0) target = $region92
            $region91: #{vae_forward.1} parent=87 // pred_region
              %s3386 = sshrl.u32 %s3374, 2
              // While loop
              $region93: #{vae_forward.1} parent=91 // loop_pre_header
                _
              $region94: #{vae_forward.1} parent=91 // loop_header
                %s3388 = sphi 0, %s3390
                %p3389 = scmp.ge.s32.totalorder %s3388, %s3386
                %s3393 = sphi 0, %s3414
                %s3394 = sphi %s3343, %s3417
                %s3395 = sphi %s3380, %s3418
              $region95: #{vae_forward.1} parent=91 // loop_header_branch
                %3392 = sbr.rel (%p3389) target = $region99
              $region96: #{vae_forward.1} parent=91 // loop_body
                %v3396 = vld [vmem:[%s3394] sm:$0xff]
                %3397 = vst [vmem:[%s3395] sm:$0xff] %v3396
                %v3398 = vld [vmem:[%s3394 + $0x10] sm:$0xff]
                %3399 = vst [vmem:[%s3395 + $0x10] sm:$0xff] %v3398
                %v3400 = vld [vmem:[%s3394 + $0x20] sm:$0xff]
                %3401 = vst [vmem:[%s3395 + $0x20] sm:$0xff] %v3400
                %v3402 = vld [vmem:[%s3394 + $0x30] sm:$0xff]
                %3403 = vst [vmem:[%s3395 + $0x30] sm:$0xff] %v3402
                %v3404 = vld [vmem:[%s3394 + $0x8] sm:$0xff]
                %3405 = vst [vmem:[%s3395 + $0x8] sm:$0xff] %v3404
                %v3406 = vld [vmem:[%s3394 + $0x18] sm:$0xff]
                %3407 = vst [vmem:[%s3395 + $0x18] sm:$0xff] %v3406
                %v3408 = vld [vmem:[%s3394 + $0x28] sm:$0xff]
                %3409 = vst [vmem:[%s3395 + $0x28] sm:$0xff] %v3408
                %v3410 = vld [vmem:[%s3394 + $0x38] sm:$0xff]
                %3411 = vst [vmem:[%s3395 + $0x38] sm:$0xff] %v3410
                %s3412 = sadd.s32 1, %s3393
                %p3413 = scmp.ge.s32.totalorder %s3412, %s3386
                %s3414 = scalar_select %p3413, 0, %s3412
                %s3415 = smul.u32 %s3414, 64
                %s3416 = smul.u32 %s3414, 64
                %s3417 = scalar_lea.vmem %s3343, %s3415 [#allocation4]
                %s3418 = scalar_lea.vmem %s3380, %s3416
              $region97: #{vae_forward.1} parent=91 // loop_footer
                %s3390 = sadd.s32 %s3388, 1
              $region98: #{vae_forward.1} parent=91 // loop_footer_branch
                %3387 = sbr.rel target = $region94
              $region99: #{vae_forward.1} parent=91 // loop_exit
                _
              %s3419 = sshrl.u32 %s3374, 2
              %s3420 = sand.u32 %s3374, 3
              %s3421 = smul.u32 %s3419, 4
              %s3422 = smul.u32 16, %s3421
              %s3423 = scalar_lea.vmem %s3343, %s3422 [#allocation4]
              %s3424 = smul.u32 16, %s3421
              %s3425 = scalar_lea.vmem %s3380, %s3424
              // While loop
              $region100: #{vae_forward.1} parent=91 // loop_pre_header
                _
              $region101: #{vae_forward.1} parent=91 // loop_header
                %s3427 = sphi 0, %s3429
                %p3428 = scmp.ge.s32.totalorder %s3427, %s3420
                %s3432 = sphi 0, %s3441
                %s3433 = sphi %s3423, %s3444
                %s3434 = sphi %s3425, %s3445
              $region102: #{vae_forward.1} parent=91 // loop_header_branch
                %3431 = sbr.rel (%p3428) target = $region106
              $region103: #{vae_forward.1} parent=91 // loop_body
                %v3435 = vld [vmem:[%s3433] sm:$0xff]
                %3436 = vst [vmem:[%s3434] sm:$0xff] %v3435
                %v3437 = vld [vmem:[%s3433 + $0x8] sm:$0xff]
                %3438 = vst [vmem:[%s3434 + $0x8] sm:$0xff] %v3437
                %s3439 = sadd.s32 1, %s3432
                %p3440 = scmp.ge.s32.totalorder %s3439, %s3420
                %s3441 = scalar_select %p3440, 0, %s3439
                %s3442 = smul.u32 %s3441, 16
                %s3443 = smul.u32 %s3441, 16
                %s3444 = scalar_lea.vmem %s3423, %s3442 [#allocation4]
                %s3445 = scalar_lea.vmem %s3425, %s3443
              $region104: #{vae_forward.1} parent=91 // loop_footer
                %s3429 = sadd.s32 %s3427, 1
              $region105: #{vae_forward.1} parent=91 // loop_footer_branch
                %3426 = sbr.rel target = $region101
              $region106: #{vae_forward.1} parent=91 // loop_exit
                _
            $region92: #{vae_forward.1} parent=87 // pred_fallthru
              _
            // Predicated region
            $region107: #{vae_forward.1} parent=87 // pred_check
              _
            $region108: #{vae_forward.1} parent=87 // pred_check_branch
              %3447 = sbr.rel target = $region110
            $region109: #{vae_forward.1} parent=87 // pred_region
              _
            $region110: #{vae_forward.1} parent=87 // pred_fallthru
              _
          $region88: #{vae_forward.1} parent=83 // pred_fallthru
            _
          %3448 = vnop
        $region84: #{vae_forward.1} parent=75 // pred_fallthru
          _
      $region76: #{vae_forward.1} parent=5 // pred_fallthru
        _
      %p3449 = scmp.le.s32.totalorder 2, %s25
      // Predicated region
      $region111: #{vae_forward.1} parent=5 // pred_check
        %p3450 = pneg %p3449
      $region112: #{vae_forward.1} parent=5 // pred_check_branch
        %3452 = sbr.rel (%p3450) target = $region114
      $region113: #{vae_forward.1} parent=5 // pred_region
        %s3453 = ssub.s32 %s25, 2
        // Predicated region
        $region115: #{vae_forward.1} parent=113 // pred_check
          %p3454 = pneg %p358
        $region116: #{vae_forward.1} parent=113 // pred_check_branch
          %3456 = sbr.rel (%p3454) target = $region118
        $region117: #{vae_forward.1} parent=113 // pred_region
          %s3457 = sand.u32 %s343, 1
          %s3458 = scalar_lea.sflag [#allocation3], %s3457
          %s3459 = sand.u32 %s343, 1
          %s3460 = smul.addr %s3459, 224
          %s3461 = scalar_lea.vmem [#allocation2], %s3460
          %3462 = dma.done %s3458, 3584
        $region118: #{vae_forward.1} parent=113 // pred_fallthru
          _
        // Predicated region
        $region119: #{vae_forward.1} parent=113 // pred_check
          %p3463 = pneg %p384
        $region120: #{vae_forward.1} parent=113 // pred_check_branch
          %3465 = sbr.rel (%p3463) target = $region122
        $region121: #{vae_forward.1} parent=113 // pred_region
          %s3466 = sand.u32 %s369, 1
          %s3467 = sand.u32 %s369, 1
          %s3468 = smul.addr %s3467, 64
          %s3469 = scalar_lea.vmem [#allocation4], %s3468
        $region122: #{vae_forward.1} parent=113 // pred_fallthru
          _
      $region114: #{vae_forward.1} parent=5 // pred_fallthru
        _
    $region6: #{vae_forward.1} parent=1 // loop_footer
      %s29 = sadd.s32 1, %s25
    $region7: #{vae_forward.1} parent=1 // loop_footer_branch
      %24 = sbr.rel target = $region3
    $region8: #{vae_forward.1} parent=1 // loop_exit
      _
    %3470 = vsyncpa [#allocation3], 1
    %s3471 = scalar_lea.sflag [#allocation3], 1
    %3472 = vsyncpa %s3471, 1

</llo_original>
